<compile_context>
chip_gen: v7x
topology: tpu7x:2x2x1
jax: 0.10.0
libtpu: 0.0.40
codegen_flags: <defaults>
</compile_context>

<pallas_src>
import jax
import jax.numpy as jnp
from jax.experimental import pallas as pl
from jax.experimental.pallas import tpu as pltpu

F32 = jnp.float32


def _round_up(n, m):
    return ((n + m - 1) // m) * m


def _softplus(x):
    # numerically stable log(1 + exp(x)) using only exp/log/abs/max (Mosaic-safe)
    return jnp.maximum(x, 0.0) + jnp.log(1.0 + jnp.exp(-jnp.abs(x)))


# --------------------------------------------------------------------------
# Kernel
# --------------------------------------------------------------------------
def make_deepar_kernel(num_layers, seq_len, horizon, tile_ts, input_size,
                       hidden_size):
    T = seq_len + horizon
    H = hidden_size

    def kernel(*refs):
        (x_ref, y_ref, eps_ref, weproj_ref, bias0_ref,
         wih0x_ref, whh0_ref) = refs[:7]
        n_up = 2 * (num_layers - 1)
        up_refs = refs[7:7 + n_up]
        wms_ref, bms_ref = refs[7 + n_up:9 + n_up]
        ypred_ref, mu_ref, sigma_ref = refs[9 + n_up:12 + n_up]
        hs_scr = refs[12 + n_up]                       # VMEM scratch

        # ---------------- one-time preamble (off the recurrent chain) -------
        we_proj = weproj_ref[...]      # (1, 4H)  We @ Wih0y   (wrapper-computed)
        bias0 = bias0_ref[...]         # (1, 4H)  be @ Wih0y + b_ih0 + b_hh0
        Whh0 = whh0_ref[...]           # (H, 4H)
        Wms = wms_ref[...]             # (H, 2)   fused [W_mu | W_sigma]^T head
        bms = bms_ref[...]             # (1, 2)
        upper = [(up_refs[2 * l][...],       # fused [Wih_l^T; Whh_l^T] : (2H, 4H)
                  up_refs[2 * l + 1][...])   # b_l : (1, 4H)
                 for l in range(num_layers - 1)]

        # Precompute x @ Wih0x (+ bias0) for ALL T steps in one matmul.
        # x_ref block is time-major (T, tile_ts, in); collapsing the leading
        # dim is tile-aligned (tile_ts % 8 == 0) and makes the rows of step s
        # the contiguous slice [s*tile_ts, (s+1)*tile_ts).
        x2d = x_ref[...].reshape(T * tile_ts, input_size)
        xg2d = jnp.dot(x2d, wih0x_ref[...],
                       preferred_element_type=F32) + bias0          # (T*ts, 4H)
        y_all = y_ref[...]                                           # (ts, seq)

        def lstm_step(gates0_in, h_list, c_list):
            """One multi-layer LSTM cell step (gate order i, f, g, o)."""
            new_h, new_c = [], []
            layer_in = None
            for l in range(num_layers):
                if l == 0:
                    gates = gates0_in + jnp.dot(h_list[0], Whh0,
                                                preferred_element_type=F32)
                else:
                    wf, b_l = upper[l - 1]
                    # single fused matmul on [layer_in | h_l]  (K = 2H)
                    xin = jnp.concatenate([layer_in, h_list[l]], axis=1)
                    gates = jnp.dot(xin, wf, preferred_element_type=F32) + b_l
                sig_if = jax.nn.sigmoid(gates[:, 0:2 * H])     # i and f gates
                i_g = sig_if[:, 0:H]
                f_g = sig_if[:, H:2 * H]
                g_g = jnp.tanh(gates[:, 2 * H:3 * H])
                o_g = jax.nn.sigmoid(gates[:, 3 * H:4 * H])
                c_n = f_g * c_list[l] + i_g * g_g
                h_n = o_g * jnp.tanh(c_n)
                new_h.append(h_n)
                new_c.append(c_n)
                layer_in = h_n
            return new_h, new_c

        def head(hs):
            hd = jnp.dot(hs, Wms, preferred_element_type=F32) + bms
            return hd[:, 0:1], _softplus(hd[:, 1:2]) + 1e-6

        zeros = jnp.zeros((tile_ts, H), F32)
        h_list = [zeros] * num_layers
        c_list = [zeros] * num_layers

        # ---- teacher-forced phase (fully unrolled, all indices static) -----
        # gates0 depends only on inputs (y is known), so it is off the
        # recurrent dependency chain; only the last step needs the head
        # inline (it produces the first sample), the rest is deferred.
        mu = sigma = None
        for s in range(seq_len):
            gates0 = (xg2d[s * tile_ts:(s + 1) * tile_ts, :]
                      + y_all[:, s:s + 1] * we_proj)
            h_list, c_list = lstm_step(gates0, h_list, c_list)
            hs_top = jnp.maximum(h_list[-1], 0.0)                    # ReLU
            if s < seq_len - 1:
                hs_scr[s * tile_ts:(s + 1) * tile_ts, :] = hs_top
            else:
                mu, sigma = head(hs_top)
                mu_ref[:, s:s + 1] = mu
                sigma_ref[:, s:s + 1] = sigma

        # the sample drawn at the last teacher-forced step is ypred[:, 0] and
        # feeds the first forecast step (matches the PyTorch loop convention)
        ynext = mu + sigma * eps_ref[:, seq_len - 1:seq_len]
        ypred_ref[:, 0:1] = ynext

        # ---- ancestral-sampling phase (fully unrolled) ----------------------
        for s in range(seq_len, T):
            gates0 = (xg2d[s * tile_ts:(s + 1) * tile_ts, :]
                      + ynext * we_proj)
            h_list, c_list = lstm_step(gates0, h_list, c_list)
            hs_top = jnp.maximum(h_list[-1], 0.0)
            mu, sigma = head(hs_top)
            mu_ref[:, s:s + 1] = mu
            sigma_ref[:, s:s + 1] = sigma
            if s < T - 1:
                ynext = mu + sigma * eps_ref[:, s:s + 1]
                ypred_ref[:, s - seq_len + 1:s - seq_len + 2] = ynext

        # ---- deferred mu/sigma head for teacher-forced steps (off-chain) ----
        if seq_len > 1:
            hs_all = hs_scr[...]                         # ((seq-1)*ts, H)
            hd = jnp.dot(hs_all, Wms, preferred_element_type=F32) + bms
            mu_all = hd[:, 0:1]
            sig_all = _softplus(hd[:, 1:2]) + 1e-6
            for s in range(seq_len - 1):
                mu_ref[:, s:s + 1] = mu_all[s * tile_ts:(s + 1) * tile_ts, :]
                sigma_ref[:, s:s + 1] = sig_all[s * tile_ts:(s + 1) * tile_ts, :]

    return kernel


# --------------------------------------------------------------------------
# Wrapper
# --------------------------------------------------------------------------
def deepar_forward(X, y, Xf, params, eps, *, tile_ts=None):
    """X: (num_ts, seq_len, input_size), y: (num_ts, seq_len),
    Xf: (num_ts, horizon, input_size), eps: (num_ts, seq_len + horizon).
    Returns (ypred, mu, sigma): (num_ts, horizon), (num_ts, T), (num_ts, T)."""
    num_ts, seq_len, input_size = X.shape
    _, horizon, _ = Xf.shape
    T = seq_len + horizon
    hidden = params["Whh0_T"].shape[0]
    num_layers = params["num_layers"]

    # Pick the series tile: as many MXU rows as possible (up to 128) while
    # capping padding waste at the series count itself.
    if tile_ts is None:
        tile_ts = min(128, _round_up(num_ts, 8))
    num_ts_pad = _round_up(num_ts, tile_ts)
    pad = num_ts_pad - num_ts

    # one concatenated, time-major exogenous-feature tensor; y / eps / outputs
    # stay ts-major so the kernel reads & writes plain columns
    Xall = jnp.concatenate([X.astype(F32), Xf.astype(F32)], axis=1)  # (ts, T, in)
    Xall = jnp.pad(Xall, ((0, pad), (0, 0), (0, 0)))
    Xall_tm = jnp.transpose(Xall, (1, 0, 2))                         # (T, ts_pad, in)
    y_p = jnp.pad(y.astype(F32), ((0, pad), (0, 0)))                 # (ts_pad, seq)
    eps_p = jnp.pad(eps.astype(F32), ((0, pad), (0, 0)))             # (ts_pad, T)

    # split layer-0 input weights into exogenous / embedded-y rows and fold
    # the scalar input embedding into the layer-0 gate projection (grid-
    # invariant, so do it here once, not per grid step)
    Wih0 = params["Wih0_T"].astype(F32)
    Wih0x = Wih0[:input_size, :]                                     # (in, 4H)
    Wih0y = Wih0[input_size:, :]                                     # (emb, 4H)
    we_proj = jnp.dot(params["We_T"].astype(F32), Wih0y)             # (1, 4H)
    bias0 = jnp.dot(params["be"].astype(F32), Wih0y) + params["b0"].astype(F32)

    # fuse the mu and sigma heads into a single (H, 2) matmul
    Wms = jnp.concatenate([params["Wmu_T"], params["Wsig_T"]], axis=1).astype(F32)
    bms = jnp.concatenate([params["bmu"], params["bsig"]], axis=1).astype(F32)

    operands = [Xall_tm, y_p, eps_p, we_proj, bias0, Wih0x,
                params["Whh0_T"].astype(F32)]
    for l in range(1, num_layers):
        # stack [Wih_l^T; Whh_l^T] -> one (2H, 4H) fused gate weight
        wf = jnp.concatenate([params[f"Wih{l}_T"], params[f"Whh{l}_T"]],
                             axis=0).astype(F32)
        operands += [wf, params[f"b{l}"].astype(F32)]
    operands += [Wms, bms]

    def resident(a):  # weights: full block, constant index -> stay in VMEM
        return pl.BlockSpec(a.shape, lambda *_: (0,) * a.ndim)

    in_specs = ([pl.BlockSpec((T, tile_ts, input_size), lambda i: (0, i, 0)),
                 pl.BlockSpec((tile_ts, seq_len), lambda i: (i, 0)),
                 pl.BlockSpec((tile_ts, T), lambda i: (i, 0))]
                + [resident(a) for a in operands[3:]])

    out_specs = (pl.BlockSpec((tile_ts, horizon), lambda i: (i, 0)),
                 pl.BlockSpec((tile_ts, T), lambda i: (i, 0)),
                 pl.BlockSpec((tile_ts, T), lambda i: (i, 0)))
    out_shape = (jax.ShapeDtypeStruct((num_ts_pad, horizon), F32),
                 jax.ShapeDtypeStruct((num_ts_pad, T), F32),
                 jax.ShapeDtypeStruct((num_ts_pad, T), F32))

    # scratch for deferred teacher-forced hs (one row block per early step)
    scr_rows = max(seq_len - 1, 1) * tile_ts
    scratch_shapes = [pltpu.VMEM((scr_rows, hidden), F32)]

    kernel = make_deepar_kernel(num_layers, seq_len, horizon, tile_ts,
                                input_size, hidden)

    ypred, mu, sigma = pl.pallas_call(
        kernel,
        grid=(num_ts_pad // tile_ts,),
        in_specs=in_specs,
        out_specs=out_specs,
        out_shape=out_shape,
        scratch_shapes=scratch_shapes,
        compiler_params=pltpu.CompilerParams(
            dimension_semantics=("parallel",)),
    )(*operands)

    # drop the padded series
    return ypred[:num_ts], mu[:num_ts], sigma[:num_ts]


# --------------------------------------------------------------------------
# Pure-JAX reference (mirrors the PyTorch forward loop exactly)
# --------------------------------------------------------------------------
def deepar_reference(X, y, Xf, params, eps):
    num_ts, seq_len, _ = X.shape
    _, horizon, _ = Xf.shape
    T = seq_len + horizon
    H = params["Whh0_T"].shape[0]
    L = params["num_layers"]
    h = [jnp.zeros((num_ts, H), F32) for _ in range(L)]
    c = [jnp.zeros((num_ts, H), F32) for _ in range(L)]
    ynext = None
    mus, sigmas, ypred = [], [], []
    for s in range(T):
        if s < seq_len:
            ynext = y[:, s:s + 1]
            x = X[:, s, :]
        else:
            x = Xf[:, s - seq_len, :]
        yembed = ynext @ params["We_T"] + params["be"]
        layer_in = jnp.concatenate([x, yembed], axis=1)
        for l in range(L):
            gates = (layer_in @ params[f"Wih{l}_T"] + h[l] @ params[f"Whh{l}_T"]
                     + params[f"b{l}"])
            i_g = jax.nn.sigmoid(gates[:, 0:H])
            f_g = jax.nn.sigmoid(gates[:, H:2 * H])
            g_g = jnp.tanh(gates[:, 2 * H:3 * H])
            o_g = jax.nn.sigmoid(gates[:, 3 * H:4 * H])
            c[l] = f_g * c[l] + i_g * g_g
            h[l] = o_g * jnp.tanh(c[l])
            layer_in = h[l]
        hs = jnp.maximum(h[-1], 0.0)
        mu = hs @ params["Wmu_T"] + params["bmu"]
        sigma = jnp.log(1.0 + jnp.exp(hs @ params["Wsig_T"] + params["bsig"])) + 1e-6
        mus.append(mu)
        sigmas.append(sigma)
        ynext = mu + sigma * eps[:, s:s + 1]
        if seq_len - 1 <= s < T - 1:
            ypred.append(ynext)
    return (jnp.concatenate(ypred, axis=1),
            jnp.concatenate(mus, axis=1),
            jnp.concatenate(sigmas, axis=1))


# --------------------------------------------------------------------------
# Deterministic parameter init (shapes from DeepAR.__init__, likelihood='g')
# --------------------------------------------------------------------------
def init_params(key, input_size, embedding_size, hidden_size, num_layers):
    def uni(k, shape, fan_in):
        s = 1.0 / jnp.sqrt(jnp.float32(fan_in))
        return jax.random.uniform(k, shape, F32, -s, s)

    keys = jax.random.split(key, 6 + 4 * num_layers)
    params = {"num_layers": num_layers}
    # input_embed = nn.Linear(1, embedding_size)  -> stored transposed
    params["We_T"] = uni(keys[0], (1, embedding_size), 1)
    params["be"] = uni(keys[1], (1, embedding_size), 1)
    # LSTM(embedding_size + input_size, hidden_size, num_layers)
    kidx = 2
    for l in range(num_layers):
        in_dim = embedding_size + input_size if l == 0 else hidden_size
        params[f"Wih{l}_T"] = uni(keys[kidx], (in_dim, 4 * hidden_size), hidden_size)
        params[f"Whh{l}_T"] = uni(keys[kidx + 1], (hidden_size, 4 * hidden_size), hidden_size)
        b_ih = uni(keys[kidx + 2], (1, 4 * hidden_size), hidden_size)
        b_hh = uni(keys[kidx + 3], (1, 4 * hidden_size), hidden_size)
        params[f"b{l}"] = b_ih + b_hh
        kidx += 4
    # Gaussian likelihood head: mu_layer, sigma_layer = nn.Linear(hidden, 1)
    params["Wmu_T"] = uni(keys[kidx], (hidden_size, 1), hidden_size)
    params["bmu"] = uni(keys[kidx + 1], (1, 1), hidden_size)
    params["Wsig_T"] = uni(keys[kidx + 2], (hidden_size, 1), hidden_size)
    params["bsig"] = uni(keys[kidx + 3], (1, 1), hidden_size)
    return params


# --------------------------------------------------------------------------
if __name__ == "__main__":
    # small shapes consistent with DeepAR.forward
    num_ts, seq_len, horizon = 2, 8, 4
    input_size, embedding_size, hidden_size, num_layers = 4, 8, 32, 2
    T = seq_len + horizon

    root = jax.random.PRNGKey(0)
    k_x, k_y, k_xf, k_eps, k_par = jax.random.split(root, 5)

    X = jax.random.normal(k_x, (num_ts, seq_len, input_size), F32)
    y = jax.random.normal(k_y, (num_ts, seq_len), F32)
    Xf = jax.random.normal(k_xf, (num_ts, horizon, input_size), F32)
    # pre-drawn standard-normal noise replacing torch.distributions sampling
    eps = jax.random.normal(k_eps, (num_ts, T), F32)

    params = init_params(k_par, input_size, embedding_size, hidden_size, num_layers)

    ypred, mu, sigma = deepar_forward(X, y, Xf, params, eps)
    jax.block_until_ready((ypred, mu, sigma))

    assert ypred.shape == (num_ts, horizon)
    assert mu.shape == (num_ts, T)
    assert sigma.shape == (num_ts, T)
    assert bool(jnp.all(jnp.isfinite(ypred))) and bool(jnp.all(jnp.isfinite(mu)))

    # correctness vs. pure-JAX reference of the PyTorch loop
    ypred_r, mu_r, sigma_r = deepar_reference(X, y, Xf, params, eps)
    assert bool(jnp.allclose(mu, mu_r, rtol=1e-3, atol=1e-3))
    assert bool(jnp.allclose(sigma, sigma_r, rtol=1e-3, atol=1e-3))
    assert bool(jnp.allclose(ypred, ypred_r, rtol=1e-3, atol=1e-3))

    print("KERNEL_OK")
</pallas_src>

<mosaic_0001>
module attributes {stable_mosaic.version = 11 : i64} {
  func.func @kernel(%arg0: i32, %arg1: memref<12x8x4xf32, #tpu.memory_space<vmem>>, %arg2: memref<8x8xf32, #tpu.memory_space<vmem>>, %arg3: memref<8x12xf32, #tpu.memory_space<vmem>>, %arg4: memref<1x128xf32, #tpu.memory_space<vmem>>, %arg5: memref<1x128xf32, #tpu.memory_space<vmem>>, %arg6: memref<4x128xf32, #tpu.memory_space<vmem>>, %arg7: memref<32x128xf32, #tpu.memory_space<vmem>>, %arg8: memref<64x128xf32, #tpu.memory_space<vmem>>, %arg9: memref<1x128xf32, #tpu.memory_space<vmem>>, %arg10: memref<32x2xf32, #tpu.memory_space<vmem>>, %arg11: memref<1x2xf32, #tpu.memory_space<vmem>>, %arg12: memref<8x4xf32, #tpu.memory_space<vmem>>, %arg13: memref<8x12xf32, #tpu.memory_space<vmem>>, %arg14: memref<8x12xf32, #tpu.memory_space<vmem>>, %arg15: memref<56x32xf32, #tpu.memory_space<vmem>>) attributes {dimension_semantics = [#tpu.dimension_semantics<parallel>], iteration_bounds = array<i64: 1>, scalar_prefetch = 0 : i64, scratch_operands = 1 : i64, tpu.core_type = #tpu.core_type<tc>, window_params = [{transform_indices = @transform_0, window_bounds = array<i64: 12, 8, 4>}, {transform_indices = @transform_1, window_bounds = array<i64: 8, 8>}, {transform_indices = @transform_2, window_bounds = array<i64: 8, 12>}, {pipeline_mode = #tpu.pipeline_mode<synchronous>, transform_indices = @transform_3, window_bounds = array<i64: 1, 128>}, {pipeline_mode = #tpu.pipeline_mode<synchronous>, transform_indices = @transform_4, window_bounds = array<i64: 1, 128>}, {pipeline_mode = #tpu.pipeline_mode<synchronous>, transform_indices = @transform_5, window_bounds = array<i64: 4, 128>}, {pipeline_mode = #tpu.pipeline_mode<synchronous>, transform_indices = @transform_6, window_bounds = array<i64: 32, 128>}, {pipeline_mode = #tpu.pipeline_mode<synchronous>, transform_indices = @transform_7, window_bounds = array<i64: 64, 128>}, {pipeline_mode = #tpu.pipeline_mode<synchronous>, transform_indices = @transform_8, window_bounds = array<i64: 1, 128>}, {pipeline_mode = #tpu.pipeline_mode<synchronous>, transform_indices = @transform_9, window_bounds = array<i64: 32, 2>}, {pipeline_mode = #tpu.pipeline_mode<synchronous>, transform_indices = @transform_10, window_bounds = array<i64: 1, 2>}, {transform_indices = @transform_11, window_bounds = array<i64: 8, 4>}, {transform_indices = @transform_12, window_bounds = array<i64: 8, 12>}, {transform_indices = @transform_13, window_bounds = array<i64: 8, 12>}]} {
    %c0 = arith.constant 0 : index
    %c0_0 = arith.constant 0 : index
    %0 = vector.load %arg4[%c0, %c0_0] : memref<1x128xf32, #tpu.memory_space<vmem>>, vector<1x128xf32>
    %c0_1 = arith.constant 0 : index
    %c0_2 = arith.constant 0 : index
    %1 = vector.load %arg5[%c0_1, %c0_2] : memref<1x128xf32, #tpu.memory_space<vmem>>, vector<1x128xf32>
    %c0_3 = arith.constant 0 : index
    %c0_4 = arith.constant 0 : index
    %2 = vector.load %arg7[%c0_3, %c0_4] : memref<32x128xf32, #tpu.memory_space<vmem>>, vector<32x128xf32>
    %c0_5 = arith.constant 0 : index
    %c0_6 = arith.constant 0 : index
    %3 = vector.load %arg10[%c0_5, %c0_6] : memref<32x2xf32, #tpu.memory_space<vmem>>, vector<32x2xf32>
    %c0_7 = arith.constant 0 : index
    %c0_8 = arith.constant 0 : index
    %4 = vector.load %arg11[%c0_7, %c0_8] : memref<1x2xf32, #tpu.memory_space<vmem>>, vector<1x2xf32>
    %c0_9 = arith.constant 0 : index
    %c0_10 = arith.constant 0 : index
    %5 = vector.load %arg8[%c0_9, %c0_10] : memref<64x128xf32, #tpu.memory_space<vmem>>, vector<64x128xf32>
    %c0_11 = arith.constant 0 : index
    %c0_12 = arith.constant 0 : index
    %6 = vector.load %arg9[%c0_11, %c0_12] : memref<1x128xf32, #tpu.memory_space<vmem>>, vector<1x128xf32>
    %c0_13 = arith.constant 0 : index
    %c0_14 = arith.constant 0 : index
    %c0_15 = arith.constant 0 : index
    %7 = vector.load %arg1[%c0_13, %c0_14, %c0_15] : memref<12x8x4xf32, #tpu.memory_space<vmem>>, vector<12x8x4xf32>
    %8 = vector.shape_cast %7 : vector<12x8x4xf32> to vector<96x4xf32>
    %c0_16 = arith.constant 0 : index
    %c0_17 = arith.constant 0 : index
    %9 = vector.load %arg6[%c0_16, %c0_17] : memref<4x128xf32, #tpu.memory_space<vmem>>, vector<4x128xf32>
    %cst = arith.constant dense<0.000000e+00> : vector<96x128xf32>
    %10 = tpu.matmul %8, %9, %cst {dimension_numbers = #tpu.dot_dimension_numbers<[1], [0], [0], [1], [0, 0, 1, 1], [], []>} : vector<96x4xf32>, vector<4x128xf32>, vector<96x128xf32> -> vector<96x128xf32>
    %11 = vector.broadcast %1 : vector<1x128xf32> to vector<96x128xf32>
    %12 = arith.addf %10, %11 : vector<96x128xf32>
    %c0_18 = arith.constant 0 : index
    %c0_19 = arith.constant 0 : index
    %13 = vector.load %arg2[%c0_18, %c0_19] : memref<8x8xf32, #tpu.memory_space<vmem>>, vector<8x8xf32>
    %cst_20 = arith.constant 0.000000e+00 : f32
    %14 = vector.broadcast %cst_20 : f32 to vector<8x32xf32>
    %15 = vector.extract_strided_slice %12 {offsets = [0, 0], sizes = [8, 128], strides = [1, 1]} : vector<96x128xf32> to vector<8x128xf32>
    %16 = vector.extract_strided_slice %13 {offsets = [0, 0], sizes = [8, 1], strides = [1, 1]} : vector<8x8xf32> to vector<8x1xf32>
    %17 = vector.broadcast %16 : vector<8x1xf32> to vector<8x128xf32>
    %18 = vector.broadcast %0 : vector<1x128xf32> to vector<8x128xf32>
    %19 = arith.mulf %17, %18 : vector<8x128xf32>
    %20 = arith.addf %15, %19 : vector<8x128xf32>
    %cst_21 = arith.constant dense<0.000000e+00> : vector<8x128xf32>
    %21 = tpu.matmul %14, %2, %cst_21 {dimension_numbers = #tpu.dot_dimension_numbers<[1], [0], [0], [1], [0, 0, 1, 1], [], []>} : vector<8x32xf32>, vector<32x128xf32>, vector<8x128xf32> -> vector<8x128xf32>
    %22 = arith.addf %20, %21 : vector<8x128xf32>
    %23 = vector.extract_strided_slice %22 {offsets = [0, 0], sizes = [8, 64], strides = [1, 1]} : vector<8x128xf32> to vector<8x64xf32>
    %24 = arith.negf %23 : vector<8x64xf32>
    %25 = math.exp %24 : vector<8x64xf32>
    %cst_22 = arith.constant 1.000000e+00 : f32
    %26 = vector.broadcast %cst_22 : f32 to vector<8x64xf32>
    %27 = arith.addf %26, %25 : vector<8x64xf32>
    %28 = arith.divf %26, %27 : vector<8x64xf32>
    %29 = vector.extract_strided_slice %28 {offsets = [0, 0], sizes = [8, 32], strides = [1, 1]} : vector<8x64xf32> to vector<8x32xf32>
    %30 = vector.extract_strided_slice %28 {offsets = [0, 32], sizes = [8, 32], strides = [1, 1]} : vector<8x64xf32> to vector<8x32xf32>
    %31 = vector.extract_strided_slice %22 {offsets = [0, 64], sizes = [8, 32], strides = [1, 1]} : vector<8x128xf32> to vector<8x32xf32>
    %32 = math.tanh %31 : vector<8x32xf32>
    %33 = vector.extract_strided_slice %22 {offsets = [0, 96], sizes = [8, 32], strides = [1, 1]} : vector<8x128xf32> to vector<8x32xf32>
    %34 = arith.negf %33 : vector<8x32xf32>
    %35 = math.exp %34 : vector<8x32xf32>
    %cst_23 = arith.constant 1.000000e+00 : f32
    %36 = vector.broadcast %cst_23 : f32 to vector<8x32xf32>
    %37 = arith.addf %36, %35 : vector<8x32xf32>
    %38 = arith.divf %36, %37 : vector<8x32xf32>
    %39 = arith.mulf %30, %14 : vector<8x32xf32>
    %40 = arith.mulf %29, %32 : vector<8x32xf32>
    %41 = arith.addf %39, %40 : vector<8x32xf32>
    %42 = math.tanh %41 : vector<8x32xf32>
    %43 = arith.mulf %38, %42 : vector<8x32xf32>
    %44 = tpu.concatenate %43, %14 in 1 : vector<8x32xf32>, vector<8x32xf32> -> vector<8x64xf32>
    %cst_24 = arith.constant dense<0.000000e+00> : vector<8x128xf32>
    %45 = tpu.matmul %44, %5, %cst_24 {dimension_numbers = #tpu.dot_dimension_numbers<[1], [0], [0], [1], [0, 0, 1, 1], [], []>} : vector<8x64xf32>, vector<64x128xf32>, vector<8x128xf32> -> vector<8x128xf32>
    %46 = vector.broadcast %6 : vector<1x128xf32> to vector<8x128xf32>
    %47 = arith.addf %45, %46 : vector<8x128xf32>
    %48 = vector.extract_strided_slice %47 {offsets = [0, 0], sizes = [8, 64], strides = [1, 1]} : vector<8x128xf32> to vector<8x64xf32>
    %49 = arith.negf %48 : vector<8x64xf32>
    %50 = math.exp %49 : vector<8x64xf32>
    %cst_25 = arith.constant 1.000000e+00 : f32
    %51 = vector.broadcast %cst_25 : f32 to vector<8x64xf32>
    %52 = arith.addf %51, %50 : vector<8x64xf32>
    %53 = arith.divf %51, %52 : vector<8x64xf32>
    %54 = vector.extract_strided_slice %53 {offsets = [0, 0], sizes = [8, 32], strides = [1, 1]} : vector<8x64xf32> to vector<8x32xf32>
    %55 = vector.extract_strided_slice %53 {offsets = [0, 32], sizes = [8, 32], strides = [1, 1]} : vector<8x64xf32> to vector<8x32xf32>
    %56 = vector.extract_strided_slice %47 {offsets = [0, 64], sizes = [8, 32], strides = [1, 1]} : vector<8x128xf32> to vector<8x32xf32>
    %57 = math.tanh %56 : vector<8x32xf32>
    %58 = vector.extract_strided_slice %47 {offsets = [0, 96], sizes = [8, 32], strides = [1, 1]} : vector<8x128xf32> to vector<8x32xf32>
    %59 = arith.negf %58 : vector<8x32xf32>
    %60 = math.exp %59 : vector<8x32xf32>
    %cst_26 = arith.constant 1.000000e+00 : f32
    %61 = vector.broadcast %cst_26 : f32 to vector<8x32xf32>
    %62 = arith.addf %61, %60 : vector<8x32xf32>
    %63 = arith.divf %61, %62 : vector<8x32xf32>
    %64 = arith.mulf %55, %14 : vector<8x32xf32>
    %65 = arith.mulf %54, %57 : vector<8x32xf32>
    %66 = arith.addf %64, %65 : vector<8x32xf32>
    %67 = math.tanh %66 : vector<8x32xf32>
    %68 = arith.mulf %63, %67 : vector<8x32xf32>
    %cst_27 = arith.constant 0.000000e+00 : f32
    %69 = vector.broadcast %cst_27 : f32 to vector<8x32xf32>
    %70 = arith.maximumf %68, %69 : vector<8x32xf32>
    %c0_28 = arith.constant 0 : index
    %c0_29 = arith.constant 0 : index
    %71 = vector.load %arg15[%c0_28, %c0_29] : memref<56x32xf32, #tpu.memory_space<vmem>>, vector<8x32xf32>
    tpu.vector_store %arg15[%c0_28, %c0_29], %70 {strides = array<i32>} : memref<56x32xf32, #tpu.memory_space<vmem>>, vector<8x32xf32>,
    %72 = vector.extract_strided_slice %12 {offsets = [8, 0], sizes = [8, 128], strides = [1, 1]} : vector<96x128xf32> to vector<8x128xf32>
    %73 = vector.extract_strided_slice %13 {offsets = [0, 1], sizes = [8, 1], strides = [1, 1]} : vector<8x8xf32> to vector<8x1xf32>
    %74 = vector.broadcast %73 : vector<8x1xf32> to vector<8x128xf32>
    %75 = vector.broadcast %0 : vector<1x128xf32> to vector<8x128xf32>
    %76 = arith.mulf %74, %75 : vector<8x128xf32>
    %77 = arith.addf %72, %76 : vector<8x128xf32>
    %cst_30 = arith.constant dense<0.000000e+00> : vector<8x128xf32>
    %78 = tpu.matmul %43, %2, %cst_30 {dimension_numbers = #tpu.dot_dimension_numbers<[1], [0], [0], [1], [0, 0, 1, 1], [], []>} : vector<8x32xf32>, vector<32x128xf32>, vector<8x128xf32> -> vector<8x128xf32>
    %79 = arith.addf %77, %78 : vector<8x128xf32>
    %80 = vector.extract_strided_slice %79 {offsets = [0, 0], sizes = [8, 64], strides = [1, 1]} : vector<8x128xf32> to vector<8x64xf32>
    %81 = arith.negf %80 : vector<8x64xf32>
    %82 = math.exp %81 : vector<8x64xf32>
    %cst_31 = arith.constant 1.000000e+00 : f32
    %83 = vector.broadcast %cst_31 : f32 to vector<8x64xf32>
    %84 = arith.addf %83, %82 : vector<8x64xf32>
    %85 = arith.divf %83, %84 : vector<8x64xf32>
    %86 = vector.extract_strided_slice %85 {offsets = [0, 0], sizes = [8, 32], strides = [1, 1]} : vector<8x64xf32> to vector<8x32xf32>
    %87 = vector.extract_strided_slice %85 {offsets = [0, 32], sizes = [8, 32], strides = [1, 1]} : vector<8x64xf32> to vector<8x32xf32>
    %88 = vector.extract_strided_slice %79 {offsets = [0, 64], sizes = [8, 32], strides = [1, 1]} : vector<8x128xf32> to vector<8x32xf32>
    %89 = math.tanh %88 : vector<8x32xf32>
    %90 = vector.extract_strided_slice %79 {offsets = [0, 96], sizes = [8, 32], strides = [1, 1]} : vector<8x128xf32> to vector<8x32xf32>
    %91 = arith.negf %90 : vector<8x32xf32>
    %92 = math.exp %91 : vector<8x32xf32>
    %cst_32 = arith.constant 1.000000e+00 : f32
    %93 = vector.broadcast %cst_32 : f32 to vector<8x32xf32>
    %94 = arith.addf %93, %92 : vector<8x32xf32>
    %95 = arith.divf %93, %94 : vector<8x32xf32>
    %96 = arith.mulf %87, %41 : vector<8x32xf32>
    %97 = arith.mulf %86, %89 : vector<8x32xf32>
    %98 = arith.addf %96, %97 : vector<8x32xf32>
    %99 = math.tanh %98 : vector<8x32xf32>
    %100 = arith.mulf %95, %99 : vector<8x32xf32>
    %101 = tpu.concatenate %100, %68 in 1 : vector<8x32xf32>, vector<8x32xf32> -> vector<8x64xf32>
    %cst_33 = arith.constant dense<0.000000e+00> : vector<8x128xf32>
    %102 = tpu.matmul %101, %5, %cst_33 {dimension_numbers = #tpu.dot_dimension_numbers<[1], [0], [0], [1], [0, 0, 1, 1], [], []>} : vector<8x64xf32>, vector<64x128xf32>, vector<8x128xf32> -> vector<8x128xf32>
    %103 = vector.broadcast %6 : vector<1x128xf32> to vector<8x128xf32>
    %104 = arith.addf %102, %103 : vector<8x128xf32>
    %105 = vector.extract_strided_slice %104 {offsets = [0, 0], sizes = [8, 64], strides = [1, 1]} : vector<8x128xf32> to vector<8x64xf32>
    %106 = arith.negf %105 : vector<8x64xf32>
    %107 = math.exp %106 : vector<8x64xf32>
    %cst_34 = arith.constant 1.000000e+00 : f32
    %108 = vector.broadcast %cst_34 : f32 to vector<8x64xf32>
    %109 = arith.addf %108, %107 : vector<8x64xf32>
    %110 = arith.divf %108, %109 : vector<8x64xf32>
    %111 = vector.extract_strided_slice %110 {offsets = [0, 0], sizes = [8, 32], strides = [1, 1]} : vector<8x64xf32> to vector<8x32xf32>
    %112 = vector.extract_strided_slice %110 {offsets = [0, 32], sizes = [8, 32], strides = [1, 1]} : vector<8x64xf32> to vector<8x32xf32>
    %113 = vector.extract_strided_slice %104 {offsets = [0, 64], sizes = [8, 32], strides = [1, 1]} : vector<8x128xf32> to vector<8x32xf32>
    %114 = math.tanh %113 : vector<8x32xf32>
    %115 = vector.extract_strided_slice %104 {offsets = [0, 96], sizes = [8, 32], strides = [1, 1]} : vector<8x128xf32> to vector<8x32xf32>
    %116 = arith.negf %115 : vector<8x32xf32>
    %117 = math.exp %116 : vector<8x32xf32>
    %cst_35 = arith.constant 1.000000e+00 : f32
    %118 = vector.broadcast %cst_35 : f32 to vector<8x32xf32>
    %119 = arith.addf %118, %117 : vector<8x32xf32>
    %120 = arith.divf %118, %119 : vector<8x32xf32>
    %121 = arith.mulf %112, %66 : vector<8x32xf32>
    %122 = arith.mulf %111, %114 : vector<8x32xf32>
    %123 = arith.addf %121, %122 : vector<8x32xf32>
    %124 = math.tanh %123 : vector<8x32xf32>
    %125 = arith.mulf %120, %124 : vector<8x32xf32>
    %cst_36 = arith.constant 0.000000e+00 : f32
    %126 = vector.broadcast %cst_36 : f32 to vector<8x32xf32>
    %127 = arith.maximumf %125, %126 : vector<8x32xf32>
    %c8 = arith.constant 8 : index
    %c0_37 = arith.constant 0 : index
    %128 = vector.load %arg15[%c8, %c0_37] : memref<56x32xf32, #tpu.memory_space<vmem>>, vector<8x32xf32>
    tpu.vector_store %arg15[%c8, %c0_37], %127 {strides = array<i32>} : memref<56x32xf32, #tpu.memory_space<vmem>>, vector<8x32xf32>,
    %129 = vector.extract_strided_slice %12 {offsets = [16, 0], sizes = [8, 128], strides = [1, 1]} : vector<96x128xf32> to vector<8x128xf32>
    %130 = vector.extract_strided_slice %13 {offsets = [0, 2], sizes = [8, 1], strides = [1, 1]} : vector<8x8xf32> to vector<8x1xf32>
    %131 = vector.broadcast %130 : vector<8x1xf32> to vector<8x128xf32>
    %132 = vector.broadcast %0 : vector<1x128xf32> to vector<8x128xf32>
    %133 = arith.mulf %131, %132 : vector<8x128xf32>
    %134 = arith.addf %129, %133 : vector<8x128xf32>
    %cst_38 = arith.constant dense<0.000000e+00> : vector<8x128xf32>
    %135 = tpu.matmul %100, %2, %cst_38 {dimension_numbers = #tpu.dot_dimension_numbers<[1], [0], [0], [1], [0, 0, 1, 1], [], []>} : vector<8x32xf32>, vector<32x128xf32>, vector<8x128xf32> -> vector<8x128xf32>
    %136 = arith.addf %134, %135 : vector<8x128xf32>
    %137 = vector.extract_strided_slice %136 {offsets = [0, 0], sizes = [8, 64], strides = [1, 1]} : vector<8x128xf32> to vector<8x64xf32>
    %138 = arith.negf %137 : vector<8x64xf32>
    %139 = math.exp %138 : vector<8x64xf32>
    %cst_39 = arith.constant 1.000000e+00 : f32
    %140 = vector.broadcast %cst_39 : f32 to vector<8x64xf32>
    %141 = arith.addf %140, %139 : vector<8x64xf32>
    %142 = arith.divf %140, %141 : vector<8x64xf32>
    %143 = vector.extract_strided_slice %142 {offsets = [0, 0], sizes = [8, 32], strides = [1, 1]} : vector<8x64xf32> to vector<8x32xf32>
    %144 = vector.extract_strided_slice %142 {offsets = [0, 32], sizes = [8, 32], strides = [1, 1]} : vector<8x64xf32> to vector<8x32xf32>
    %145 = vector.extract_strided_slice %136 {offsets = [0, 64], sizes = [8, 32], strides = [1, 1]} : vector<8x128xf32> to vector<8x32xf32>
    %146 = math.tanh %145 : vector<8x32xf32>
    %147 = vector.extract_strided_slice %136 {offsets = [0, 96], sizes = [8, 32], strides = [1, 1]} : vector<8x128xf32> to vector<8x32xf32>
    %148 = arith.negf %147 : vector<8x32xf32>
    %149 = math.exp %148 : vector<8x32xf32>
    %cst_40 = arith.constant 1.000000e+00 : f32
    %150 = vector.broadcast %cst_40 : f32 to vector<8x32xf32>
    %151 = arith.addf %150, %149 : vector<8x32xf32>
    %152 = arith.divf %150, %151 : vector<8x32xf32>
    %153 = arith.mulf %144, %98 : vector<8x32xf32>
    %154 = arith.mulf %143, %146 : vector<8x32xf32>
    %155 = arith.addf %153, %154 : vector<8x32xf32>
    %156 = math.tanh %155 : vector<8x32xf32>
    %157 = arith.mulf %152, %156 : vector<8x32xf32>
    %158 = tpu.concatenate %157, %125 in 1 : vector<8x32xf32>, vector<8x32xf32> -> vector<8x64xf32>
    %cst_41 = arith.constant dense<0.000000e+00> : vector<8x128xf32>
    %159 = tpu.matmul %158, %5, %cst_41 {dimension_numbers = #tpu.dot_dimension_numbers<[1], [0], [0], [1], [0, 0, 1, 1], [], []>} : vector<8x64xf32>, vector<64x128xf32>, vector<8x128xf32> -> vector<8x128xf32>
    %160 = vector.broadcast %6 : vector<1x128xf32> to vector<8x128xf32>
    %161 = arith.addf %159, %160 : vector<8x128xf32>
    %162 = vector.extract_strided_slice %161 {offsets = [0, 0], sizes = [8, 64], strides = [1, 1]} : vector<8x128xf32> to vector<8x64xf32>
    %163 = arith.negf %162 : vector<8x64xf32>
    %164 = math.exp %163 : vector<8x64xf32>
    %cst_42 = arith.constant 1.000000e+00 : f32
    %165 = vector.broadcast %cst_42 : f32 to vector<8x64xf32>
    %166 = arith.addf %165, %164 : vector<8x64xf32>
    %167 = arith.divf %165, %166 : vector<8x64xf32>
    %168 = vector.extract_strided_slice %167 {offsets = [0, 0], sizes = [8, 32], strides = [1, 1]} : vector<8x64xf32> to vector<8x32xf32>
    %169 = vector.extract_strided_slice %167 {offsets = [0, 32], sizes = [8, 32], strides = [1, 1]} : vector<8x64xf32> to vector<8x32xf32>
    %170 = vector.extract_strided_slice %161 {offsets = [0, 64], sizes = [8, 32], strides = [1, 1]} : vector<8x128xf32> to vector<8x32xf32>
    %171 = math.tanh %170 : vector<8x32xf32>
    %172 = vector.extract_strided_slice %161 {offsets = [0, 96], sizes = [8, 32], strides = [1, 1]} : vector<8x128xf32> to vector<8x32xf32>
    %173 = arith.negf %172 : vector<8x32xf32>
    %174 = math.exp %173 : vector<8x32xf32>
    %cst_43 = arith.constant 1.000000e+00 : f32
    %175 = vector.broadcast %cst_43 : f32 to vector<8x32xf32>
    %176 = arith.addf %175, %174 : vector<8x32xf32>
    %177 = arith.divf %175, %176 : vector<8x32xf32>
    %178 = arith.mulf %169, %123 : vector<8x32xf32>
    %179 = arith.mulf %168, %171 : vector<8x32xf32>
    %180 = arith.addf %178, %179 : vector<8x32xf32>
    %181 = math.tanh %180 : vector<8x32xf32>
    %182 = arith.mulf %177, %181 : vector<8x32xf32>
    %cst_44 = arith.constant 0.000000e+00 : f32
    %183 = vector.broadcast %cst_44 : f32 to vector<8x32xf32>
    %184 = arith.maximumf %182, %183 : vector<8x32xf32>
    %c16 = arith.constant 16 : index
    %c0_45 = arith.constant 0 : index
    %185 = vector.load %arg15[%c16, %c0_45] : memref<56x32xf32, #tpu.memory_space<vmem>>, vector<8x32xf32>
    tpu.vector_store %arg15[%c16, %c0_45], %184 {strides = array<i32>} : memref<56x32xf32, #tpu.memory_space<vmem>>, vector<8x32xf32>,
    %186 = vector.extract_strided_slice %12 {offsets = [24, 0], sizes = [8, 128], strides = [1, 1]} : vector<96x128xf32> to vector<8x128xf32>
    %187 = vector.extract_strided_slice %13 {offsets = [0, 3], sizes = [8, 1], strides = [1, 1]} : vector<8x8xf32> to vector<8x1xf32>
    %188 = vector.broadcast %187 : vector<8x1xf32> to vector<8x128xf32>
    %189 = vector.broadcast %0 : vector<1x128xf32> to vector<8x128xf32>
    %190 = arith.mulf %188, %189 : vector<8x128xf32>
    %191 = arith.addf %186, %190 : vector<8x128xf32>
    %cst_46 = arith.constant dense<0.000000e+00> : vector<8x128xf32>
    %192 = tpu.matmul %157, %2, %cst_46 {dimension_numbers = #tpu.dot_dimension_numbers<[1], [0], [0], [1], [0, 0, 1, 1], [], []>} : vector<8x32xf32>, vector<32x128xf32>, vector<8x128xf32> -> vector<8x128xf32>
    %193 = arith.addf %191, %192 : vector<8x128xf32>
    %194 = vector.extract_strided_slice %193 {offsets = [0, 0], sizes = [8, 64], strides = [1, 1]} : vector<8x128xf32> to vector<8x64xf32>
    %195 = arith.negf %194 : vector<8x64xf32>
    %196 = math.exp %195 : vector<8x64xf32>
    %cst_47 = arith.constant 1.000000e+00 : f32
    %197 = vector.broadcast %cst_47 : f32 to vector<8x64xf32>
    %198 = arith.addf %197, %196 : vector<8x64xf32>
    %199 = arith.divf %197, %198 : vector<8x64xf32>
    %200 = vector.extract_strided_slice %199 {offsets = [0, 0], sizes = [8, 32], strides = [1, 1]} : vector<8x64xf32> to vector<8x32xf32>
    %201 = vector.extract_strided_slice %199 {offsets = [0, 32], sizes = [8, 32], strides = [1, 1]} : vector<8x64xf32> to vector<8x32xf32>
    %202 = vector.extract_strided_slice %193 {offsets = [0, 64], sizes = [8, 32], strides = [1, 1]} : vector<8x128xf32> to vector<8x32xf32>
    %203 = math.tanh %202 : vector<8x32xf32>
    %204 = vector.extract_strided_slice %193 {offsets = [0, 96], sizes = [8, 32], strides = [1, 1]} : vector<8x128xf32> to vector<8x32xf32>
    %205 = arith.negf %204 : vector<8x32xf32>
    %206 = math.exp %205 : vector<8x32xf32>
    %cst_48 = arith.constant 1.000000e+00 : f32
    %207 = vector.broadcast %cst_48 : f32 to vector<8x32xf32>
    %208 = arith.addf %207, %206 : vector<8x32xf32>
    %209 = arith.divf %207, %208 : vector<8x32xf32>
    %210 = arith.mulf %201, %155 : vector<8x32xf32>
    %211 = arith.mulf %200, %203 : vector<8x32xf32>
    %212 = arith.addf %210, %211 : vector<8x32xf32>
    %213 = math.tanh %212 : vector<8x32xf32>
    %214 = arith.mulf %209, %213 : vector<8x32xf32>
    %215 = tpu.concatenate %214, %182 in 1 : vector<8x32xf32>, vector<8x32xf32> -> vector<8x64xf32>
    %cst_49 = arith.constant dense<0.000000e+00> : vector<8x128xf32>
    %216 = tpu.matmul %215, %5, %cst_49 {dimension_numbers = #tpu.dot_dimension_numbers<[1], [0], [0], [1], [0, 0, 1, 1], [], []>} : vector<8x64xf32>, vector<64x128xf32>, vector<8x128xf32> -> vector<8x128xf32>
    %217 = vector.broadcast %6 : vector<1x128xf32> to vector<8x128xf32>
    %218 = arith.addf %216, %217 : vector<8x128xf32>
    %219 = vector.extract_strided_slice %218 {offsets = [0, 0], sizes = [8, 64], strides = [1, 1]} : vector<8x128xf32> to vector<8x64xf32>
    %220 = arith.negf %219 : vector<8x64xf32>
    %221 = math.exp %220 : vector<8x64xf32>
    %cst_50 = arith.constant 1.000000e+00 : f32
    %222 = vector.broadcast %cst_50 : f32 to vector<8x64xf32>
    %223 = arith.addf %222, %221 : vector<8x64xf32>
    %224 = arith.divf %222, %223 : vector<8x64xf32>
    %225 = vector.extract_strided_slice %224 {offsets = [0, 0], sizes = [8, 32], strides = [1, 1]} : vector<8x64xf32> to vector<8x32xf32>
    %226 = vector.extract_strided_slice %224 {offsets = [0, 32], sizes = [8, 32], strides = [1, 1]} : vector<8x64xf32> to vector<8x32xf32>
    %227 = vector.extract_strided_slice %218 {offsets = [0, 64], sizes = [8, 32], strides = [1, 1]} : vector<8x128xf32> to vector<8x32xf32>
    %228 = math.tanh %227 : vector<8x32xf32>
    %229 = vector.extract_strided_slice %218 {offsets = [0, 96], sizes = [8, 32], strides = [1, 1]} : vector<8x128xf32> to vector<8x32xf32>
    %230 = arith.negf %229 : vector<8x32xf32>
    %231 = math.exp %230 : vector<8x32xf32>
    %cst_51 = arith.constant 1.000000e+00 : f32
    %232 = vector.broadcast %cst_51 : f32 to vector<8x32xf32>
    %233 = arith.addf %232, %231 : vector<8x32xf32>
    %234 = arith.divf %232, %233 : vector<8x32xf32>
    %235 = arith.mulf %226, %180 : vector<8x32xf32>
    %236 = arith.mulf %225, %228 : vector<8x32xf32>
    %237 = arith.addf %235, %236 : vector<8x32xf32>
    %238 = math.tanh %237 : vector<8x32xf32>
    %239 = arith.mulf %234, %238 : vector<8x32xf32>
    %cst_52 = arith.constant 0.000000e+00 : f32
    %240 = vector.broadcast %cst_52 : f32 to vector<8x32xf32>
    %241 = arith.maximumf %239, %240 : vector<8x32xf32>
    %c24 = arith.constant 24 : index
    %c0_53 = arith.constant 0 : index
    %242 = vector.load %arg15[%c24, %c0_53] : memref<56x32xf32, #tpu.memory_space<vmem>>, vector<8x32xf32>
    tpu.vector_store %arg15[%c24, %c0_53], %241 {strides = array<i32>} : memref<56x32xf32, #tpu.memory_space<vmem>>, vector<8x32xf32>,
    %243 = vector.extract_strided_slice %12 {offsets = [32, 0], sizes = [8, 128], strides = [1, 1]} : vector<96x128xf32> to vector<8x128xf32>
    %244 = vector.extract_strided_slice %13 {offsets = [0, 4], sizes = [8, 1], strides = [1, 1]} : vector<8x8xf32> to vector<8x1xf32>
    %245 = vector.broadcast %244 : vector<8x1xf32> to vector<8x128xf32>
    %246 = vector.broadcast %0 : vector<1x128xf32> to vector<8x128xf32>
    %247 = arith.mulf %245, %246 : vector<8x128xf32>
    %248 = arith.addf %243, %247 : vector<8x128xf32>
    %cst_54 = arith.constant dense<0.000000e+00> : vector<8x128xf32>
    %249 = tpu.matmul %214, %2, %cst_54 {dimension_numbers = #tpu.dot_dimension_numbers<[1], [0], [0], [1], [0, 0, 1, 1], [], []>} : vector<8x32xf32>, vector<32x128xf32>, vector<8x128xf32> -> vector<8x128xf32>
    %250 = arith.addf %248, %249 : vector<8x128xf32>
    %251 = vector.extract_strided_slice %250 {offsets = [0, 0], sizes = [8, 64], strides = [1, 1]} : vector<8x128xf32> to vector<8x64xf32>
    %252 = arith.negf %251 : vector<8x64xf32>
    %253 = math.exp %252 : vector<8x64xf32>
    %cst_55 = arith.constant 1.000000e+00 : f32
    %254 = vector.broadcast %cst_55 : f32 to vector<8x64xf32>
    %255 = arith.addf %254, %253 : vector<8x64xf32>
    %256 = arith.divf %254, %255 : vector<8x64xf32>
    %257 = vector.extract_strided_slice %256 {offsets = [0, 0], sizes = [8, 32], strides = [1, 1]} : vector<8x64xf32> to vector<8x32xf32>
    %258 = vector.extract_strided_slice %256 {offsets = [0, 32], sizes = [8, 32], strides = [1, 1]} : vector<8x64xf32> to vector<8x32xf32>
    %259 = vector.extract_strided_slice %250 {offsets = [0, 64], sizes = [8, 32], strides = [1, 1]} : vector<8x128xf32> to vector<8x32xf32>
    %260 = math.tanh %259 : vector<8x32xf32>
    %261 = vector.extract_strided_slice %250 {offsets = [0, 96], sizes = [8, 32], strides = [1, 1]} : vector<8x128xf32> to vector<8x32xf32>
    %262 = arith.negf %261 : vector<8x32xf32>
    %263 = math.exp %262 : vector<8x32xf32>
    %cst_56 = arith.constant 1.000000e+00 : f32
    %264 = vector.broadcast %cst_56 : f32 to vector<8x32xf32>
    %265 = arith.addf %264, %263 : vector<8x32xf32>
    %266 = arith.divf %264, %265 : vector<8x32xf32>
    %267 = arith.mulf %258, %212 : vector<8x32xf32>
    %268 = arith.mulf %257, %260 : vector<8x32xf32>
    %269 = arith.addf %267, %268 : vector<8x32xf32>
    %270 = math.tanh %269 : vector<8x32xf32>
    %271 = arith.mulf %266, %270 : vector<8x32xf32>
    %272 = tpu.concatenate %271, %239 in 1 : vector<8x32xf32>, vector<8x32xf32> -> vector<8x64xf32>
    %cst_57 = arith.constant dense<0.000000e+00> : vector<8x128xf32>
    %273 = tpu.matmul %272, %5, %cst_57 {dimension_numbers = #tpu.dot_dimension_numbers<[1], [0], [0], [1], [0, 0, 1, 1], [], []>} : vector<8x64xf32>, vector<64x128xf32>, vector<8x128xf32> -> vector<8x128xf32>
    %274 = vector.broadcast %6 : vector<1x128xf32> to vector<8x128xf32>
    %275 = arith.addf %273, %274 : vector<8x128xf32>
    %276 = vector.extract_strided_slice %275 {offsets = [0, 0], sizes = [8, 64], strides = [1, 1]} : vector<8x128xf32> to vector<8x64xf32>
    %277 = arith.negf %276 : vector<8x64xf32>
    %278 = math.exp %277 : vector<8x64xf32>
    %cst_58 = arith.constant 1.000000e+00 : f32
    %279 = vector.broadcast %cst_58 : f32 to vector<8x64xf32>
    %280 = arith.addf %279, %278 : vector<8x64xf32>
    %281 = arith.divf %279, %280 : vector<8x64xf32>
    %282 = vector.extract_strided_slice %281 {offsets = [0, 0], sizes = [8, 32], strides = [1, 1]} : vector<8x64xf32> to vector<8x32xf32>
    %283 = vector.extract_strided_slice %281 {offsets = [0, 32], sizes = [8, 32], strides = [1, 1]} : vector<8x64xf32> to vector<8x32xf32>
    %284 = vector.extract_strided_slice %275 {offsets = [0, 64], sizes = [8, 32], strides = [1, 1]} : vector<8x128xf32> to vector<8x32xf32>
    %285 = math.tanh %284 : vector<8x32xf32>
    %286 = vector.extract_strided_slice %275 {offsets = [0, 96], sizes = [8, 32], strides = [1, 1]} : vector<8x128xf32> to vector<8x32xf32>
    %287 = arith.negf %286 : vector<8x32xf32>
    %288 = math.exp %287 : vector<8x32xf32>
    %cst_59 = arith.constant 1.000000e+00 : f32
    %289 = vector.broadcast %cst_59 : f32 to vector<8x32xf32>
    %290 = arith.addf %289, %288 : vector<8x32xf32>
    %291 = arith.divf %289, %290 : vector<8x32xf32>
    %292 = arith.mulf %283, %237 : vector<8x32xf32>
    %293 = arith.mulf %282, %285 : vector<8x32xf32>
    %294 = arith.addf %292, %293 : vector<8x32xf32>
    %295 = math.tanh %294 : vector<8x32xf32>
    %296 = arith.mulf %291, %295 : vector<8x32xf32>
    %cst_60 = arith.constant 0.000000e+00 : f32
    %297 = vector.broadcast %cst_60 : f32 to vector<8x32xf32>
    %298 = arith.maximumf %296, %297 : vector<8x32xf32>
    %c32 = arith.constant 32 : index
    %c0_61 = arith.constant 0 : index
    %299 = vector.load %arg15[%c32, %c0_61] : memref<56x32xf32, #tpu.memory_space<vmem>>, vector<8x32xf32>
    tpu.vector_store %arg15[%c32, %c0_61], %298 {strides = array<i32>} : memref<56x32xf32, #tpu.memory_space<vmem>>, vector<8x32xf32>,
    %300 = vector.extract_strided_slice %12 {offsets = [40, 0], sizes = [8, 128], strides = [1, 1]} : vector<96x128xf32> to vector<8x128xf32>
    %301 = vector.extract_strided_slice %13 {offsets = [0, 5], sizes = [8, 1], strides = [1, 1]} : vector<8x8xf32> to vector<8x1xf32>
    %302 = vector.broadcast %301 : vector<8x1xf32> to vector<8x128xf32>
    %303 = vector.broadcast %0 : vector<1x128xf32> to vector<8x128xf32>
    %304 = arith.mulf %302, %303 : vector<8x128xf32>
    %305 = arith.addf %300, %304 : vector<8x128xf32>
    %cst_62 = arith.constant dense<0.000000e+00> : vector<8x128xf32>
    %306 = tpu.matmul %271, %2, %cst_62 {dimension_numbers = #tpu.dot_dimension_numbers<[1], [0], [0], [1], [0, 0, 1, 1], [], []>} : vector<8x32xf32>, vector<32x128xf32>, vector<8x128xf32> -> vector<8x128xf32>
    %307 = arith.addf %305, %306 : vector<8x128xf32>
    %308 = vector.extract_strided_slice %307 {offsets = [0, 0], sizes = [8, 64], strides = [1, 1]} : vector<8x128xf32> to vector<8x64xf32>
    %309 = arith.negf %308 : vector<8x64xf32>
    %310 = math.exp %309 : vector<8x64xf32>
    %cst_63 = arith.constant 1.000000e+00 : f32
    %311 = vector.broadcast %cst_63 : f32 to vector<8x64xf32>
    %312 = arith.addf %311, %310 : vector<8x64xf32>
    %313 = arith.divf %311, %312 : vector<8x64xf32>
    %314 = vector.extract_strided_slice %313 {offsets = [0, 0], sizes = [8, 32], strides = [1, 1]} : vector<8x64xf32> to vector<8x32xf32>
    %315 = vector.extract_strided_slice %313 {offsets = [0, 32], sizes = [8, 32], strides = [1, 1]} : vector<8x64xf32> to vector<8x32xf32>
    %316 = vector.extract_strided_slice %307 {offsets = [0, 64], sizes = [8, 32], strides = [1, 1]} : vector<8x128xf32> to vector<8x32xf32>
    %317 = math.tanh %316 : vector<8x32xf32>
    %318 = vector.extract_strided_slice %307 {offsets = [0, 96], sizes = [8, 32], strides = [1, 1]} : vector<8x128xf32> to vector<8x32xf32>
    %319 = arith.negf %318 : vector<8x32xf32>
    %320 = math.exp %319 : vector<8x32xf32>
    %cst_64 = arith.constant 1.000000e+00 : f32
    %321 = vector.broadcast %cst_64 : f32 to vector<8x32xf32>
    %322 = arith.addf %321, %320 : vector<8x32xf32>
    %323 = arith.divf %321, %322 : vector<8x32xf32>
    %324 = arith.mulf %315, %269 : vector<8x32xf32>
    %325 = arith.mulf %314, %317 : vector<8x32xf32>
    %326 = arith.addf %324, %325 : vector<8x32xf32>
    %327 = math.tanh %326 : vector<8x32xf32>
    %328 = arith.mulf %323, %327 : vector<8x32xf32>
    %329 = tpu.concatenate %328, %296 in 1 : vector<8x32xf32>, vector<8x32xf32> -> vector<8x64xf32>
    %cst_65 = arith.constant dense<0.000000e+00> : vector<8x128xf32>
    %330 = tpu.matmul %329, %5, %cst_65 {dimension_numbers = #tpu.dot_dimension_numbers<[1], [0], [0], [1], [0, 0, 1, 1], [], []>} : vector<8x64xf32>, vector<64x128xf32>, vector<8x128xf32> -> vector<8x128xf32>
    %331 = vector.broadcast %6 : vector<1x128xf32> to vector<8x128xf32>
    %332 = arith.addf %330, %331 : vector<8x128xf32>
    %333 = vector.extract_strided_slice %332 {offsets = [0, 0], sizes = [8, 64], strides = [1, 1]} : vector<8x128xf32> to vector<8x64xf32>
    %334 = arith.negf %333 : vector<8x64xf32>
    %335 = math.exp %334 : vector<8x64xf32>
    %cst_66 = arith.constant 1.000000e+00 : f32
    %336 = vector.broadcast %cst_66 : f32 to vector<8x64xf32>
    %337 = arith.addf %336, %335 : vector<8x64xf32>
    %338 = arith.divf %336, %337 : vector<8x64xf32>
    %339 = vector.extract_strided_slice %338 {offsets = [0, 0], sizes = [8, 32], strides = [1, 1]} : vector<8x64xf32> to vector<8x32xf32>
    %340 = vector.extract_strided_slice %338 {offsets = [0, 32], sizes = [8, 32], strides = [1, 1]} : vector<8x64xf32> to vector<8x32xf32>
    %341 = vector.extract_strided_slice %332 {offsets = [0, 64], sizes = [8, 32], strides = [1, 1]} : vector<8x128xf32> to vector<8x32xf32>
    %342 = math.tanh %341 : vector<8x32xf32>
    %343 = vector.extract_strided_slice %332 {offsets = [0, 96], sizes = [8, 32], strides = [1, 1]} : vector<8x128xf32> to vector<8x32xf32>
    %344 = arith.negf %343 : vector<8x32xf32>
    %345 = math.exp %344 : vector<8x32xf32>
    %cst_67 = arith.constant 1.000000e+00 : f32
    %346 = vector.broadcast %cst_67 : f32 to vector<8x32xf32>
    %347 = arith.addf %346, %345 : vector<8x32xf32>
    %348 = arith.divf %346, %347 : vector<8x32xf32>
    %349 = arith.mulf %340, %294 : vector<8x32xf32>
    %350 = arith.mulf %339, %342 : vector<8x32xf32>
    %351 = arith.addf %349, %350 : vector<8x32xf32>
    %352 = math.tanh %351 : vector<8x32xf32>
    %353 = arith.mulf %348, %352 : vector<8x32xf32>
    %cst_68 = arith.constant 0.000000e+00 : f32
    %354 = vector.broadcast %cst_68 : f32 to vector<8x32xf32>
    %355 = arith.maximumf %353, %354 : vector<8x32xf32>
    %c40 = arith.constant 40 : index
    %c0_69 = arith.constant 0 : index
    %356 = vector.load %arg15[%c40, %c0_69] : memref<56x32xf32, #tpu.memory_space<vmem>>, vector<8x32xf32>
    tpu.vector_store %arg15[%c40, %c0_69], %355 {strides = array<i32>} : memref<56x32xf32, #tpu.memory_space<vmem>>, vector<8x32xf32>,
    %357 = vector.extract_strided_slice %12 {offsets = [48, 0], sizes = [8, 128], strides = [1, 1]} : vector<96x128xf32> to vector<8x128xf32>
    %358 = vector.extract_strided_slice %13 {offsets = [0, 6], sizes = [8, 1], strides = [1, 1]} : vector<8x8xf32> to vector<8x1xf32>
    %359 = vector.broadcast %358 : vector<8x1xf32> to vector<8x128xf32>
    %360 = vector.broadcast %0 : vector<1x128xf32> to vector<8x128xf32>
    %361 = arith.mulf %359, %360 : vector<8x128xf32>
    %362 = arith.addf %357, %361 : vector<8x128xf32>
    %cst_70 = arith.constant dense<0.000000e+00> : vector<8x128xf32>
    %363 = tpu.matmul %328, %2, %cst_70 {dimension_numbers = #tpu.dot_dimension_numbers<[1], [0], [0], [1], [0, 0, 1, 1], [], []>} : vector<8x32xf32>, vector<32x128xf32>, vector<8x128xf32> -> vector<8x128xf32>
    %364 = arith.addf %362, %363 : vector<8x128xf32>
    %365 = vector.extract_strided_slice %364 {offsets = [0, 0], sizes = [8, 64], strides = [1, 1]} : vector<8x128xf32> to vector<8x64xf32>
    %366 = arith.negf %365 : vector<8x64xf32>
    %367 = math.exp %366 : vector<8x64xf32>
    %cst_71 = arith.constant 1.000000e+00 : f32
    %368 = vector.broadcast %cst_71 : f32 to vector<8x64xf32>
    %369 = arith.addf %368, %367 : vector<8x64xf32>
    %370 = arith.divf %368, %369 : vector<8x64xf32>
    %371 = vector.extract_strided_slice %370 {offsets = [0, 0], sizes = [8, 32], strides = [1, 1]} : vector<8x64xf32> to vector<8x32xf32>
    %372 = vector.extract_strided_slice %370 {offsets = [0, 32], sizes = [8, 32], strides = [1, 1]} : vector<8x64xf32> to vector<8x32xf32>
    %373 = vector.extract_strided_slice %364 {offsets = [0, 64], sizes = [8, 32], strides = [1, 1]} : vector<8x128xf32> to vector<8x32xf32>
    %374 = math.tanh %373 : vector<8x32xf32>
    %375 = vector.extract_strided_slice %364 {offsets = [0, 96], sizes = [8, 32], strides = [1, 1]} : vector<8x128xf32> to vector<8x32xf32>
    %376 = arith.negf %375 : vector<8x32xf32>
    %377 = math.exp %376 : vector<8x32xf32>
    %cst_72 = arith.constant 1.000000e+00 : f32
    %378 = vector.broadcast %cst_72 : f32 to vector<8x32xf32>
    %379 = arith.addf %378, %377 : vector<8x32xf32>
    %380 = arith.divf %378, %379 : vector<8x32xf32>
    %381 = arith.mulf %372, %326 : vector<8x32xf32>
    %382 = arith.mulf %371, %374 : vector<8x32xf32>
    %383 = arith.addf %381, %382 : vector<8x32xf32>
    %384 = math.tanh %383 : vector<8x32xf32>
    %385 = arith.mulf %380, %384 : vector<8x32xf32>
    %386 = tpu.concatenate %385, %353 in 1 : vector<8x32xf32>, vector<8x32xf32> -> vector<8x64xf32>
    %cst_73 = arith.constant dense<0.000000e+00> : vector<8x128xf32>
    %387 = tpu.matmul %386, %5, %cst_73 {dimension_numbers = #tpu.dot_dimension_numbers<[1], [0], [0], [1], [0, 0, 1, 1], [], []>} : vector<8x64xf32>, vector<64x128xf32>, vector<8x128xf32> -> vector<8x128xf32>
    %388 = vector.broadcast %6 : vector<1x128xf32> to vector<8x128xf32>
    %389 = arith.addf %387, %388 : vector<8x128xf32>
    %390 = vector.extract_strided_slice %389 {offsets = [0, 0], sizes = [8, 64], strides = [1, 1]} : vector<8x128xf32> to vector<8x64xf32>
    %391 = arith.negf %390 : vector<8x64xf32>
    %392 = math.exp %391 : vector<8x64xf32>
    %cst_74 = arith.constant 1.000000e+00 : f32
    %393 = vector.broadcast %cst_74 : f32 to vector<8x64xf32>
    %394 = arith.addf %393, %392 : vector<8x64xf32>
    %395 = arith.divf %393, %394 : vector<8x64xf32>
    %396 = vector.extract_strided_slice %395 {offsets = [0, 0], sizes = [8, 32], strides = [1, 1]} : vector<8x64xf32> to vector<8x32xf32>
    %397 = vector.extract_strided_slice %395 {offsets = [0, 32], sizes = [8, 32], strides = [1, 1]} : vector<8x64xf32> to vector<8x32xf32>
    %398 = vector.extract_strided_slice %389 {offsets = [0, 64], sizes = [8, 32], strides = [1, 1]} : vector<8x128xf32> to vector<8x32xf32>
    %399 = math.tanh %398 : vector<8x32xf32>
    %400 = vector.extract_strided_slice %389 {offsets = [0, 96], sizes = [8, 32], strides = [1, 1]} : vector<8x128xf32> to vector<8x32xf32>
    %401 = arith.negf %400 : vector<8x32xf32>
    %402 = math.exp %401 : vector<8x32xf32>
    %cst_75 = arith.constant 1.000000e+00 : f32
    %403 = vector.broadcast %cst_75 : f32 to vector<8x32xf32>
    %404 = arith.addf %403, %402 : vector<8x32xf32>
    %405 = arith.divf %403, %404 : vector<8x32xf32>
    %406 = arith.mulf %397, %351 : vector<8x32xf32>
    %407 = arith.mulf %396, %399 : vector<8x32xf32>
    %408 = arith.addf %406, %407 : vector<8x32xf32>
    %409 = math.tanh %408 : vector<8x32xf32>
    %410 = arith.mulf %405, %409 : vector<8x32xf32>
    %cst_76 = arith.constant 0.000000e+00 : f32
    %411 = vector.broadcast %cst_76 : f32 to vector<8x32xf32>
    %412 = arith.maximumf %410, %411 : vector<8x32xf32>
    %c48 = arith.constant 48 : index
    %c0_77 = arith.constant 0 : index
    %413 = vector.load %arg15[%c48, %c0_77] : memref<56x32xf32, #tpu.memory_space<vmem>>, vector<8x32xf32>
    tpu.vector_store %arg15[%c48, %c0_77], %412 {strides = array<i32>} : memref<56x32xf32, #tpu.memory_space<vmem>>, vector<8x32xf32>,
    %414 = vector.extract_strided_slice %12 {offsets = [56, 0], sizes = [8, 128], strides = [1, 1]} : vector<96x128xf32> to vector<8x128xf32>
    %415 = vector.extract_strided_slice %13 {offsets = [0, 7], sizes = [8, 1], strides = [1, 1]} : vector<8x8xf32> to vector<8x1xf32>
    %416 = vector.broadcast %415 : vector<8x1xf32> to vector<8x128xf32>
    %417 = vector.broadcast %0 : vector<1x128xf32> to vector<8x128xf32>
    %418 = arith.mulf %416, %417 : vector<8x128xf32>
    %419 = arith.addf %414, %418 : vector<8x128xf32>
    %cst_78 = arith.constant dense<0.000000e+00> : vector<8x128xf32>
    %420 = tpu.matmul %385, %2, %cst_78 {dimension_numbers = #tpu.dot_dimension_numbers<[1], [0], [0], [1], [0, 0, 1, 1], [], []>} : vector<8x32xf32>, vector<32x128xf32>, vector<8x128xf32> -> vector<8x128xf32>
    %421 = arith.addf %419, %420 : vector<8x128xf32>
    %422 = vector.extract_strided_slice %421 {offsets = [0, 0], sizes = [8, 64], strides = [1, 1]} : vector<8x128xf32> to vector<8x64xf32>
    %423 = arith.negf %422 : vector<8x64xf32>
    %424 = math.exp %423 : vector<8x64xf32>
    %cst_79 = arith.constant 1.000000e+00 : f32
    %425 = vector.broadcast %cst_79 : f32 to vector<8x64xf32>
    %426 = arith.addf %425, %424 : vector<8x64xf32>
    %427 = arith.divf %425, %426 : vector<8x64xf32>
    %428 = vector.extract_strided_slice %427 {offsets = [0, 0], sizes = [8, 32], strides = [1, 1]} : vector<8x64xf32> to vector<8x32xf32>
    %429 = vector.extract_strided_slice %427 {offsets = [0, 32], sizes = [8, 32], strides = [1, 1]} : vector<8x64xf32> to vector<8x32xf32>
    %430 = vector.extract_strided_slice %421 {offsets = [0, 64], sizes = [8, 32], strides = [1, 1]} : vector<8x128xf32> to vector<8x32xf32>
    %431 = math.tanh %430 : vector<8x32xf32>
    %432 = vector.extract_strided_slice %421 {offsets = [0, 96], sizes = [8, 32], strides = [1, 1]} : vector<8x128xf32> to vector<8x32xf32>
    %433 = arith.negf %432 : vector<8x32xf32>
    %434 = math.exp %433 : vector<8x32xf32>
    %cst_80 = arith.constant 1.000000e+00 : f32
    %435 = vector.broadcast %cst_80 : f32 to vector<8x32xf32>
    %436 = arith.addf %435, %434 : vector<8x32xf32>
    %437 = arith.divf %435, %436 : vector<8x32xf32>
    %438 = arith.mulf %429, %383 : vector<8x32xf32>
    %439 = arith.mulf %428, %431 : vector<8x32xf32>
    %440 = arith.addf %438, %439 : vector<8x32xf32>
    %441 = math.tanh %440 : vector<8x32xf32>
    %442 = arith.mulf %437, %441 : vector<8x32xf32>
    %443 = tpu.concatenate %442, %410 in 1 : vector<8x32xf32>, vector<8x32xf32> -> vector<8x64xf32>
    %cst_81 = arith.constant dense<0.000000e+00> : vector<8x128xf32>
    %444 = tpu.matmul %443, %5, %cst_81 {dimension_numbers = #tpu.dot_dimension_numbers<[1], [0], [0], [1], [0, 0, 1, 1], [], []>} : vector<8x64xf32>, vector<64x128xf32>, vector<8x128xf32> -> vector<8x128xf32>
    %445 = vector.broadcast %6 : vector<1x128xf32> to vector<8x128xf32>
    %446 = arith.addf %444, %445 : vector<8x128xf32>
    %447 = vector.extract_strided_slice %446 {offsets = [0, 0], sizes = [8, 64], strides = [1, 1]} : vector<8x128xf32> to vector<8x64xf32>
    %448 = arith.negf %447 : vector<8x64xf32>
    %449 = math.exp %448 : vector<8x64xf32>
    %cst_82 = arith.constant 1.000000e+00 : f32
    %450 = vector.broadcast %cst_82 : f32 to vector<8x64xf32>
    %451 = arith.addf %450, %449 : vector<8x64xf32>
    %452 = arith.divf %450, %451 : vector<8x64xf32>
    %453 = vector.extract_strided_slice %452 {offsets = [0, 0], sizes = [8, 32], strides = [1, 1]} : vector<8x64xf32> to vector<8x32xf32>
    %454 = vector.extract_strided_slice %452 {offsets = [0, 32], sizes = [8, 32], strides = [1, 1]} : vector<8x64xf32> to vector<8x32xf32>
    %455 = vector.extract_strided_slice %446 {offsets = [0, 64], sizes = [8, 32], strides = [1, 1]} : vector<8x128xf32> to vector<8x32xf32>
    %456 = math.tanh %455 : vector<8x32xf32>
    %457 = vector.extract_strided_slice %446 {offsets = [0, 96], sizes = [8, 32], strides = [1, 1]} : vector<8x128xf32> to vector<8x32xf32>
    %458 = arith.negf %457 : vector<8x32xf32>
    %459 = math.exp %458 : vector<8x32xf32>
    %cst_83 = arith.constant 1.000000e+00 : f32
    %460 = vector.broadcast %cst_83 : f32 to vector<8x32xf32>
    %461 = arith.addf %460, %459 : vector<8x32xf32>
    %462 = arith.divf %460, %461 : vector<8x32xf32>
    %463 = arith.mulf %454, %408 : vector<8x32xf32>
    %464 = arith.mulf %453, %456 : vector<8x32xf32>
    %465 = arith.addf %463, %464 : vector<8x32xf32>
    %466 = math.tanh %465 : vector<8x32xf32>
    %467 = arith.mulf %462, %466 : vector<8x32xf32>
    %cst_84 = arith.constant 0.000000e+00 : f32
    %468 = vector.broadcast %cst_84 : f32 to vector<8x32xf32>
    %469 = arith.maximumf %467, %468 : vector<8x32xf32>
    %cst_85 = arith.constant dense<0.000000e+00> : vector<8x2xf32>
    %470 = tpu.matmul %469, %3, %cst_85 {dimension_numbers = #tpu.dot_dimension_numbers<[1], [0], [0], [1], [0, 0, 1, 1], [], []>} : vector<8x32xf32>, vector<32x2xf32>, vector<8x2xf32> -> vector<8x2xf32>
    %471 = vector.broadcast %4 : vector<1x2xf32> to vector<8x2xf32>
    %472 = arith.addf %470, %471 : vector<8x2xf32>
    %473 = vector.extract_strided_slice %472 {offsets = [0, 0], sizes = [8, 1], strides = [1, 1]} : vector<8x2xf32> to vector<8x1xf32>
    %474 = vector.extract_strided_slice %472 {offsets = [0, 1], sizes = [8, 1], strides = [1, 1]} : vector<8x2xf32> to vector<8x1xf32>
    %cst_86 = arith.constant 0.000000e+00 : f32
    %475 = vector.broadcast %cst_86 : f32 to vector<8x1xf32>
    %476 = arith.maximumf %474, %475 : vector<8x1xf32>
    %477 = math.absf %474 : vector<8x1xf32>
    %cst_87 = arith.constant 0.000000e+00 : f32
    %478 = vector.broadcast %cst_87 : f32 to vector<8x1xf32>
    %479 = arith.subf %478, %477 : vector<8x1xf32>
    %480 = math.exp %479 : vector<8x1xf32>
    %cst_88 = arith.constant 1.000000e+00 : f32
    %481 = vector.broadcast %cst_88 : f32 to vector<8x1xf32>
    %482 = arith.addf %481, %480 : vector<8x1xf32>
    %483 = math.log %482 : vector<8x1xf32>
    %484 = arith.addf %476, %483 : vector<8x1xf32>
    %cst_89 = arith.constant 9.99999997E-7 : f32
    %485 = vector.broadcast %cst_89 : f32 to vector<8x1xf32>
    %486 = arith.addf %484, %485 : vector<8x1xf32>
    %c0_90 = arith.constant 0 : index
    %c7 = arith.constant 7 : index
    %487 = vector.load %arg13[%c0_90, %c7] : memref<8x12xf32, #tpu.memory_space<vmem>>, vector<8x1xf32>
    tpu.vector_store %arg13[%c0_90, %c7], %473 {strides = array<i32>} : memref<8x12xf32, #tpu.memory_space<vmem>>, vector<8x1xf32>,
    %c0_91 = arith.constant 0 : index
    %c7_92 = arith.constant 7 : index
    %488 = vector.load %arg14[%c0_91, %c7_92] : memref<8x12xf32, #tpu.memory_space<vmem>>, vector<8x1xf32>
    tpu.vector_store %arg14[%c0_91, %c7_92], %486 {strides = array<i32>} : memref<8x12xf32, #tpu.memory_space<vmem>>, vector<8x1xf32>,
    %c0_93 = arith.constant 0 : index
    %c7_94 = arith.constant 7 : index
    %489 = vector.load %arg3[%c0_93, %c7_94] : memref<8x12xf32, #tpu.memory_space<vmem>>, vector<8x1xf32>
    %490 = arith.mulf %486, %489 : vector<8x1xf32>
    %491 = arith.addf %473, %490 : vector<8x1xf32>
    %c0_95 = arith.constant 0 : index
    %c0_96 = arith.constant 0 : index
    %492 = vector.load %arg12[%c0_95, %c0_96] : memref<8x4xf32, #tpu.memory_space<vmem>>, vector<8x1xf32>
    tpu.vector_store %arg12[%c0_95, %c0_96], %491 {strides = array<i32>} : memref<8x4xf32, #tpu.memory_space<vmem>>, vector<8x1xf32>,
    %493 = vector.extract_strided_slice %12 {offsets = [64, 0], sizes = [8, 128], strides = [1, 1]} : vector<96x128xf32> to vector<8x128xf32>
    %494 = vector.broadcast %491 : vector<8x1xf32> to vector<8x128xf32>
    %495 = vector.broadcast %0 : vector<1x128xf32> to vector<8x128xf32>
    %496 = arith.mulf %494, %495 : vector<8x128xf32>
    %497 = arith.addf %493, %496 : vector<8x128xf32>
    %cst_97 = arith.constant dense<0.000000e+00> : vector<8x128xf32>
    %498 = tpu.matmul %442, %2, %cst_97 {dimension_numbers = #tpu.dot_dimension_numbers<[1], [0], [0], [1], [0, 0, 1, 1], [], []>} : vector<8x32xf32>, vector<32x128xf32>, vector<8x128xf32> -> vector<8x128xf32>
    %499 = arith.addf %497, %498 : vector<8x128xf32>
    %500 = vector.extract_strided_slice %499 {offsets = [0, 0], sizes = [8, 64], strides = [1, 1]} : vector<8x128xf32> to vector<8x64xf32>
    %501 = arith.negf %500 : vector<8x64xf32>
    %502 = math.exp %501 : vector<8x64xf32>
    %cst_98 = arith.constant 1.000000e+00 : f32
    %503 = vector.broadcast %cst_98 : f32 to vector<8x64xf32>
    %504 = arith.addf %503, %502 : vector<8x64xf32>
    %505 = arith.divf %503, %504 : vector<8x64xf32>
    %506 = vector.extract_strided_slice %505 {offsets = [0, 0], sizes = [8, 32], strides = [1, 1]} : vector<8x64xf32> to vector<8x32xf32>
    %507 = vector.extract_strided_slice %505 {offsets = [0, 32], sizes = [8, 32], strides = [1, 1]} : vector<8x64xf32> to vector<8x32xf32>
    %508 = vector.extract_strided_slice %499 {offsets = [0, 64], sizes = [8, 32], strides = [1, 1]} : vector<8x128xf32> to vector<8x32xf32>
    %509 = math.tanh %508 : vector<8x32xf32>
    %510 = vector.extract_strided_slice %499 {offsets = [0, 96], sizes = [8, 32], strides = [1, 1]} : vector<8x128xf32> to vector<8x32xf32>
    %511 = arith.negf %510 : vector<8x32xf32>
    %512 = math.exp %511 : vector<8x32xf32>
    %cst_99 = arith.constant 1.000000e+00 : f32
    %513 = vector.broadcast %cst_99 : f32 to vector<8x32xf32>
    %514 = arith.addf %513, %512 : vector<8x32xf32>
    %515 = arith.divf %513, %514 : vector<8x32xf32>
    %516 = arith.mulf %507, %440 : vector<8x32xf32>
    %517 = arith.mulf %506, %509 : vector<8x32xf32>
    %518 = arith.addf %516, %517 : vector<8x32xf32>
    %519 = math.tanh %518 : vector<8x32xf32>
    %520 = arith.mulf %515, %519 : vector<8x32xf32>
    %521 = tpu.concatenate %520, %467 in 1 : vector<8x32xf32>, vector<8x32xf32> -> vector<8x64xf32>
    %cst_100 = arith.constant dense<0.000000e+00> : vector<8x128xf32>
    %522 = tpu.matmul %521, %5, %cst_100 {dimension_numbers = #tpu.dot_dimension_numbers<[1], [0], [0], [1], [0, 0, 1, 1], [], []>} : vector<8x64xf32>, vector<64x128xf32>, vector<8x128xf32> -> vector<8x128xf32>
    %523 = vector.broadcast %6 : vector<1x128xf32> to vector<8x128xf32>
    %524 = arith.addf %522, %523 : vector<8x128xf32>
    %525 = vector.extract_strided_slice %524 {offsets = [0, 0], sizes = [8, 64], strides = [1, 1]} : vector<8x128xf32> to vector<8x64xf32>
    %526 = arith.negf %525 : vector<8x64xf32>
    %527 = math.exp %526 : vector<8x64xf32>
    %cst_101 = arith.constant 1.000000e+00 : f32
    %528 = vector.broadcast %cst_101 : f32 to vector<8x64xf32>
    %529 = arith.addf %528, %527 : vector<8x64xf32>
    %530 = arith.divf %528, %529 : vector<8x64xf32>
    %531 = vector.extract_strided_slice %530 {offsets = [0, 0], sizes = [8, 32], strides = [1, 1]} : vector<8x64xf32> to vector<8x32xf32>
    %532 = vector.extract_strided_slice %530 {offsets = [0, 32], sizes = [8, 32], strides = [1, 1]} : vector<8x64xf32> to vector<8x32xf32>
    %533 = vector.extract_strided_slice %524 {offsets = [0, 64], sizes = [8, 32], strides = [1, 1]} : vector<8x128xf32> to vector<8x32xf32>
    %534 = math.tanh %533 : vector<8x32xf32>
    %535 = vector.extract_strided_slice %524 {offsets = [0, 96], sizes = [8, 32], strides = [1, 1]} : vector<8x128xf32> to vector<8x32xf32>
    %536 = arith.negf %535 : vector<8x32xf32>
    %537 = math.exp %536 : vector<8x32xf32>
    %cst_102 = arith.constant 1.000000e+00 : f32
    %538 = vector.broadcast %cst_102 : f32 to vector<8x32xf32>
    %539 = arith.addf %538, %537 : vector<8x32xf32>
    %540 = arith.divf %538, %539 : vector<8x32xf32>
    %541 = arith.mulf %532, %465 : vector<8x32xf32>
    %542 = arith.mulf %531, %534 : vector<8x32xf32>
    %543 = arith.addf %541, %542 : vector<8x32xf32>
    %544 = math.tanh %543 : vector<8x32xf32>
    %545 = arith.mulf %540, %544 : vector<8x32xf32>
    %cst_103 = arith.constant 0.000000e+00 : f32
    %546 = vector.broadcast %cst_103 : f32 to vector<8x32xf32>
    %547 = arith.maximumf %545, %546 : vector<8x32xf32>
    %cst_104 = arith.constant dense<0.000000e+00> : vector<8x2xf32>
    %548 = tpu.matmul %547, %3, %cst_104 {dimension_numbers = #tpu.dot_dimension_numbers<[1], [0], [0], [1], [0, 0, 1, 1], [], []>} : vector<8x32xf32>, vector<32x2xf32>, vector<8x2xf32> -> vector<8x2xf32>
    %549 = vector.broadcast %4 : vector<1x2xf32> to vector<8x2xf32>
    %550 = arith.addf %548, %549 : vector<8x2xf32>
    %551 = vector.extract_strided_slice %550 {offsets = [0, 0], sizes = [8, 1], strides = [1, 1]} : vector<8x2xf32> to vector<8x1xf32>
    %552 = vector.extract_strided_slice %550 {offsets = [0, 1], sizes = [8, 1], strides = [1, 1]} : vector<8x2xf32> to vector<8x1xf32>
    %cst_105 = arith.constant 0.000000e+00 : f32
    %553 = vector.broadcast %cst_105 : f32 to vector<8x1xf32>
    %554 = arith.maximumf %552, %553 : vector<8x1xf32>
    %555 = math.absf %552 : vector<8x1xf32>
    %cst_106 = arith.constant 0.000000e+00 : f32
    %556 = vector.broadcast %cst_106 : f32 to vector<8x1xf32>
    %557 = arith.subf %556, %555 : vector<8x1xf32>
    %558 = math.exp %557 : vector<8x1xf32>
    %cst_107 = arith.constant 1.000000e+00 : f32
    %559 = vector.broadcast %cst_107 : f32 to vector<8x1xf32>
    %560 = arith.addf %559, %558 : vector<8x1xf32>
    %561 = math.log %560 : vector<8x1xf32>
    %562 = arith.addf %554, %561 : vector<8x1xf32>
    %cst_108 = arith.constant 9.99999997E-7 : f32
    %563 = vector.broadcast %cst_108 : f32 to vector<8x1xf32>
    %564 = arith.addf %562, %563 : vector<8x1xf32>
    %c0_109 = arith.constant 0 : index
    %c8_110 = arith.constant 8 : index
    %565 = vector.load %arg13[%c0_109, %c8_110] : memref<8x12xf32, #tpu.memory_space<vmem>>, vector<8x1xf32>
    tpu.vector_store %arg13[%c0_109, %c8_110], %551 {strides = array<i32>} : memref<8x12xf32, #tpu.memory_space<vmem>>, vector<8x1xf32>,
    %c0_111 = arith.constant 0 : index
    %c8_112 = arith.constant 8 : index
    %566 = vector.load %arg14[%c0_111, %c8_112] : memref<8x12xf32, #tpu.memory_space<vmem>>, vector<8x1xf32>
    tpu.vector_store %arg14[%c0_111, %c8_112], %564 {strides = array<i32>} : memref<8x12xf32, #tpu.memory_space<vmem>>, vector<8x1xf32>,
    %c0_113 = arith.constant 0 : index
    %c8_114 = arith.constant 8 : index
    %567 = vector.load %arg3[%c0_113, %c8_114] : memref<8x12xf32, #tpu.memory_space<vmem>>, vector<8x1xf32>
    %568 = arith.mulf %564, %567 : vector<8x1xf32>
    %569 = arith.addf %551, %568 : vector<8x1xf32>
    %c0_115 = arith.constant 0 : index
    %c1 = arith.constant 1 : index
    %570 = vector.load %arg12[%c0_115, %c1] : memref<8x4xf32, #tpu.memory_space<vmem>>, vector<8x1xf32>
    tpu.vector_store %arg12[%c0_115, %c1], %569 {strides = array<i32>} : memref<8x4xf32, #tpu.memory_space<vmem>>, vector<8x1xf32>,
    %571 = vector.extract_strided_slice %12 {offsets = [72, 0], sizes = [8, 128], strides = [1, 1]} : vector<96x128xf32> to vector<8x128xf32>
    %572 = vector.broadcast %569 : vector<8x1xf32> to vector<8x128xf32>
    %573 = vector.broadcast %0 : vector<1x128xf32> to vector<8x128xf32>
    %574 = arith.mulf %572, %573 : vector<8x128xf32>
    %575 = arith.addf %571, %574 : vector<8x128xf32>
    %cst_116 = arith.constant dense<0.000000e+00> : vector<8x128xf32>
    %576 = tpu.matmul %520, %2, %cst_116 {dimension_numbers = #tpu.dot_dimension_numbers<[1], [0], [0], [1], [0, 0, 1, 1], [], []>} : vector<8x32xf32>, vector<32x128xf32>, vector<8x128xf32> -> vector<8x128xf32>
    %577 = arith.addf %575, %576 : vector<8x128xf32>
    %578 = vector.extract_strided_slice %577 {offsets = [0, 0], sizes = [8, 64], strides = [1, 1]} : vector<8x128xf32> to vector<8x64xf32>
    %579 = arith.negf %578 : vector<8x64xf32>
    %580 = math.exp %579 : vector<8x64xf32>
    %cst_117 = arith.constant 1.000000e+00 : f32
    %581 = vector.broadcast %cst_117 : f32 to vector<8x64xf32>
    %582 = arith.addf %581, %580 : vector<8x64xf32>
    %583 = arith.divf %581, %582 : vector<8x64xf32>
    %584 = vector.extract_strided_slice %583 {offsets = [0, 0], sizes = [8, 32], strides = [1, 1]} : vector<8x64xf32> to vector<8x32xf32>
    %585 = vector.extract_strided_slice %583 {offsets = [0, 32], sizes = [8, 32], strides = [1, 1]} : vector<8x64xf32> to vector<8x32xf32>
    %586 = vector.extract_strided_slice %577 {offsets = [0, 64], sizes = [8, 32], strides = [1, 1]} : vector<8x128xf32> to vector<8x32xf32>
    %587 = math.tanh %586 : vector<8x32xf32>
    %588 = vector.extract_strided_slice %577 {offsets = [0, 96], sizes = [8, 32], strides = [1, 1]} : vector<8x128xf32> to vector<8x32xf32>
    %589 = arith.negf %588 : vector<8x32xf32>
    %590 = math.exp %589 : vector<8x32xf32>
    %cst_118 = arith.constant 1.000000e+00 : f32
    %591 = vector.broadcast %cst_118 : f32 to vector<8x32xf32>
    %592 = arith.addf %591, %590 : vector<8x32xf32>
    %593 = arith.divf %591, %592 : vector<8x32xf32>
    %594 = arith.mulf %585, %518 : vector<8x32xf32>
    %595 = arith.mulf %584, %587 : vector<8x32xf32>
    %596 = arith.addf %594, %595 : vector<8x32xf32>
    %597 = math.tanh %596 : vector<8x32xf32>
    %598 = arith.mulf %593, %597 : vector<8x32xf32>
    %599 = tpu.concatenate %598, %545 in 1 : vector<8x32xf32>, vector<8x32xf32> -> vector<8x64xf32>
    %cst_119 = arith.constant dense<0.000000e+00> : vector<8x128xf32>
    %600 = tpu.matmul %599, %5, %cst_119 {dimension_numbers = #tpu.dot_dimension_numbers<[1], [0], [0], [1], [0, 0, 1, 1], [], []>} : vector<8x64xf32>, vector<64x128xf32>, vector<8x128xf32> -> vector<8x128xf32>
    %601 = vector.broadcast %6 : vector<1x128xf32> to vector<8x128xf32>
    %602 = arith.addf %600, %601 : vector<8x128xf32>
    %603 = vector.extract_strided_slice %602 {offsets = [0, 0], sizes = [8, 64], strides = [1, 1]} : vector<8x128xf32> to vector<8x64xf32>
    %604 = arith.negf %603 : vector<8x64xf32>
    %605 = math.exp %604 : vector<8x64xf32>
    %cst_120 = arith.constant 1.000000e+00 : f32
    %606 = vector.broadcast %cst_120 : f32 to vector<8x64xf32>
    %607 = arith.addf %606, %605 : vector<8x64xf32>
    %608 = arith.divf %606, %607 : vector<8x64xf32>
    %609 = vector.extract_strided_slice %608 {offsets = [0, 0], sizes = [8, 32], strides = [1, 1]} : vector<8x64xf32> to vector<8x32xf32>
    %610 = vector.extract_strided_slice %608 {offsets = [0, 32], sizes = [8, 32], strides = [1, 1]} : vector<8x64xf32> to vector<8x32xf32>
    %611 = vector.extract_strided_slice %602 {offsets = [0, 64], sizes = [8, 32], strides = [1, 1]} : vector<8x128xf32> to vector<8x32xf32>
    %612 = math.tanh %611 : vector<8x32xf32>
    %613 = vector.extract_strided_slice %602 {offsets = [0, 96], sizes = [8, 32], strides = [1, 1]} : vector<8x128xf32> to vector<8x32xf32>
    %614 = arith.negf %613 : vector<8x32xf32>
    %615 = math.exp %614 : vector<8x32xf32>
    %cst_121 = arith.constant 1.000000e+00 : f32
    %616 = vector.broadcast %cst_121 : f32 to vector<8x32xf32>
    %617 = arith.addf %616, %615 : vector<8x32xf32>
    %618 = arith.divf %616, %617 : vector<8x32xf32>
    %619 = arith.mulf %610, %543 : vector<8x32xf32>
    %620 = arith.mulf %609, %612 : vector<8x32xf32>
    %621 = arith.addf %619, %620 : vector<8x32xf32>
    %622 = math.tanh %621 : vector<8x32xf32>
    %623 = arith.mulf %618, %622 : vector<8x32xf32>
    %cst_122 = arith.constant 0.000000e+00 : f32
    %624 = vector.broadcast %cst_122 : f32 to vector<8x32xf32>
    %625 = arith.maximumf %623, %624 : vector<8x32xf32>
    %cst_123 = arith.constant dense<0.000000e+00> : vector<8x2xf32>
    %626 = tpu.matmul %625, %3, %cst_123 {dimension_numbers = #tpu.dot_dimension_numbers<[1], [0], [0], [1], [0, 0, 1, 1], [], []>} : vector<8x32xf32>, vector<32x2xf32>, vector<8x2xf32> -> vector<8x2xf32>
    %627 = vector.broadcast %4 : vector<1x2xf32> to vector<8x2xf32>
    %628 = arith.addf %626, %627 : vector<8x2xf32>
    %629 = vector.extract_strided_slice %628 {offsets = [0, 0], sizes = [8, 1], strides = [1, 1]} : vector<8x2xf32> to vector<8x1xf32>
    %630 = vector.extract_strided_slice %628 {offsets = [0, 1], sizes = [8, 1], strides = [1, 1]} : vector<8x2xf32> to vector<8x1xf32>
    %cst_124 = arith.constant 0.000000e+00 : f32
    %631 = vector.broadcast %cst_124 : f32 to vector<8x1xf32>
    %632 = arith.maximumf %630, %631 : vector<8x1xf32>
    %633 = math.absf %630 : vector<8x1xf32>
    %cst_125 = arith.constant 0.000000e+00 : f32
    %634 = vector.broadcast %cst_125 : f32 to vector<8x1xf32>
    %635 = arith.subf %634, %633 : vector<8x1xf32>
    %636 = math.exp %635 : vector<8x1xf32>
    %cst_126 = arith.constant 1.000000e+00 : f32
    %637 = vector.broadcast %cst_126 : f32 to vector<8x1xf32>
    %638 = arith.addf %637, %636 : vector<8x1xf32>
    %639 = math.log %638 : vector<8x1xf32>
    %640 = arith.addf %632, %639 : vector<8x1xf32>
    %cst_127 = arith.constant 9.99999997E-7 : f32
    %641 = vector.broadcast %cst_127 : f32 to vector<8x1xf32>
    %642 = arith.addf %640, %641 : vector<8x1xf32>
    %c0_128 = arith.constant 0 : index
    %c9 = arith.constant 9 : index
    %643 = vector.load %arg13[%c0_128, %c9] : memref<8x12xf32, #tpu.memory_space<vmem>>, vector<8x1xf32>
    tpu.vector_store %arg13[%c0_128, %c9], %629 {strides = array<i32>} : memref<8x12xf32, #tpu.memory_space<vmem>>, vector<8x1xf32>,
    %c0_129 = arith.constant 0 : index
    %c9_130 = arith.constant 9 : index
    %644 = vector.load %arg14[%c0_129, %c9_130] : memref<8x12xf32, #tpu.memory_space<vmem>>, vector<8x1xf32>
    tpu.vector_store %arg14[%c0_129, %c9_130], %642 {strides = array<i32>} : memref<8x12xf32, #tpu.memory_space<vmem>>, vector<8x1xf32>,
    %c0_131 = arith.constant 0 : index
    %c9_132 = arith.constant 9 : index
    %645 = vector.load %arg3[%c0_131, %c9_132] : memref<8x12xf32, #tpu.memory_space<vmem>>, vector<8x1xf32>
    %646 = arith.mulf %642, %645 : vector<8x1xf32>
    %647 = arith.addf %629, %646 : vector<8x1xf32>
    %c0_133 = arith.constant 0 : index
    %c2 = arith.constant 2 : index
    %648 = vector.load %arg12[%c0_133, %c2] : memref<8x4xf32, #tpu.memory_space<vmem>>, vector<8x1xf32>
    tpu.vector_store %arg12[%c0_133, %c2], %647 {strides = array<i32>} : memref<8x4xf32, #tpu.memory_space<vmem>>, vector<8x1xf32>,
    %649 = vector.extract_strided_slice %12 {offsets = [80, 0], sizes = [8, 128], strides = [1, 1]} : vector<96x128xf32> to vector<8x128xf32>
    %650 = vector.broadcast %647 : vector<8x1xf32> to vector<8x128xf32>
    %651 = vector.broadcast %0 : vector<1x128xf32> to vector<8x128xf32>
    %652 = arith.mulf %650, %651 : vector<8x128xf32>
    %653 = arith.addf %649, %652 : vector<8x128xf32>
    %cst_134 = arith.constant dense<0.000000e+00> : vector<8x128xf32>
    %654 = tpu.matmul %598, %2, %cst_134 {dimension_numbers = #tpu.dot_dimension_numbers<[1], [0], [0], [1], [0, 0, 1, 1], [], []>} : vector<8x32xf32>, vector<32x128xf32>, vector<8x128xf32> -> vector<8x128xf32>
    %655 = arith.addf %653, %654 : vector<8x128xf32>
    %656 = vector.extract_strided_slice %655 {offsets = [0, 0], sizes = [8, 64], strides = [1, 1]} : vector<8x128xf32> to vector<8x64xf32>
    %657 = arith.negf %656 : vector<8x64xf32>
    %658 = math.exp %657 : vector<8x64xf32>
    %cst_135 = arith.constant 1.000000e+00 : f32
    %659 = vector.broadcast %cst_135 : f32 to vector<8x64xf32>
    %660 = arith.addf %659, %658 : vector<8x64xf32>
    %661 = arith.divf %659, %660 : vector<8x64xf32>
    %662 = vector.extract_strided_slice %661 {offsets = [0, 0], sizes = [8, 32], strides = [1, 1]} : vector<8x64xf32> to vector<8x32xf32>
    %663 = vector.extract_strided_slice %661 {offsets = [0, 32], sizes = [8, 32], strides = [1, 1]} : vector<8x64xf32> to vector<8x32xf32>
    %664 = vector.extract_strided_slice %655 {offsets = [0, 64], sizes = [8, 32], strides = [1, 1]} : vector<8x128xf32> to vector<8x32xf32>
    %665 = math.tanh %664 : vector<8x32xf32>
    %666 = vector.extract_strided_slice %655 {offsets = [0, 96], sizes = [8, 32], strides = [1, 1]} : vector<8x128xf32> to vector<8x32xf32>
    %667 = arith.negf %666 : vector<8x32xf32>
    %668 = math.exp %667 : vector<8x32xf32>
    %cst_136 = arith.constant 1.000000e+00 : f32
    %669 = vector.broadcast %cst_136 : f32 to vector<8x32xf32>
    %670 = arith.addf %669, %668 : vector<8x32xf32>
    %671 = arith.divf %669, %670 : vector<8x32xf32>
    %672 = arith.mulf %663, %596 : vector<8x32xf32>
    %673 = arith.mulf %662, %665 : vector<8x32xf32>
    %674 = arith.addf %672, %673 : vector<8x32xf32>
    %675 = math.tanh %674 : vector<8x32xf32>
    %676 = arith.mulf %671, %675 : vector<8x32xf32>
    %677 = tpu.concatenate %676, %623 in 1 : vector<8x32xf32>, vector<8x32xf32> -> vector<8x64xf32>
    %cst_137 = arith.constant dense<0.000000e+00> : vector<8x128xf32>
    %678 = tpu.matmul %677, %5, %cst_137 {dimension_numbers = #tpu.dot_dimension_numbers<[1], [0], [0], [1], [0, 0, 1, 1], [], []>} : vector<8x64xf32>, vector<64x128xf32>, vector<8x128xf32> -> vector<8x128xf32>
    %679 = vector.broadcast %6 : vector<1x128xf32> to vector<8x128xf32>
    %680 = arith.addf %678, %679 : vector<8x128xf32>
    %681 = vector.extract_strided_slice %680 {offsets = [0, 0], sizes = [8, 64], strides = [1, 1]} : vector<8x128xf32> to vector<8x64xf32>
    %682 = arith.negf %681 : vector<8x64xf32>
    %683 = math.exp %682 : vector<8x64xf32>
    %cst_138 = arith.constant 1.000000e+00 : f32
    %684 = vector.broadcast %cst_138 : f32 to vector<8x64xf32>
    %685 = arith.addf %684, %683 : vector<8x64xf32>
    %686 = arith.divf %684, %685 : vector<8x64xf32>
    %687 = vector.extract_strided_slice %686 {offsets = [0, 0], sizes = [8, 32], strides = [1, 1]} : vector<8x64xf32> to vector<8x32xf32>
    %688 = vector.extract_strided_slice %686 {offsets = [0, 32], sizes = [8, 32], strides = [1, 1]} : vector<8x64xf32> to vector<8x32xf32>
    %689 = vector.extract_strided_slice %680 {offsets = [0, 64], sizes = [8, 32], strides = [1, 1]} : vector<8x128xf32> to vector<8x32xf32>
    %690 = math.tanh %689 : vector<8x32xf32>
    %691 = vector.extract_strided_slice %680 {offsets = [0, 96], sizes = [8, 32], strides = [1, 1]} : vector<8x128xf32> to vector<8x32xf32>
    %692 = arith.negf %691 : vector<8x32xf32>
    %693 = math.exp %692 : vector<8x32xf32>
    %cst_139 = arith.constant 1.000000e+00 : f32
    %694 = vector.broadcast %cst_139 : f32 to vector<8x32xf32>
    %695 = arith.addf %694, %693 : vector<8x32xf32>
    %696 = arith.divf %694, %695 : vector<8x32xf32>
    %697 = arith.mulf %688, %621 : vector<8x32xf32>
    %698 = arith.mulf %687, %690 : vector<8x32xf32>
    %699 = arith.addf %697, %698 : vector<8x32xf32>
    %700 = math.tanh %699 : vector<8x32xf32>
    %701 = arith.mulf %696, %700 : vector<8x32xf32>
    %cst_140 = arith.constant 0.000000e+00 : f32
    %702 = vector.broadcast %cst_140 : f32 to vector<8x32xf32>
    %703 = arith.maximumf %701, %702 : vector<8x32xf32>
    %cst_141 = arith.constant dense<0.000000e+00> : vector<8x2xf32>
    %704 = tpu.matmul %703, %3, %cst_141 {dimension_numbers = #tpu.dot_dimension_numbers<[1], [0], [0], [1], [0, 0, 1, 1], [], []>} : vector<8x32xf32>, vector<32x2xf32>, vector<8x2xf32> -> vector<8x2xf32>
    %705 = vector.broadcast %4 : vector<1x2xf32> to vector<8x2xf32>
    %706 = arith.addf %704, %705 : vector<8x2xf32>
    %707 = vector.extract_strided_slice %706 {offsets = [0, 0], sizes = [8, 1], strides = [1, 1]} : vector<8x2xf32> to vector<8x1xf32>
    %708 = vector.extract_strided_slice %706 {offsets = [0, 1], sizes = [8, 1], strides = [1, 1]} : vector<8x2xf32> to vector<8x1xf32>
    %cst_142 = arith.constant 0.000000e+00 : f32
    %709 = vector.broadcast %cst_142 : f32 to vector<8x1xf32>
    %710 = arith.maximumf %708, %709 : vector<8x1xf32>
    %711 = math.absf %708 : vector<8x1xf32>
    %cst_143 = arith.constant 0.000000e+00 : f32
    %712 = vector.broadcast %cst_143 : f32 to vector<8x1xf32>
    %713 = arith.subf %712, %711 : vector<8x1xf32>
    %714 = math.exp %713 : vector<8x1xf32>
    %cst_144 = arith.constant 1.000000e+00 : f32
    %715 = vector.broadcast %cst_144 : f32 to vector<8x1xf32>
    %716 = arith.addf %715, %714 : vector<8x1xf32>
    %717 = math.log %716 : vector<8x1xf32>
    %718 = arith.addf %710, %717 : vector<8x1xf32>
    %cst_145 = arith.constant 9.99999997E-7 : f32
    %719 = vector.broadcast %cst_145 : f32 to vector<8x1xf32>
    %720 = arith.addf %718, %719 : vector<8x1xf32>
    %c0_146 = arith.constant 0 : index
    %c10 = arith.constant 10 : index
    %721 = vector.load %arg13[%c0_146, %c10] : memref<8x12xf32, #tpu.memory_space<vmem>>, vector<8x1xf32>
    tpu.vector_store %arg13[%c0_146, %c10], %707 {strides = array<i32>} : memref<8x12xf32, #tpu.memory_space<vmem>>, vector<8x1xf32>,
    %c0_147 = arith.constant 0 : index
    %c10_148 = arith.constant 10 : index
    %722 = vector.load %arg14[%c0_147, %c10_148] : memref<8x12xf32, #tpu.memory_space<vmem>>, vector<8x1xf32>
    tpu.vector_store %arg14[%c0_147, %c10_148], %720 {strides = array<i32>} : memref<8x12xf32, #tpu.memory_space<vmem>>, vector<8x1xf32>,
    %c0_149 = arith.constant 0 : index
    %c10_150 = arith.constant 10 : index
    %723 = vector.load %arg3[%c0_149, %c10_150] : memref<8x12xf32, #tpu.memory_space<vmem>>, vector<8x1xf32>
    %724 = arith.mulf %720, %723 : vector<8x1xf32>
    %725 = arith.addf %707, %724 : vector<8x1xf32>
    %c0_151 = arith.constant 0 : index
    %c3 = arith.constant 3 : index
    %726 = vector.load %arg12[%c0_151, %c3] : memref<8x4xf32, #tpu.memory_space<vmem>>, vector<8x1xf32>
    tpu.vector_store %arg12[%c0_151, %c3], %725 {strides = array<i32>} : memref<8x4xf32, #tpu.memory_space<vmem>>, vector<8x1xf32>,
    %727 = vector.extract_strided_slice %12 {offsets = [88, 0], sizes = [8, 128], strides = [1, 1]} : vector<96x128xf32> to vector<8x128xf32>
    %728 = vector.broadcast %725 : vector<8x1xf32> to vector<8x128xf32>
    %729 = vector.broadcast %0 : vector<1x128xf32> to vector<8x128xf32>
    %730 = arith.mulf %728, %729 : vector<8x128xf32>
    %731 = arith.addf %727, %730 : vector<8x128xf32>
    %cst_152 = arith.constant dense<0.000000e+00> : vector<8x128xf32>
    %732 = tpu.matmul %676, %2, %cst_152 {dimension_numbers = #tpu.dot_dimension_numbers<[1], [0], [0], [1], [0, 0, 1, 1], [], []>} : vector<8x32xf32>, vector<32x128xf32>, vector<8x128xf32> -> vector<8x128xf32>
    %733 = arith.addf %731, %732 : vector<8x128xf32>
    %734 = vector.extract_strided_slice %733 {offsets = [0, 0], sizes = [8, 64], strides = [1, 1]} : vector<8x128xf32> to vector<8x64xf32>
    %735 = arith.negf %734 : vector<8x64xf32>
    %736 = math.exp %735 : vector<8x64xf32>
    %cst_153 = arith.constant 1.000000e+00 : f32
    %737 = vector.broadcast %cst_153 : f32 to vector<8x64xf32>
    %738 = arith.addf %737, %736 : vector<8x64xf32>
    %739 = arith.divf %737, %738 : vector<8x64xf32>
    %740 = vector.extract_strided_slice %739 {offsets = [0, 0], sizes = [8, 32], strides = [1, 1]} : vector<8x64xf32> to vector<8x32xf32>
    %741 = vector.extract_strided_slice %739 {offsets = [0, 32], sizes = [8, 32], strides = [1, 1]} : vector<8x64xf32> to vector<8x32xf32>
    %742 = vector.extract_strided_slice %733 {offsets = [0, 64], sizes = [8, 32], strides = [1, 1]} : vector<8x128xf32> to vector<8x32xf32>
    %743 = math.tanh %742 : vector<8x32xf32>
    %744 = vector.extract_strided_slice %733 {offsets = [0, 96], sizes = [8, 32], strides = [1, 1]} : vector<8x128xf32> to vector<8x32xf32>
    %745 = arith.negf %744 : vector<8x32xf32>
    %746 = math.exp %745 : vector<8x32xf32>
    %cst_154 = arith.constant 1.000000e+00 : f32
    %747 = vector.broadcast %cst_154 : f32 to vector<8x32xf32>
    %748 = arith.addf %747, %746 : vector<8x32xf32>
    %749 = arith.divf %747, %748 : vector<8x32xf32>
    %750 = arith.mulf %741, %674 : vector<8x32xf32>
    %751 = arith.mulf %740, %743 : vector<8x32xf32>
    %752 = arith.addf %750, %751 : vector<8x32xf32>
    %753 = math.tanh %752 : vector<8x32xf32>
    %754 = arith.mulf %749, %753 : vector<8x32xf32>
    %755 = tpu.concatenate %754, %701 in 1 : vector<8x32xf32>, vector<8x32xf32> -> vector<8x64xf32>
    %cst_155 = arith.constant dense<0.000000e+00> : vector<8x128xf32>
    %756 = tpu.matmul %755, %5, %cst_155 {dimension_numbers = #tpu.dot_dimension_numbers<[1], [0], [0], [1], [0, 0, 1, 1], [], []>} : vector<8x64xf32>, vector<64x128xf32>, vector<8x128xf32> -> vector<8x128xf32>
    %757 = vector.broadcast %6 : vector<1x128xf32> to vector<8x128xf32>
    %758 = arith.addf %756, %757 : vector<8x128xf32>
    %759 = vector.extract_strided_slice %758 {offsets = [0, 0], sizes = [8, 64], strides = [1, 1]} : vector<8x128xf32> to vector<8x64xf32>
    %760 = arith.negf %759 : vector<8x64xf32>
    %761 = math.exp %760 : vector<8x64xf32>
    %cst_156 = arith.constant 1.000000e+00 : f32
    %762 = vector.broadcast %cst_156 : f32 to vector<8x64xf32>
    %763 = arith.addf %762, %761 : vector<8x64xf32>
    %764 = arith.divf %762, %763 : vector<8x64xf32>
    %765 = vector.extract_strided_slice %764 {offsets = [0, 0], sizes = [8, 32], strides = [1, 1]} : vector<8x64xf32> to vector<8x32xf32>
    %766 = vector.extract_strided_slice %764 {offsets = [0, 32], sizes = [8, 32], strides = [1, 1]} : vector<8x64xf32> to vector<8x32xf32>
    %767 = vector.extract_strided_slice %758 {offsets = [0, 64], sizes = [8, 32], strides = [1, 1]} : vector<8x128xf32> to vector<8x32xf32>
    %768 = math.tanh %767 : vector<8x32xf32>
    %769 = vector.extract_strided_slice %758 {offsets = [0, 96], sizes = [8, 32], strides = [1, 1]} : vector<8x128xf32> to vector<8x32xf32>
    %770 = arith.negf %769 : vector<8x32xf32>
    %771 = math.exp %770 : vector<8x32xf32>
    %cst_157 = arith.constant 1.000000e+00 : f32
    %772 = vector.broadcast %cst_157 : f32 to vector<8x32xf32>
    %773 = arith.addf %772, %771 : vector<8x32xf32>
    %774 = arith.divf %772, %773 : vector<8x32xf32>
    %775 = arith.mulf %766, %699 : vector<8x32xf32>
    %776 = arith.mulf %765, %768 : vector<8x32xf32>
    %777 = arith.addf %775, %776 : vector<8x32xf32>
    %778 = math.tanh %777 : vector<8x32xf32>
    %779 = arith.mulf %774, %778 : vector<8x32xf32>
    %cst_158 = arith.constant 0.000000e+00 : f32
    %780 = vector.broadcast %cst_158 : f32 to vector<8x32xf32>
    %781 = arith.maximumf %779, %780 : vector<8x32xf32>
    %cst_159 = arith.constant dense<0.000000e+00> : vector<8x2xf32>
    %782 = tpu.matmul %781, %3, %cst_159 {dimension_numbers = #tpu.dot_dimension_numbers<[1], [0], [0], [1], [0, 0, 1, 1], [], []>} : vector<8x32xf32>, vector<32x2xf32>, vector<8x2xf32> -> vector<8x2xf32>
    %783 = vector.broadcast %4 : vector<1x2xf32> to vector<8x2xf32>
    %784 = arith.addf %782, %783 : vector<8x2xf32>
    %785 = vector.extract_strided_slice %784 {offsets = [0, 0], sizes = [8, 1], strides = [1, 1]} : vector<8x2xf32> to vector<8x1xf32>
    %786 = vector.extract_strided_slice %784 {offsets = [0, 1], sizes = [8, 1], strides = [1, 1]} : vector<8x2xf32> to vector<8x1xf32>
    %cst_160 = arith.constant 0.000000e+00 : f32
    %787 = vector.broadcast %cst_160 : f32 to vector<8x1xf32>
    %788 = arith.maximumf %786, %787 : vector<8x1xf32>
    %789 = math.absf %786 : vector<8x1xf32>
    %cst_161 = arith.constant 0.000000e+00 : f32
    %790 = vector.broadcast %cst_161 : f32 to vector<8x1xf32>
    %791 = arith.subf %790, %789 : vector<8x1xf32>
    %792 = math.exp %791 : vector<8x1xf32>
    %cst_162 = arith.constant 1.000000e+00 : f32
    %793 = vector.broadcast %cst_162 : f32 to vector<8x1xf32>
    %794 = arith.addf %793, %792 : vector<8x1xf32>
    %795 = math.log %794 : vector<8x1xf32>
    %796 = arith.addf %788, %795 : vector<8x1xf32>
    %cst_163 = arith.constant 9.99999997E-7 : f32
    %797 = vector.broadcast %cst_163 : f32 to vector<8x1xf32>
    %798 = arith.addf %796, %797 : vector<8x1xf32>
    %c0_164 = arith.constant 0 : index
    %c11 = arith.constant 11 : index
    %799 = vector.load %arg13[%c0_164, %c11] : memref<8x12xf32, #tpu.memory_space<vmem>>, vector<8x1xf32>
    tpu.vector_store %arg13[%c0_164, %c11], %785 {strides = array<i32>} : memref<8x12xf32, #tpu.memory_space<vmem>>, vector<8x1xf32>,
    %c0_165 = arith.constant 0 : index
    %c11_166 = arith.constant 11 : index
    %800 = vector.load %arg14[%c0_165, %c11_166] : memref<8x12xf32, #tpu.memory_space<vmem>>, vector<8x1xf32>
    tpu.vector_store %arg14[%c0_165, %c11_166], %798 {strides = array<i32>} : memref<8x12xf32, #tpu.memory_space<vmem>>, vector<8x1xf32>,
    %c0_167 = arith.constant 0 : index
    %c0_168 = arith.constant 0 : index
    %801 = vector.load %arg15[%c0_167, %c0_168] : memref<56x32xf32, #tpu.memory_space<vmem>>, vector<56x32xf32>
    %cst_169 = arith.constant dense<0.000000e+00> : vector<56x2xf32>
    %802 = tpu.matmul %801, %3, %cst_169 {dimension_numbers = #tpu.dot_dimension_numbers<[1], [0], [0], [1], [0, 0, 1, 1], [], []>} : vector<56x32xf32>, vector<32x2xf32>, vector<56x2xf32> -> vector<56x2xf32>
    %803 = vector.broadcast %4 : vector<1x2xf32> to vector<56x2xf32>
    %804 = arith.addf %802, %803 : vector<56x2xf32>
    %805 = vector.extract_strided_slice %804 {offsets = [0, 0], sizes = [56, 1], strides = [1, 1]} : vector<56x2xf32> to vector<56x1xf32>
    %806 = vector.extract_strided_slice %804 {offsets = [0, 1], sizes = [56, 1], strides = [1, 1]} : vector<56x2xf32> to vector<56x1xf32>
    %cst_170 = arith.constant 0.000000e+00 : f32
    %807 = vector.broadcast %cst_170 : f32 to vector<56x1xf32>
    %808 = arith.maximumf %806, %807 : vector<56x1xf32>
    %809 = math.absf %806 : vector<56x1xf32>
    %cst_171 = arith.constant 0.000000e+00 : f32
    %810 = vector.broadcast %cst_171 : f32 to vector<56x1xf32>
    %811 = arith.subf %810, %809 : vector<56x1xf32>
    %812 = math.exp %811 : vector<56x1xf32>
    %cst_172 = arith.constant 1.000000e+00 : f32
    %813 = vector.broadcast %cst_172 : f32 to vector<56x1xf32>
    %814 = arith.addf %813, %812 : vector<56x1xf32>
    %815 = math.log %814 : vector<56x1xf32>
    %816 = arith.addf %808, %815 : vector<56x1xf32>
    %cst_173 = arith.constant 9.99999997E-7 : f32
    %817 = vector.broadcast %cst_173 : f32 to vector<56x1xf32>
    %818 = arith.addf %816, %817 : vector<56x1xf32>
    %819 = vector.extract_strided_slice %805 {offsets = [0, 0], sizes = [8, 1], strides = [1, 1]} : vector<56x1xf32> to vector<8x1xf32>
    %c0_174 = arith.constant 0 : index
    %c0_175 = arith.constant 0 : index
    %820 = vector.load %arg13[%c0_174, %c0_175] : memref<8x12xf32, #tpu.memory_space<vmem>>, vector<8x1xf32>
    tpu.vector_store %arg13[%c0_174, %c0_175], %819 {strides = array<i32>} : memref<8x12xf32, #tpu.memory_space<vmem>>, vector<8x1xf32>,
    %821 = vector.extract_strided_slice %818 {offsets = [0, 0], sizes = [8, 1], strides = [1, 1]} : vector<56x1xf32> to vector<8x1xf32>
    %c0_176 = arith.constant 0 : index
    %c0_177 = arith.constant 0 : index
    %822 = vector.load %arg14[%c0_176, %c0_177] : memref<8x12xf32, #tpu.memory_space<vmem>>, vector<8x1xf32>
    tpu.vector_store %arg14[%c0_176, %c0_177], %821 {strides = array<i32>} : memref<8x12xf32, #tpu.memory_space<vmem>>, vector<8x1xf32>,
    %823 = vector.extract_strided_slice %805 {offsets = [8, 0], sizes = [8, 1], strides = [1, 1]} : vector<56x1xf32> to vector<8x1xf32>
    %c0_178 = arith.constant 0 : index
    %c1_179 = arith.constant 1 : index
    %824 = vector.load %arg13[%c0_178, %c1_179] : memref<8x12xf32, #tpu.memory_space<vmem>>, vector<8x1xf32>
    tpu.vector_store %arg13[%c0_178, %c1_179], %823 {strides = array<i32>} : memref<8x12xf32, #tpu.memory_space<vmem>>, vector<8x1xf32>,
    %825 = vector.extract_strided_slice %818 {offsets = [8, 0], sizes = [8, 1], strides = [1, 1]} : vector<56x1xf32> to vector<8x1xf32>
    %c0_180 = arith.constant 0 : index
    %c1_181 = arith.constant 1 : index
    %826 = vector.load %arg14[%c0_180, %c1_181] : memref<8x12xf32, #tpu.memory_space<vmem>>, vector<8x1xf32>
    tpu.vector_store %arg14[%c0_180, %c1_181], %825 {strides = array<i32>} : memref<8x12xf32, #tpu.memory_space<vmem>>, vector<8x1xf32>,
    %827 = vector.extract_strided_slice %805 {offsets = [16, 0], sizes = [8, 1], strides = [1, 1]} : vector<56x1xf32> to vector<8x1xf32>
    %c0_182 = arith.constant 0 : index
    %c2_183 = arith.constant 2 : index
    %828 = vector.load %arg13[%c0_182, %c2_183] : memref<8x12xf32, #tpu.memory_space<vmem>>, vector<8x1xf32>
    tpu.vector_store %arg13[%c0_182, %c2_183], %827 {strides = array<i32>} : memref<8x12xf32, #tpu.memory_space<vmem>>, vector<8x1xf32>,
    %829 = vector.extract_strided_slice %818 {offsets = [16, 0], sizes = [8, 1], strides = [1, 1]} : vector<56x1xf32> to vector<8x1xf32>
    %c0_184 = arith.constant 0 : index
    %c2_185 = arith.constant 2 : index
    %830 = vector.load %arg14[%c0_184, %c2_185] : memref<8x12xf32, #tpu.memory_space<vmem>>, vector<8x1xf32>
    tpu.vector_store %arg14[%c0_184, %c2_185], %829 {strides = array<i32>} : memref<8x12xf32, #tpu.memory_space<vmem>>, vector<8x1xf32>,
    %831 = vector.extract_strided_slice %805 {offsets = [24, 0], sizes = [8, 1], strides = [1, 1]} : vector<56x1xf32> to vector<8x1xf32>
    %c0_186 = arith.constant 0 : index
    %c3_187 = arith.constant 3 : index
    %832 = vector.load %arg13[%c0_186, %c3_187] : memref<8x12xf32, #tpu.memory_space<vmem>>, vector<8x1xf32>
    tpu.vector_store %arg13[%c0_186, %c3_187], %831 {strides = array<i32>} : memref<8x12xf32, #tpu.memory_space<vmem>>, vector<8x1xf32>,
    %833 = vector.extract_strided_slice %818 {offsets = [24, 0], sizes = [8, 1], strides = [1, 1]} : vector<56x1xf32> to vector<8x1xf32>
    %c0_188 = arith.constant 0 : index
    %c3_189 = arith.constant 3 : index
    %834 = vector.load %arg14[%c0_188, %c3_189] : memref<8x12xf32, #tpu.memory_space<vmem>>, vector<8x1xf32>
    tpu.vector_store %arg14[%c0_188, %c3_189], %833 {strides = array<i32>} : memref<8x12xf32, #tpu.memory_space<vmem>>, vector<8x1xf32>,
    %835 = vector.extract_strided_slice %805 {offsets = [32, 0], sizes = [8, 1], strides = [1, 1]} : vector<56x1xf32> to vector<8x1xf32>
    %c0_190 = arith.constant 0 : index
    %c4 = arith.constant 4 : index
    %836 = vector.load %arg13[%c0_190, %c4] : memref<8x12xf32, #tpu.memory_space<vmem>>, vector<8x1xf32>
    tpu.vector_store %arg13[%c0_190, %c4], %835 {strides = array<i32>} : memref<8x12xf32, #tpu.memory_space<vmem>>, vector<8x1xf32>,
    %837 = vector.extract_strided_slice %818 {offsets = [32, 0], sizes = [8, 1], strides = [1, 1]} : vector<56x1xf32> to vector<8x1xf32>
    %c0_191 = arith.constant 0 : index
    %c4_192 = arith.constant 4 : index
    %838 = vector.load %arg14[%c0_191, %c4_192] : memref<8x12xf32, #tpu.memory_space<vmem>>, vector<8x1xf32>
    tpu.vector_store %arg14[%c0_191, %c4_192], %837 {strides = array<i32>} : memref<8x12xf32, #tpu.memory_space<vmem>>, vector<8x1xf32>,
    %839 = vector.extract_strided_slice %805 {offsets = [40, 0], sizes = [8, 1], strides = [1, 1]} : vector<56x1xf32> to vector<8x1xf32>
    %c0_193 = arith.constant 0 : index
    %c5 = arith.constant 5 : index
    %840 = vector.load %arg13[%c0_193, %c5] : memref<8x12xf32, #tpu.memory_space<vmem>>, vector<8x1xf32>
    tpu.vector_store %arg13[%c0_193, %c5], %839 {strides = array<i32>} : memref<8x12xf32, #tpu.memory_space<vmem>>, vector<8x1xf32>,
    %841 = vector.extract_strided_slice %818 {offsets = [40, 0], sizes = [8, 1], strides = [1, 1]} : vector<56x1xf32> to vector<8x1xf32>
    %c0_194 = arith.constant 0 : index
    %c5_195 = arith.constant 5 : index
    %842 = vector.load %arg14[%c0_194, %c5_195] : memref<8x12xf32, #tpu.memory_space<vmem>>, vector<8x1xf32>
    tpu.vector_store %arg14[%c0_194, %c5_195], %841 {strides = array<i32>} : memref<8x12xf32, #tpu.memory_space<vmem>>, vector<8x1xf32>,
    %843 = vector.extract_strided_slice %805 {offsets = [48, 0], sizes = [8, 1], strides = [1, 1]} : vector<56x1xf32> to vector<8x1xf32>
    %c0_196 = arith.constant 0 : index
    %c6 = arith.constant 6 : index
    %844 = vector.load %arg13[%c0_196, %c6] : memref<8x12xf32, #tpu.memory_space<vmem>>, vector<8x1xf32>
    tpu.vector_store %arg13[%c0_196, %c6], %843 {strides = array<i32>} : memref<8x12xf32, #tpu.memory_space<vmem>>, vector<8x1xf32>,
    %845 = vector.extract_strided_slice %818 {offsets = [48, 0], sizes = [8, 1], strides = [1, 1]} : vector<56x1xf32> to vector<8x1xf32>
    %c0_197 = arith.constant 0 : index
    %c6_198 = arith.constant 6 : index
    %846 = vector.load %arg14[%c0_197, %c6_198] : memref<8x12xf32, #tpu.memory_space<vmem>>, vector<8x1xf32>
    tpu.vector_store %arg14[%c0_197, %c6_198], %845 {strides = array<i32>} : memref<8x12xf32, #tpu.memory_space<vmem>>, vector<8x1xf32>,
    return
  }
  func.func @transform_0(%arg0: i32) -> (i32, i32, i32) {
    %c0_i32 = arith.constant 0 : i32
    %c0_i32_0 = arith.constant 0 : i32
    %c0_i32_1 = arith.constant 0 : i32
    return %c0_i32, %arg0, %c0_i32_0 : i32, i32, i32
  }
  func.func @transform_1(%arg0: i32) -> (i32, i32) {
    %c0_i32 = arith.constant 0 : i32
    %c0_i32_0 = arith.constant 0 : i32
    return %arg0, %c0_i32 : i32, i32
  }
  func.func @transform_2(%arg0: i32) -> (i32, i32) {
    %c0_i32 = arith.constant 0 : i32
    %c0_i32_0 = arith.constant 0 : i32
    return %arg0, %c0_i32 : i32, i32
  }
  func.func @transform_3(%arg0: i32) -> (i32, i32) {
    %c0_i32 = arith.constant 0 : i32
    %c0_i32_0 = arith.constant 0 : i32
    %c0_i32_1 = arith.constant 0 : i32
    return %c0_i32, %c0_i32_0 : i32, i32
  }
  func.func @transform_4(%arg0: i32) -> (i32, i32) {
    %c0_i32 = arith.constant 0 : i32
    %c0_i32_0 = arith.constant 0 : i32
    %c0_i32_1 = arith.constant 0 : i32
    return %c0_i32, %c0_i32_0 : i32, i32
  }
  func.func @transform_5(%arg0: i32) -> (i32, i32) {
    %c0_i32 = arith.constant 0 : i32
    %c0_i32_0 = arith.constant 0 : i32
    %c0_i32_1 = arith.constant 0 : i32
    return %c0_i32, %c0_i32_0 : i32, i32
  }
  func.func @transform_6(%arg0: i32) -> (i32, i32) {
    %c0_i32 = arith.constant 0 : i32
    %c0_i32_0 = arith.constant 0 : i32
    %c0_i32_1 = arith.constant 0 : i32
    return %c0_i32, %c0_i32_0 : i32, i32
  }
  func.func @transform_7(%arg0: i32) -> (i32, i32) {
    %c0_i32 = arith.constant 0 : i32
    %c0_i32_0 = arith.constant 0 : i32
    %c0_i32_1 = arith.constant 0 : i32
    return %c0_i32, %c0_i32_0 : i32, i32
  }
  func.func @transform_8(%arg0: i32) -> (i32, i32) {
    %c0_i32 = arith.constant 0 : i32
    %c0_i32_0 = arith.constant 0 : i32
    %c0_i32_1 = arith.constant 0 : i32
    return %c0_i32, %c0_i32_0 : i32, i32
  }
  func.func @transform_9(%arg0: i32) -> (i32, i32) {
    %c0_i32 = arith.constant 0 : i32
    %c0_i32_0 = arith.constant 0 : i32
    %c0_i32_1 = arith.constant 0 : i32
    return %c0_i32, %c0_i32_0 : i32, i32
  }
  func.func @transform_10(%arg0: i32) -> (i32, i32) {
    %c0_i32 = arith.constant 0 : i32
    %c0_i32_0 = arith.constant 0 : i32
    %c0_i32_1 = arith.constant 0 : i32
    return %c0_i32, %c0_i32_0 : i32, i32
  }
  func.func @transform_11(%arg0: i32) -> (i32, i32) {
    %c0_i32 = arith.constant 0 : i32
    %c0_i32_0 = arith.constant 0 : i32
    return %arg0, %c0_i32 : i32, i32
  }
  func.func @transform_12(%arg0: i32) -> (i32, i32) {
    %c0_i32 = arith.constant 0 : i32
    %c0_i32_0 = arith.constant 0 : i32
    return %arg0, %c0_i32 : i32, i32
  }
  func.func @transform_13(%arg0: i32) -> (i32, i32) {
    %c0_i32 = arith.constant 0 : i32
    %c0_i32_0 = arith.constant 0 : i32
    return %arg0, %c0_i32 : i32, i32
  }
}

</mosaic_0001>

<llo_original>
// kernel: tpu_custom_call.1
$region0: #{tpu_custom_call.1}
  #allocation0 [shape = 'u32[]', space=smem, size = 0x4, offset = 0x4, fixed_abs, tag = 'smem constant byte address 0x4 - core index']
  #allocation1 [shape = 'u32[144,128]{1,0:T(1,128)}', space=vmem, size = 0x12000, scoped, tag = 'internal scratch']
  #allocation2 [shape = 'f32[56,32]{1,0:T(8,128)}', space=vmem, size = 0x7000, scoped, tag = 'scratch operand']
  %s0 = inlined_call_operand.vmem [shape: f32[12,8,4], index: 0, kind: input, shape index: {}]
  %s1 = inlined_call_operand.vmem [shape: f32[8,8], index: 1, kind: input, shape index: {}]
  %s2 = inlined_call_operand.vmem [shape: f32[8,12], index: 2, kind: input, shape index: {}]
  %s3 = inlined_call_operand.vmem [shape: f32[1,128], index: 3, kind: input, shape index: {}]
  %s4 = inlined_call_operand.vmem [shape: f32[1,128], index: 4, kind: input, shape index: {}]
  %s5 = inlined_call_operand.vmem [shape: f32[4,128], index: 5, kind: input, shape index: {}]
  %s6 = inlined_call_operand.vmem [shape: f32[32,128], index: 6, kind: input, shape index: {}]
  %s7 = inlined_call_operand.vmem [shape: f32[64,128], index: 7, kind: input, shape index: {}]
  %s8 = inlined_call_operand.vmem [shape: f32[1,128], index: 8, kind: input, shape index: {}]
  %s9 = inlined_call_operand.vmem [shape: f32[32,2], index: 9, kind: input, shape index: {}]
  %s10 = inlined_call_operand.vmem [shape: f32[1,2], index: 10, kind: input, shape index: {}]
  %s11 = inlined_call_operand.vmem [shape: f32[8,4], index: 11, kind: output, shape index: {0}]
  %s12 = inlined_call_operand.hbm [shape: f32[8,12], index: 12, kind: output, shape index: {1}]
  %s13 = inlined_call_operand.hbm [shape: f32[8,12], index: 13, kind: output, shape index: {2}]
  %14 = xla_tuple %s11, %s12, %s13
  %s15 = sld [smem:[#allocation0]]
  $region70: #{tpu_custom_call.1} parent=0
    _
  %s17 = ssub.s32 1, %s15
  %s18 = scalar_select 0, %s17, %s15
  $region1: #{tpu_custom_call.1} parent=0
    #allocation3 [shape = 'u8[4096]{0}', space=vmem, size = 0x1000, scoped, tag = 'output window, operand 1, single buffered']
    #allocation4 [shape = 's32[1]{0}', space=sflag, size = 0x4, scoped, tag = 'scoped memory for tpu_custom_call.1']
    #allocation5 [shape = 'u8[4096]{0}', space=vmem, size = 0x1000, scoped, tag = 'output window, operand 2, single buffered']
    #allocation6 [shape = 's32[1]{0}', space=sflag, size = 0x4, scoped, tag = 'scoped memory for tpu_custom_call.1']
    %19 = vsyncpa [#allocation4], 0
    %20 = vsyncpa [#allocation6], 0
    // Predicated region
    $region2: #{tpu_custom_call.1} parent=1 // pred_check
      _
    $region3: #{tpu_custom_call.1} parent=1 // pred_check_branch
      %22 = sbr.rel (0) target = $region5
    $region4: #{tpu_custom_call.1} parent=1 // pred_region
      _
    $region5: #{tpu_custom_call.1} parent=1 // pred_fallthru
      _
    // Predicated region
    $region6: #{tpu_custom_call.1} parent=1 // pred_check
      _
    $region7: #{tpu_custom_call.1} parent=1 // pred_check_branch
      %24 = sbr.rel (0) target = $region9
    $region8: #{tpu_custom_call.1} parent=1 // pred_region
      _
    $region9: #{tpu_custom_call.1} parent=1 // pred_fallthru
      _
    // Predicated region
    $region10: #{tpu_custom_call.1} parent=1 // pred_check
      _
    $region11: #{tpu_custom_call.1} parent=1 // pred_check_branch
      %26 = sbr.rel (0) target = $region13
    $region12: #{tpu_custom_call.1} parent=1 // pred_region
      _
    $region13: #{tpu_custom_call.1} parent=1 // pred_fallthru
      _
    // Predicated region
    $region14: #{tpu_custom_call.1} parent=1 // pred_check
      _
    $region15: #{tpu_custom_call.1} parent=1 // pred_check_branch
      %28 = sbr.rel (0) target = $region17
    $region16: #{tpu_custom_call.1} parent=1 // pred_region
      _
    $region17: #{tpu_custom_call.1} parent=1 // pred_fallthru
      _
    // Predicated region
    $region18: #{tpu_custom_call.1} parent=1 // pred_check
      _
    $region19: #{tpu_custom_call.1} parent=1 // pred_check_branch
      %30 = sbr.rel (0) target = $region21
    $region20: #{tpu_custom_call.1} parent=1 // pred_region
      _
    $region21: #{tpu_custom_call.1} parent=1 // pred_fallthru
      _
    // Predicated region
    $region22: #{tpu_custom_call.1} parent=1 // pred_check
      _
    $region23: #{tpu_custom_call.1} parent=1 // pred_check_branch
      %32 = sbr.rel (0) target = $region25
    $region24: #{tpu_custom_call.1} parent=1 // pred_region
      _
    $region25: #{tpu_custom_call.1} parent=1 // pred_fallthru
      _
    // Predicated region
    $region26: #{tpu_custom_call.1} parent=1 // pred_check
      _
    $region27: #{tpu_custom_call.1} parent=1 // pred_check_branch
      %34 = sbr.rel (0) target = $region29
    $region28: #{tpu_custom_call.1} parent=1 // pred_region
      _
    $region29: #{tpu_custom_call.1} parent=1 // pred_fallthru
      _
    // Predicated region
    $region30: #{tpu_custom_call.1} parent=1 // pred_check
      _
    $region31: #{tpu_custom_call.1} parent=1 // pred_check_branch
      %36 = sbr.rel (0) target = $region33
    $region32: #{tpu_custom_call.1} parent=1 // pred_region
      _
    $region33: #{tpu_custom_call.1} parent=1 // pred_fallthru
      _
    // Predicated region
    $region34: #{tpu_custom_call.1} parent=1 // pred_check
      _
    $region35: #{tpu_custom_call.1} parent=1 // pred_check_branch
      %38 = sbr.rel (0) target = $region37
    $region36: #{tpu_custom_call.1} parent=1 // pred_region
      _
    $region37: #{tpu_custom_call.1} parent=1 // pred_fallthru
      _
    // Predicated region
    $region38: #{tpu_custom_call.1} parent=1 // pred_check
      _
    $region39: #{tpu_custom_call.1} parent=1 // pred_check_branch
      %40 = sbr.rel (0) target = $region41
    $region40: #{tpu_custom_call.1} parent=1 // pred_region
      _
    $region41: #{tpu_custom_call.1} parent=1 // pred_fallthru
      _
    // Predicated region
    $region42: #{tpu_custom_call.1} parent=1 // pred_check
      _
    $region43: #{tpu_custom_call.1} parent=1 // pred_check_branch
      %42 = sbr.rel (0) target = $region45
    $region44: #{tpu_custom_call.1} parent=1 // pred_region
      _
    $region45: #{tpu_custom_call.1} parent=1 // pred_fallthru
      _
    %v43 = vld [vmem:[%s3] sm:$0x1]
    %v44 = vld [vmem:[%s4] sm:$0x1]
    %v45 = vld [vmem:[%s6] sm:$0xff]
    %v46 = vld [vmem:[%s6 + $0x8] sm:$0xff]
    %v47 = vld [vmem:[%s6 + $0x10] sm:$0xff]
    %v48 = vld [vmem:[%s6 + $0x18] sm:$0xff]
    %v49 = vld [vmem:[%s9] sm:$0xff]
    %v50 = vld [vmem:[%s9 + $0x8] sm:$0xff]
    %v51 = vld [vmem:[%s9 + $0x10] sm:$0xff]
    %v52 = vld [vmem:[%s9 + $0x18] sm:$0xff]
    %v53 = vld [vmem:[%s10] sm:$0x1]
    %v54 = vld [vmem:[%s7] sm:$0xff]
    %v55 = vld [vmem:[%s7 + $0x8] sm:$0xff]
    %v56 = vld [vmem:[%s7 + $0x10] sm:$0xff]
    %v57 = vld [vmem:[%s7 + $0x18] sm:$0xff]
    %v58 = vld [vmem:[%s7 + $0x20] sm:$0xff]
    %v59 = vld [vmem:[%s7 + $0x28] sm:$0xff]
    %v60 = vld [vmem:[%s7 + $0x30] sm:$0xff]
    %v61 = vld [vmem:[%s7 + $0x38] sm:$0xff]
    %v62 = vld [vmem:[%s8] sm:$0x1]
    %v63 = vld [vmem:[%s0] sm:$0xff]
    %v64 = vld [vmem:[%s0 + $0x8] sm:$0xff]
    %v65 = vld [vmem:[%s0 + $0x10] sm:$0xff]
    %v66 = vld [vmem:[%s0 + $0x18] sm:$0xff]
    %v67 = vld [vmem:[%s0 + $0x20] sm:$0xff]
    %v68 = vld [vmem:[%s0 + $0x28] sm:$0xff]
    %v69 = vld [vmem:[%s0 + $0x30] sm:$0xff]
    %v70 = vld [vmem:[%s0 + $0x38] sm:$0xff]
    %v71 = vld [vmem:[%s0 + $0x40] sm:$0xff]
    %v72 = vld [vmem:[%s0 + $0x48] sm:$0xff]
    %v73 = vld [vmem:[%s0 + $0x50] sm:$0xff]
    %v74 = vld [vmem:[%s0 + $0x58] sm:$0xff]
    %v75 = vld [vmem:[%s5] sm:$0xf]
    %v77 = vlaneseq
    %v78 = vshrl.u32 %v77, 7
    %v79 = vsub.s32 0, %v78
    %v80 = vrot.slane %v44, %v79
    %vm82 = vcmask 31744
    %v84 = vsel %vm82, %v63, 0
    %v87 = vsel %vm82, %v64, 0
    %v90 = vsel %vm82, %v65, 0
    %v93 = vsel %vm82, %v66, 0
    %v96 = vsel %vm82, %v67, 0
    %v99 = vsel %vm82, %v68, 0
    %v102 = vsel %vm82, %v69, 0
    %v105 = vsel %vm82, %v70, 0
    %v108 = vsel %vm82, %v71, 0
    %v111 = vsel %vm82, %v72, 0
    %v114 = vsel %vm82, %v73, 0
    %v117 = vsel %vm82, %v74, 0
    %vm119 = vcmask 1043456
    %v121 = vsel %vm119, %v75, 0
    %123 = vmatprep.subr.mxu0 0.0
    %124 = vmatpush1.msra.mxu0 %v121
    %125 = vmatprep.subr.mxu0 0.0
    %126 = vmatpush1.msra.mxu0 0.0
    %127 = vmatprep.subr.mxu0 0.0
    %128 = vmatpush1.msra.mxu0 0.0
    %129 = vmatprep.subr.mxu0 0.0
    %130 = vmatpush1.msra.mxu0 0.0
    %131 = vmatprep.subr.mxu0 0.0
    %132 = vmatpush1.msra.mxu0 0.0
    %133 = vmatprep.subr.mxu0 0.0
    %134 = vmatpush1.msra.mxu0 0.0
    %135 = vmatprep.subr.mxu0 0.0
    %136 = vmatpush1.msra.mxu0 0.0
    %137 = vmatprep.subr.mxu0 0.0
    %138 = vmatpush1.msra.mxu0 0.0
    %139 = vmatprep.subr.mxu0 0.0
    %140 = vmatpush1.msra.mxu0 0.0
    %141 = vmatprep.subr.mxu0 0.0
    %142 = vmatpush1.msra.mxu0 0.0
    %143 = vmatprep.subr.mxu0 0.0
    %144 = vmatpush1.msra.mxu0 0.0
    %145 = vmatprep.subr.mxu0 0.0
    %146 = vmatpush1.msra.mxu0 0.0
    %147 = vmatprep.subr.mxu0 0.0
    %148 = vmatpush1.msra.mxu0 0.0
    %149 = vmatprep.subr.mxu0 0.0
    %150 = vmatpush1.msra.mxu0 0.0
    %151 = vmatprep.subr.mxu0 0.0
    %152 = vmatpush1.msra.mxu0 0.0
    %153 = vmatprep.subr.mxu0 0.0
    %154 = vmatpush1.msra.mxu0 0.0
    %155 = vmatprep.subr.mxu0 0.0
    %156 = vmatpush1.msra.mxu0 0.0
    %157 = vmatprep.subr.mxu0 0.0
    %158 = vmatpush1.msra.mxu0 0.0
    %159 = vmatprep.subr.mxu0 0.0
    %160 = vmatpush1.msra.mxu0 0.0
    %161 = vmatprep.subr.mxu0 0.0
    %162 = vmatpush1.msra.mxu0 0.0
    %163 = vmatprep.subr.mxu0 0.0
    %164 = vmatpush1.msra.mxu0 0.0
    %165 = vmatprep.subr.mxu0 0.0
    %166 = vmatpush1.msra.mxu0 0.0
    %167 = vmatprep.subr.mxu0 0.0
    %168 = vmatpush1.msra.mxu0 0.0
    %169 = vmatprep.subr.mxu0 0.0
    %170 = vmatpush1.msra.mxu0 0.0
    %171 = vmatprep.subr.mxu0 0.0
    %172 = vmatpush1.msra.mxu0 0.0
    %173 = vmatprep.subr.mxu0 0.0
    %174 = vmatpush1.msra.mxu0 0.0
    %175 = vmatprep.subr.mxu0 0.0
    %176 = vmatpush1.msra.mxu0 0.0
    %177 = vmatprep.subr.mxu0 0.0
    %178 = vmatpush1.msra.mxu0 0.0
    %179 = vmatprep.subr.mxu0 0.0
    %180 = vmatpush1.msra.mxu0 0.0
    %181 = vmatprep.subr.mxu0 0.0
    %182 = vmatpush1.msra.mxu0 0.0
    %183 = vmatprep.subr.mxu0 0.0
    %184 = vmatpush1.msra.mxu0 0.0
    %185 = vmatprep.subr.mxu0 0.0
    %186 = vmatpush1.msra.mxu0 0.0
    %187 = vmatprep.mubr.f32.mxu0 0.0
    %188 = vmatmul.mubr.f32.gmra.mrb[0].mxu0 %v84
    %v189 = vpop.f32.mrb[0].mxu0
    %v190 = vadd.f32 %v80, %v189
    %v191 = vpop.f32.mrb[0].mxu0
    %192 = vmatprep.mubr.f32.mxu0 0.0
    %193 = vmatmul.mubr.f32.gmra.mrb[0].mxu0 %v87
    %v194 = vpop.f32.mrb[0].mxu0
    %v195 = vadd.f32 %v80, %v194
    %v196 = vpop.f32.mrb[0].mxu0
    %197 = vmatprep.mubr.f32.mxu0 0.0
    %198 = vmatmul.mubr.f32.gmra.mrb[0].mxu0 %v90
    %v199 = vpop.f32.mrb[0].mxu0
    %v200 = vadd.f32 %v80, %v199
    %v201 = vpop.f32.mrb[0].mxu0
    %202 = vmatprep.mubr.f32.mxu0 0.0
    %203 = vmatmul.mubr.f32.gmra.mrb[0].mxu0 %v93
    %v204 = vpop.f32.mrb[0].mxu0
    %v205 = vadd.f32 %v80, %v204
    %v206 = vpop.f32.mrb[0].mxu0
    %207 = vmatprep.mubr.f32.mxu0 0.0
    %208 = vmatmul.mubr.f32.gmra.mrb[0].mxu0 %v96
    %v209 = vpop.f32.mrb[0].mxu0
    %v210 = vadd.f32 %v80, %v209
    %v211 = vpop.f32.mrb[0].mxu0
    %212 = vmatprep.mubr.f32.mxu0 0.0
    %213 = vmatmul.mubr.f32.gmra.mrb[0].mxu0 %v99
    %v214 = vpop.f32.mrb[0].mxu0
    %v215 = vadd.f32 %v80, %v214
    %v216 = vpop.f32.mrb[0].mxu0
    %217 = vmatprep.mubr.f32.mxu0 0.0
    %218 = vmatmul.mubr.f32.gmra.mrb[0].mxu0 %v102
    %v219 = vpop.f32.mrb[0].mxu0
    %v220 = vadd.f32 %v80, %v219
    %v221 = vpop.f32.mrb[0].mxu0
    %222 = vmatprep.mubr.f32.mxu0 0.0
    %223 = vmatmul.mubr.f32.gmra.mrb[0].mxu0 %v105
    %v224 = vpop.f32.mrb[0].mxu0
    %v225 = vadd.f32 %v80, %v224
    %v226 = vpop.f32.mrb[0].mxu0
    %227 = vmatprep.mubr.f32.mxu0 0.0
    %228 = vmatmul.mubr.f32.gmra.mrb[0].mxu0 %v108
    %v229 = vpop.f32.mrb[0].mxu0
    %v230 = vadd.f32 %v80, %v229
    %v231 = vpop.f32.mrb[0].mxu0
    %232 = vmatprep.mubr.f32.mxu0 0.0
    %233 = vmatmul.mubr.f32.gmra.mrb[0].mxu0 %v111
    %v234 = vpop.f32.mrb[0].mxu0
    %v235 = vadd.f32 %v80, %v234
    %v236 = vpop.f32.mrb[0].mxu0
    %237 = vmatprep.mubr.f32.mxu0 0.0
    %238 = vmatmul.mubr.f32.gmra.mrb[0].mxu0 %v114
    %v239 = vpop.f32.mrb[0].mxu0
    %v240 = vadd.f32 %v80, %v239
    %v241 = vpop.f32.mrb[0].mxu0
    %242 = vmatprep.mubr.f32.mxu0 0.0
    %243 = vmatmul.mubr.f32.gmra.mrb[0].mxu0 %v117
    %v244 = vpop.f32.mrb[0].mxu0
    %v245 = vadd.f32 %v80, %v244
    %v246 = vpop.f32.mrb[0].mxu0
    %247 = vdwg.mxu0
    %v248 = vld [vmem:[%s1] sm:$0xff]
    %250 = vset.pattern.permute.xlu0 0
    %251 = vperm.xlu0 %250, %v248
    %v252 = vpop.permute.xlu0 %251
    %v255 = vlaneseq
    %v256 = vshrl.u32 %v255, 7
    %v257 = vsub.s32 0, %v256
    %v258 = vrot.slane %v43, %v257
    %v260 = vmul.f32 %v252, %v258
    %v261 = vadd.f32 %v190, %v260
    %vm262 = vcmask 261120
    %v264 = vsel %vm262, 0.0, 0
    %266 = vmatprep.subr.mxu0 0.0
    %267 = vmatpush1.msra.mxu0 %v45
    %268 = vmatprep.subr.mxu0 0.0
    %269 = vmatpush1.msra.mxu0 %v46
    %270 = vmatprep.subr.mxu0 0.0
    %271 = vmatpush1.msra.mxu0 %v47
    %272 = vmatprep.subr.mxu0 0.0
    %273 = vmatpush1.msra.mxu0 %v48
    %274 = vmatprep.subr.mxu0 0.0
    %275 = vmatpush1.msra.mxu0 0.0
    %276 = vmatprep.subr.mxu0 0.0
    %277 = vmatpush1.msra.mxu0 0.0
    %278 = vmatprep.subr.mxu0 0.0
    %279 = vmatpush1.msra.mxu0 0.0
    %280 = vmatprep.subr.mxu0 0.0
    %281 = vmatpush1.msra.mxu0 0.0
    %282 = vmatprep.subr.mxu0 0.0
    %283 = vmatpush1.msra.mxu0 0.0
    %284 = vmatprep.subr.mxu0 0.0
    %285 = vmatpush1.msra.mxu0 0.0
    %286 = vmatprep.subr.mxu0 0.0
    %287 = vmatpush1.msra.mxu0 0.0
    %288 = vmatprep.subr.mxu0 0.0
    %289 = vmatpush1.msra.mxu0 0.0
    %290 = vmatprep.subr.mxu0 0.0
    %291 = vmatpush1.msra.mxu0 0.0
    %292 = vmatprep.subr.mxu0 0.0
    %293 = vmatpush1.msra.mxu0 0.0
    %294 = vmatprep.subr.mxu0 0.0
    %295 = vmatpush1.msra.mxu0 0.0
    %296 = vmatprep.subr.mxu0 0.0
    %297 = vmatpush1.msra.mxu0 0.0
    %298 = vmatprep.subr.mxu0 0.0
    %299 = vmatpush1.msra.mxu0 0.0
    %300 = vmatprep.subr.mxu0 0.0
    %301 = vmatpush1.msra.mxu0 0.0
    %302 = vmatprep.subr.mxu0 0.0
    %303 = vmatpush1.msra.mxu0 0.0
    %304 = vmatprep.subr.mxu0 0.0
    %305 = vmatpush1.msra.mxu0 0.0
    %306 = vmatprep.subr.mxu0 0.0
    %307 = vmatpush1.msra.mxu0 0.0
    %308 = vmatprep.subr.mxu0 0.0
    %309 = vmatpush1.msra.mxu0 0.0
    %310 = vmatprep.subr.mxu0 0.0
    %311 = vmatpush1.msra.mxu0 0.0
    %312 = vmatprep.subr.mxu0 0.0
    %313 = vmatpush1.msra.mxu0 0.0
    %314 = vmatprep.subr.mxu0 0.0
    %315 = vmatpush1.msra.mxu0 0.0
    %316 = vmatprep.subr.mxu0 0.0
    %317 = vmatpush1.msra.mxu0 0.0
    %318 = vmatprep.subr.mxu0 0.0
    %319 = vmatpush1.msra.mxu0 0.0
    %320 = vmatprep.subr.mxu0 0.0
    %321 = vmatpush1.msra.mxu0 0.0
    %322 = vmatprep.subr.mxu0 0.0
    %323 = vmatpush1.msra.mxu0 0.0
    %324 = vmatprep.subr.mxu0 0.0
    %325 = vmatpush1.msra.mxu0 0.0
    %326 = vmatprep.subr.mxu0 0.0
    %327 = vmatpush1.msra.mxu0 0.0
    %328 = vmatprep.subr.mxu0 0.0
    %329 = vmatpush1.msra.mxu0 0.0
    %330 = vmatprep.mubr.f32.mxu0 0.0
    %331 = vmatmul.mubr.f32.gmra.mrb[0].mxu0 %v264
    %v332 = vpop.f32.mrb[0].mxu0
    %v333 = vadd.f32 0.0, %v332
    %v334 = vpop.f32.mrb[0].mxu0
    %335 = vdwg.mxu0
    %v336 = vadd.f32 %v261, %v333
    %v337 = vxor.u32 %v336, 2147483648
    %v338 = vmul.f32 %v337, 1.442695
    %v339 = vpow.pop %v338
    %v340 = vadd.f32 %v339, 1.0
    %v341 = vrcp.pop %v340
    %v342 = vmul.f32 1.0, %v341
    %v343 = vtanh.pop %v336
    %v344 = vmul.f32 %v342, 0.0
    %346 = vrot.lane.b32.xlu0 %v343, 64
    %v347 = vpop.permute.xlu0 %346
    %v349 = vmul.f32 %v342, %v347
    %351 = vrot.lane.b32.xlu0 %v349, 32
    %v352 = vpop.permute.xlu0 %351
    %v354 = vadd.f32 %v344, %v352
    %v355 = vtanh.pop %v354
    %357 = vrot.lane.b32.xlu0 %v355, 64
    %v358 = vpop.permute.xlu0 %357
    %v360 = vmul.f32 %v342, %v358
    %362 = vrot.lane.b32.xlu0 %v360, 32
    %v363 = vpop.permute.xlu0 %362
    %v365 = vsel %vm262, %v363, 0.0
    %v367 = vlaneseq
    %v368 = vshrl.u32 %v367, 7
    %v369 = vsub.s32 0, %v368
    %v370 = vrot.slane %v62, %v369
    %vm372 = vcmask 523264
    %v374 = vsel %vm372, %v365, 0
    %376 = vmatprep.subr.mxu0 0.0
    %377 = vmatpush1.msra.mxu0 %v54
    %378 = vmatprep.subr.mxu0 0.0
    %379 = vmatpush1.msra.mxu0 %v55
    %380 = vmatprep.subr.mxu0 0.0
    %381 = vmatpush1.msra.mxu0 %v56
    %382 = vmatprep.subr.mxu0 0.0
    %383 = vmatpush1.msra.mxu0 %v57
    %384 = vmatprep.subr.mxu0 0.0
    %385 = vmatpush1.msra.mxu0 %v58
    %386 = vmatprep.subr.mxu0 0.0
    %387 = vmatpush1.msra.mxu0 %v59
    %388 = vmatprep.subr.mxu0 0.0
    %389 = vmatpush1.msra.mxu0 %v60
    %390 = vmatprep.subr.mxu0 0.0
    %391 = vmatpush1.msra.mxu0 %v61
    %392 = vmatprep.subr.mxu0 0.0
    %393 = vmatpush1.msra.mxu0 0.0
    %394 = vmatprep.subr.mxu0 0.0
    %395 = vmatpush1.msra.mxu0 0.0
    %396 = vmatprep.subr.mxu0 0.0
    %397 = vmatpush1.msra.mxu0 0.0
    %398 = vmatprep.subr.mxu0 0.0
    %399 = vmatpush1.msra.mxu0 0.0
    %400 = vmatprep.subr.mxu0 0.0
    %401 = vmatpush1.msra.mxu0 0.0
    %402 = vmatprep.subr.mxu0 0.0
    %403 = vmatpush1.msra.mxu0 0.0
    %404 = vmatprep.subr.mxu0 0.0
    %405 = vmatpush1.msra.mxu0 0.0
    %406 = vmatprep.subr.mxu0 0.0
    %407 = vmatpush1.msra.mxu0 0.0
    %408 = vmatprep.subr.mxu0 0.0
    %409 = vmatpush1.msra.mxu0 0.0
    %410 = vmatprep.subr.mxu0 0.0
    %411 = vmatpush1.msra.mxu0 0.0
    %412 = vmatprep.subr.mxu0 0.0
    %413 = vmatpush1.msra.mxu0 0.0
    %414 = vmatprep.subr.mxu0 0.0
    %415 = vmatpush1.msra.mxu0 0.0
    %416 = vmatprep.subr.mxu0 0.0
    %417 = vmatpush1.msra.mxu0 0.0
    %418 = vmatprep.subr.mxu0 0.0
    %419 = vmatpush1.msra.mxu0 0.0
    %420 = vmatprep.subr.mxu0 0.0
    %421 = vmatpush1.msra.mxu0 0.0
    %422 = vmatprep.subr.mxu0 0.0
    %423 = vmatpush1.msra.mxu0 0.0
    %424 = vmatprep.subr.mxu0 0.0
    %425 = vmatpush1.msra.mxu0 0.0
    %426 = vmatprep.subr.mxu0 0.0
    %427 = vmatpush1.msra.mxu0 0.0
    %428 = vmatprep.subr.mxu0 0.0
    %429 = vmatpush1.msra.mxu0 0.0
    %430 = vmatprep.subr.mxu0 0.0
    %431 = vmatpush1.msra.mxu0 0.0
    %432 = vmatprep.subr.mxu0 0.0
    %433 = vmatpush1.msra.mxu0 0.0
    %434 = vmatprep.subr.mxu0 0.0
    %435 = vmatpush1.msra.mxu0 0.0
    %436 = vmatprep.subr.mxu0 0.0
    %437 = vmatpush1.msra.mxu0 0.0
    %438 = vmatprep.subr.mxu0 0.0
    %439 = vmatpush1.msra.mxu0 0.0
    %440 = vmatprep.mubr.f32.mxu0 0.0
    %441 = vmatmul.mubr.f32.gmra.mrb[0].mxu0 %v374
    %v442 = vpop.f32.mrb[0].mxu0
    %v443 = vadd.f32 %v370, %v442
    %v444 = vpop.f32.mrb[0].mxu0
    %445 = vdwg.mxu0
    %v446 = vxor.u32 %v443, 2147483648
    %v447 = vmul.f32 %v446, 1.442695
    %v448 = vpow.pop %v447
    %v449 = vadd.f32 %v448, 1.0
    %v450 = vrcp.pop %v449
    %v451 = vmul.f32 1.0, %v450
    %v452 = vtanh.pop %v443
    %v453 = vmul.f32 %v451, 0.0
    %455 = vrot.lane.b32.xlu0 %v452, 64
    %v456 = vpop.permute.xlu0 %455
    %v458 = vmul.f32 %v451, %v456
    %460 = vrot.lane.b32.xlu0 %v458, 32
    %v461 = vpop.permute.xlu0 %460
    %v463 = vadd.f32 %v453, %v461
    %v464 = vtanh.pop %v463
    %466 = vrot.lane.b32.xlu0 %v464, 64
    %v467 = vpop.permute.xlu0 %466
    %v469 = vmul.f32 %v451, %v467
    %v470 = vmax.f32 %v469, 0.0
    %472 = vrot.lane.b32.xlu0 %v470, 32
    %v473 = vpop.permute.xlu0 %472
    %475 = vst.msk [vmem:[#allocation2] sm:$0xff] %vm262, %v473
    %476 = vset.pattern.permute.xlu0 1
    %477 = vperm.xlu0 %476, %v248
    %v478 = vpop.permute.xlu0 %477
    %v480 = vmul.f32 %v478, %v258
    %v481 = vadd.f32 %v195, %v480
    %v482 = vsel %vm262, %v363, 0
    %484 = vmatprep.subr.mxu0 0.0
    %485 = vmatpush1.msra.mxu0 %v45
    %486 = vmatprep.subr.mxu0 0.0
    %487 = vmatpush1.msra.mxu0 %v46
    %488 = vmatprep.subr.mxu0 0.0
    %489 = vmatpush1.msra.mxu0 %v47
    %490 = vmatprep.subr.mxu0 0.0
    %491 = vmatpush1.msra.mxu0 %v48
    %492 = vmatprep.subr.mxu0 0.0
    %493 = vmatpush1.msra.mxu0 0.0
    %494 = vmatprep.subr.mxu0 0.0
    %495 = vmatpush1.msra.mxu0 0.0
    %496 = vmatprep.subr.mxu0 0.0
    %497 = vmatpush1.msra.mxu0 0.0
    %498 = vmatprep.subr.mxu0 0.0
    %499 = vmatpush1.msra.mxu0 0.0
    %500 = vmatprep.subr.mxu0 0.0
    %501 = vmatpush1.msra.mxu0 0.0
    %502 = vmatprep.subr.mxu0 0.0
    %503 = vmatpush1.msra.mxu0 0.0
    %504 = vmatprep.subr.mxu0 0.0
    %505 = vmatpush1.msra.mxu0 0.0
    %506 = vmatprep.subr.mxu0 0.0
    %507 = vmatpush1.msra.mxu0 0.0
    %508 = vmatprep.subr.mxu0 0.0
    %509 = vmatpush1.msra.mxu0 0.0
    %510 = vmatprep.subr.mxu0 0.0
    %511 = vmatpush1.msra.mxu0 0.0
    %512 = vmatprep.subr.mxu0 0.0
    %513 = vmatpush1.msra.mxu0 0.0
    %514 = vmatprep.subr.mxu0 0.0
    %515 = vmatpush1.msra.mxu0 0.0
    %516 = vmatprep.subr.mxu0 0.0
    %517 = vmatpush1.msra.mxu0 0.0
    %518 = vmatprep.subr.mxu0 0.0
    %519 = vmatpush1.msra.mxu0 0.0
    %520 = vmatprep.subr.mxu0 0.0
    %521 = vmatpush1.msra.mxu0 0.0
    %522 = vmatprep.subr.mxu0 0.0
    %523 = vmatpush1.msra.mxu0 0.0
    %524 = vmatprep.subr.mxu0 0.0
    %525 = vmatpush1.msra.mxu0 0.0
    %526 = vmatprep.subr.mxu0 0.0
    %527 = vmatpush1.msra.mxu0 0.0
    %528 = vmatprep.subr.mxu0 0.0
    %529 = vmatpush1.msra.mxu0 0.0
    %530 = vmatprep.subr.mxu0 0.0
    %531 = vmatpush1.msra.mxu0 0.0
    %532 = vmatprep.subr.mxu0 0.0
    %533 = vmatpush1.msra.mxu0 0.0
    %534 = vmatprep.subr.mxu0 0.0
    %535 = vmatpush1.msra.mxu0 0.0
    %536 = vmatprep.subr.mxu0 0.0
    %537 = vmatpush1.msra.mxu0 0.0
    %538 = vmatprep.subr.mxu0 0.0
    %539 = vmatpush1.msra.mxu0 0.0
    %540 = vmatprep.subr.mxu0 0.0
    %541 = vmatpush1.msra.mxu0 0.0
    %542 = vmatprep.subr.mxu0 0.0
    %543 = vmatpush1.msra.mxu0 0.0
    %544 = vmatprep.subr.mxu0 0.0
    %545 = vmatpush1.msra.mxu0 0.0
    %546 = vmatprep.subr.mxu0 0.0
    %547 = vmatpush1.msra.mxu0 0.0
    %548 = vmatprep.mubr.f32.mxu0 0.0
    %549 = vmatmul.mubr.f32.gmra.mrb[0].mxu0 %v482
    %v550 = vpop.f32.mrb[0].mxu0
    %v551 = vadd.f32 0.0, %v550
    %v552 = vpop.f32.mrb[0].mxu0
    %553 = vdwg.mxu0
    %v554 = vadd.f32 %v481, %v551
    %v555 = vxor.u32 %v554, 2147483648
    %v556 = vmul.f32 %v555, 1.442695
    %v557 = vpow.pop %v556
    %v558 = vadd.f32 %v557, 1.0
    %v559 = vrcp.pop %v558
    %v560 = vmul.f32 1.0, %v559
    %v561 = vtanh.pop %v554
    %v562 = vmul.f32 %v560, %v354
    %564 = vrot.lane.b32.xlu0 %v561, 64
    %v565 = vpop.permute.xlu0 %564
    %v567 = vmul.f32 %v560, %v565
    %569 = vrot.lane.b32.xlu0 %v567, 32
    %v570 = vpop.permute.xlu0 %569
    %v572 = vadd.f32 %v562, %v570
    %v573 = vtanh.pop %v572
    %575 = vrot.lane.b32.xlu0 %v573, 64
    %v576 = vpop.permute.xlu0 %575
    %v578 = vmul.f32 %v560, %v576
    %580 = vrot.lane.b32.xlu0 %v578, 32
    %v581 = vpop.permute.xlu0 %580
    %584 = vrot.lane.b32.xlu0 %v469, 64
    %v585 = vpop.permute.xlu0 %584
    %v587 = vsel %vm262, %v581, %v585
    %v589 = vsel %vm372, %v587, 0
    %591 = vmatprep.subr.mxu0 0.0
    %592 = vmatpush1.msra.mxu0 %v54
    %593 = vmatprep.subr.mxu0 0.0
    %594 = vmatpush1.msra.mxu0 %v55
    %595 = vmatprep.subr.mxu0 0.0
    %596 = vmatpush1.msra.mxu0 %v56
    %597 = vmatprep.subr.mxu0 0.0
    %598 = vmatpush1.msra.mxu0 %v57
    %599 = vmatprep.subr.mxu0 0.0
    %600 = vmatpush1.msra.mxu0 %v58
    %601 = vmatprep.subr.mxu0 0.0
    %602 = vmatpush1.msra.mxu0 %v59
    %603 = vmatprep.subr.mxu0 0.0
    %604 = vmatpush1.msra.mxu0 %v60
    %605 = vmatprep.subr.mxu0 0.0
    %606 = vmatpush1.msra.mxu0 %v61
    %607 = vmatprep.subr.mxu0 0.0
    %608 = vmatpush1.msra.mxu0 0.0
    %609 = vmatprep.subr.mxu0 0.0
    %610 = vmatpush1.msra.mxu0 0.0
    %611 = vmatprep.subr.mxu0 0.0
    %612 = vmatpush1.msra.mxu0 0.0
    %613 = vmatprep.subr.mxu0 0.0
    %614 = vmatpush1.msra.mxu0 0.0
    %615 = vmatprep.subr.mxu0 0.0
    %616 = vmatpush1.msra.mxu0 0.0
    %617 = vmatprep.subr.mxu0 0.0
    %618 = vmatpush1.msra.mxu0 0.0
    %619 = vmatprep.subr.mxu0 0.0
    %620 = vmatpush1.msra.mxu0 0.0
    %621 = vmatprep.subr.mxu0 0.0
    %622 = vmatpush1.msra.mxu0 0.0
    %623 = vmatprep.subr.mxu0 0.0
    %624 = vmatpush1.msra.mxu0 0.0
    %625 = vmatprep.subr.mxu0 0.0
    %626 = vmatpush1.msra.mxu0 0.0
    %627 = vmatprep.subr.mxu0 0.0
    %628 = vmatpush1.msra.mxu0 0.0
    %629 = vmatprep.subr.mxu0 0.0
    %630 = vmatpush1.msra.mxu0 0.0
    %631 = vmatprep.subr.mxu0 0.0
    %632 = vmatpush1.msra.mxu0 0.0
    %633 = vmatprep.subr.mxu0 0.0
    %634 = vmatpush1.msra.mxu0 0.0
    %635 = vmatprep.subr.mxu0 0.0
    %636 = vmatpush1.msra.mxu0 0.0
    %637 = vmatprep.subr.mxu0 0.0
    %638 = vmatpush1.msra.mxu0 0.0
    %639 = vmatprep.subr.mxu0 0.0
    %640 = vmatpush1.msra.mxu0 0.0
    %641 = vmatprep.subr.mxu0 0.0
    %642 = vmatpush1.msra.mxu0 0.0
    %643 = vmatprep.subr.mxu0 0.0
    %644 = vmatpush1.msra.mxu0 0.0
    %645 = vmatprep.subr.mxu0 0.0
    %646 = vmatpush1.msra.mxu0 0.0
    %647 = vmatprep.subr.mxu0 0.0
    %648 = vmatpush1.msra.mxu0 0.0
    %649 = vmatprep.subr.mxu0 0.0
    %650 = vmatpush1.msra.mxu0 0.0
    %651 = vmatprep.subr.mxu0 0.0
    %652 = vmatpush1.msra.mxu0 0.0
    %653 = vmatprep.subr.mxu0 0.0
    %654 = vmatpush1.msra.mxu0 0.0
    %655 = vmatprep.mubr.f32.mxu0 0.0
    %656 = vmatmul.mubr.f32.gmra.mrb[0].mxu0 %v589
    %v657 = vpop.f32.mrb[0].mxu0
    %v658 = vadd.f32 %v370, %v657
    %v659 = vpop.f32.mrb[0].mxu0
    %660 = vdwg.mxu0
    %v661 = vxor.u32 %v658, 2147483648
    %v662 = vmul.f32 %v661, 1.442695
    %v663 = vpow.pop %v662
    %v664 = vadd.f32 %v663, 1.0
    %v665 = vrcp.pop %v664
    %v666 = vmul.f32 1.0, %v665
    %v667 = vtanh.pop %v658
    %v668 = vmul.f32 %v666, %v463
    %670 = vrot.lane.b32.xlu0 %v667, 64
    %v671 = vpop.permute.xlu0 %670
    %v673 = vmul.f32 %v666, %v671
    %675 = vrot.lane.b32.xlu0 %v673, 32
    %v676 = vpop.permute.xlu0 %675
    %v678 = vadd.f32 %v668, %v676
    %v679 = vtanh.pop %v678
    %681 = vrot.lane.b32.xlu0 %v679, 64
    %v682 = vpop.permute.xlu0 %681
    %v684 = vmul.f32 %v666, %v682
    %v685 = vmax.f32 %v684, 0.0
    %687 = vrot.lane.b32.xlu0 %v685, 32
    %v688 = vpop.permute.xlu0 %687
    %690 = vst.msk [vmem:[#allocation2 + $0x8] sm:$0xff] %vm262, %v688
    %691 = vset.pattern.permute.xlu0 2
    %692 = vperm.xlu0 %691, %v248
    %v693 = vpop.permute.xlu0 %692
    %v695 = vmul.f32 %v693, %v258
    %v696 = vadd.f32 %v200, %v695
    %v697 = vsel %vm262, %v581, 0
    %699 = vmatprep.subr.mxu0 0.0
    %700 = vmatpush1.msra.mxu0 %v45
    %701 = vmatprep.subr.mxu0 0.0
    %702 = vmatpush1.msra.mxu0 %v46
    %703 = vmatprep.subr.mxu0 0.0
    %704 = vmatpush1.msra.mxu0 %v47
    %705 = vmatprep.subr.mxu0 0.0
    %706 = vmatpush1.msra.mxu0 %v48
    %707 = vmatprep.subr.mxu0 0.0
    %708 = vmatpush1.msra.mxu0 0.0
    %709 = vmatprep.subr.mxu0 0.0
    %710 = vmatpush1.msra.mxu0 0.0
    %711 = vmatprep.subr.mxu0 0.0
    %712 = vmatpush1.msra.mxu0 0.0
    %713 = vmatprep.subr.mxu0 0.0
    %714 = vmatpush1.msra.mxu0 0.0
    %715 = vmatprep.subr.mxu0 0.0
    %716 = vmatpush1.msra.mxu0 0.0
    %717 = vmatprep.subr.mxu0 0.0
    %718 = vmatpush1.msra.mxu0 0.0
    %719 = vmatprep.subr.mxu0 0.0
    %720 = vmatpush1.msra.mxu0 0.0
    %721 = vmatprep.subr.mxu0 0.0
    %722 = vmatpush1.msra.mxu0 0.0
    %723 = vmatprep.subr.mxu0 0.0
    %724 = vmatpush1.msra.mxu0 0.0
    %725 = vmatprep.subr.mxu0 0.0
    %726 = vmatpush1.msra.mxu0 0.0
    %727 = vmatprep.subr.mxu0 0.0
    %728 = vmatpush1.msra.mxu0 0.0
    %729 = vmatprep.subr.mxu0 0.0
    %730 = vmatpush1.msra.mxu0 0.0
    %731 = vmatprep.subr.mxu0 0.0
    %732 = vmatpush1.msra.mxu0 0.0
    %733 = vmatprep.subr.mxu0 0.0
    %734 = vmatpush1.msra.mxu0 0.0
    %735 = vmatprep.subr.mxu0 0.0
    %736 = vmatpush1.msra.mxu0 0.0
    %737 = vmatprep.subr.mxu0 0.0
    %738 = vmatpush1.msra.mxu0 0.0
    %739 = vmatprep.subr.mxu0 0.0
    %740 = vmatpush1.msra.mxu0 0.0
    %741 = vmatprep.subr.mxu0 0.0
    %742 = vmatpush1.msra.mxu0 0.0
    %743 = vmatprep.subr.mxu0 0.0
    %744 = vmatpush1.msra.mxu0 0.0
    %745 = vmatprep.subr.mxu0 0.0
    %746 = vmatpush1.msra.mxu0 0.0
    %747 = vmatprep.subr.mxu0 0.0
    %748 = vmatpush1.msra.mxu0 0.0
    %749 = vmatprep.subr.mxu0 0.0
    %750 = vmatpush1.msra.mxu0 0.0
    %751 = vmatprep.subr.mxu0 0.0
    %752 = vmatpush1.msra.mxu0 0.0
    %753 = vmatprep.subr.mxu0 0.0
    %754 = vmatpush1.msra.mxu0 0.0
    %755 = vmatprep.subr.mxu0 0.0
    %756 = vmatpush1.msra.mxu0 0.0
    %757 = vmatprep.subr.mxu0 0.0
    %758 = vmatpush1.msra.mxu0 0.0
    %759 = vmatprep.subr.mxu0 0.0
    %760 = vmatpush1.msra.mxu0 0.0
    %761 = vmatprep.subr.mxu0 0.0
    %762 = vmatpush1.msra.mxu0 0.0
    %763 = vmatprep.mubr.f32.mxu0 0.0
    %764 = vmatmul.mubr.f32.gmra.mrb[0].mxu0 %v697
    %v765 = vpop.f32.mrb[0].mxu0
    %v766 = vadd.f32 0.0, %v765
    %v767 = vpop.f32.mrb[0].mxu0
    %768 = vdwg.mxu0
    %v769 = vadd.f32 %v696, %v766
    %v770 = vxor.u32 %v769, 2147483648
    %v771 = vmul.f32 %v770, 1.442695
    %v772 = vpow.pop %v771
    %v773 = vadd.f32 %v772, 1.0
    %v774 = vrcp.pop %v773
    %v775 = vmul.f32 1.0, %v774
    %v776 = vtanh.pop %v769
    %v777 = vmul.f32 %v775, %v572
    %779 = vrot.lane.b32.xlu0 %v776, 64
    %v780 = vpop.permute.xlu0 %779
    %v782 = vmul.f32 %v775, %v780
    %784 = vrot.lane.b32.xlu0 %v782, 32
    %v785 = vpop.permute.xlu0 %784
    %v787 = vadd.f32 %v777, %v785
    %v788 = vtanh.pop %v787
    %790 = vrot.lane.b32.xlu0 %v788, 64
    %v791 = vpop.permute.xlu0 %790
    %v793 = vmul.f32 %v775, %v791
    %795 = vrot.lane.b32.xlu0 %v793, 32
    %v796 = vpop.permute.xlu0 %795
    %799 = vrot.lane.b32.xlu0 %v684, 64
    %v800 = vpop.permute.xlu0 %799
    %v802 = vsel %vm262, %v796, %v800
    %v804 = vsel %vm372, %v802, 0
    %806 = vmatprep.subr.mxu0 0.0
    %807 = vmatpush1.msra.mxu0 %v54
    %808 = vmatprep.subr.mxu0 0.0
    %809 = vmatpush1.msra.mxu0 %v55
    %810 = vmatprep.subr.mxu0 0.0
    %811 = vmatpush1.msra.mxu0 %v56
    %812 = vmatprep.subr.mxu0 0.0
    %813 = vmatpush1.msra.mxu0 %v57
    %814 = vmatprep.subr.mxu0 0.0
    %815 = vmatpush1.msra.mxu0 %v58
    %816 = vmatprep.subr.mxu0 0.0
    %817 = vmatpush1.msra.mxu0 %v59
    %818 = vmatprep.subr.mxu0 0.0
    %819 = vmatpush1.msra.mxu0 %v60
    %820 = vmatprep.subr.mxu0 0.0
    %821 = vmatpush1.msra.mxu0 %v61
    %822 = vmatprep.subr.mxu0 0.0
    %823 = vmatpush1.msra.mxu0 0.0
    %824 = vmatprep.subr.mxu0 0.0
    %825 = vmatpush1.msra.mxu0 0.0
    %826 = vmatprep.subr.mxu0 0.0
    %827 = vmatpush1.msra.mxu0 0.0
    %828 = vmatprep.subr.mxu0 0.0
    %829 = vmatpush1.msra.mxu0 0.0
    %830 = vmatprep.subr.mxu0 0.0
    %831 = vmatpush1.msra.mxu0 0.0
    %832 = vmatprep.subr.mxu0 0.0
    %833 = vmatpush1.msra.mxu0 0.0
    %834 = vmatprep.subr.mxu0 0.0
    %835 = vmatpush1.msra.mxu0 0.0
    %836 = vmatprep.subr.mxu0 0.0
    %837 = vmatpush1.msra.mxu0 0.0
    %838 = vmatprep.subr.mxu0 0.0
    %839 = vmatpush1.msra.mxu0 0.0
    %840 = vmatprep.subr.mxu0 0.0
    %841 = vmatpush1.msra.mxu0 0.0
    %842 = vmatprep.subr.mxu0 0.0
    %843 = vmatpush1.msra.mxu0 0.0
    %844 = vmatprep.subr.mxu0 0.0
    %845 = vmatpush1.msra.mxu0 0.0
    %846 = vmatprep.subr.mxu0 0.0
    %847 = vmatpush1.msra.mxu0 0.0
    %848 = vmatprep.subr.mxu0 0.0
    %849 = vmatpush1.msra.mxu0 0.0
    %850 = vmatprep.subr.mxu0 0.0
    %851 = vmatpush1.msra.mxu0 0.0
    %852 = vmatprep.subr.mxu0 0.0
    %853 = vmatpush1.msra.mxu0 0.0
    %854 = vmatprep.subr.mxu0 0.0
    %855 = vmatpush1.msra.mxu0 0.0
    %856 = vmatprep.subr.mxu0 0.0
    %857 = vmatpush1.msra.mxu0 0.0
    %858 = vmatprep.subr.mxu0 0.0
    %859 = vmatpush1.msra.mxu0 0.0
    %860 = vmatprep.subr.mxu0 0.0
    %861 = vmatpush1.msra.mxu0 0.0
    %862 = vmatprep.subr.mxu0 0.0
    %863 = vmatpush1.msra.mxu0 0.0
    %864 = vmatprep.subr.mxu0 0.0
    %865 = vmatpush1.msra.mxu0 0.0
    %866 = vmatprep.subr.mxu0 0.0
    %867 = vmatpush1.msra.mxu0 0.0
    %868 = vmatprep.subr.mxu0 0.0
    %869 = vmatpush1.msra.mxu0 0.0
    %870 = vmatprep.mubr.f32.mxu0 0.0
    %871 = vmatmul.mubr.f32.gmra.mrb[0].mxu0 %v804
    %v872 = vpop.f32.mrb[0].mxu0
    %v873 = vadd.f32 %v370, %v872
    %v874 = vpop.f32.mrb[0].mxu0
    %875 = vdwg.mxu0
    %v876 = vxor.u32 %v873, 2147483648
    %v877 = vmul.f32 %v876, 1.442695
    %v878 = vpow.pop %v877
    %v879 = vadd.f32 %v878, 1.0
    %v880 = vrcp.pop %v879
    %v881 = vmul.f32 1.0, %v880
    %v882 = vtanh.pop %v873
    %v883 = vmul.f32 %v881, %v678
    %885 = vrot.lane.b32.xlu0 %v882, 64
    %v886 = vpop.permute.xlu0 %885
    %v888 = vmul.f32 %v881, %v886
    %890 = vrot.lane.b32.xlu0 %v888, 32
    %v891 = vpop.permute.xlu0 %890
    %v893 = vadd.f32 %v883, %v891
    %v894 = vtanh.pop %v893
    %896 = vrot.lane.b32.xlu0 %v894, 64
    %v897 = vpop.permute.xlu0 %896
    %v899 = vmul.f32 %v881, %v897
    %v900 = vmax.f32 %v899, 0.0
    %902 = vrot.lane.b32.xlu0 %v900, 32
    %v903 = vpop.permute.xlu0 %902
    %905 = vst.msk [vmem:[#allocation2 + $0x10] sm:$0xff] %vm262, %v903
    %906 = vset.pattern.permute.xlu0 3
    %907 = vperm.xlu0 %906, %v248
    %v908 = vpop.permute.xlu0 %907
    %v910 = vmul.f32 %v908, %v258
    %v911 = vadd.f32 %v205, %v910
    %v912 = vsel %vm262, %v796, 0
    %914 = vmatprep.subr.mxu0 0.0
    %915 = vmatpush1.msra.mxu0 %v45
    %916 = vmatprep.subr.mxu0 0.0
    %917 = vmatpush1.msra.mxu0 %v46
    %918 = vmatprep.subr.mxu0 0.0
    %919 = vmatpush1.msra.mxu0 %v47
    %920 = vmatprep.subr.mxu0 0.0
    %921 = vmatpush1.msra.mxu0 %v48
    %922 = vmatprep.subr.mxu0 0.0
    %923 = vmatpush1.msra.mxu0 0.0
    %924 = vmatprep.subr.mxu0 0.0
    %925 = vmatpush1.msra.mxu0 0.0
    %926 = vmatprep.subr.mxu0 0.0
    %927 = vmatpush1.msra.mxu0 0.0
    %928 = vmatprep.subr.mxu0 0.0
    %929 = vmatpush1.msra.mxu0 0.0
    %930 = vmatprep.subr.mxu0 0.0
    %931 = vmatpush1.msra.mxu0 0.0
    %932 = vmatprep.subr.mxu0 0.0
    %933 = vmatpush1.msra.mxu0 0.0
    %934 = vmatprep.subr.mxu0 0.0
    %935 = vmatpush1.msra.mxu0 0.0
    %936 = vmatprep.subr.mxu0 0.0
    %937 = vmatpush1.msra.mxu0 0.0
    %938 = vmatprep.subr.mxu0 0.0
    %939 = vmatpush1.msra.mxu0 0.0
    %940 = vmatprep.subr.mxu0 0.0
    %941 = vmatpush1.msra.mxu0 0.0
    %942 = vmatprep.subr.mxu0 0.0
    %943 = vmatpush1.msra.mxu0 0.0
    %944 = vmatprep.subr.mxu0 0.0
    %945 = vmatpush1.msra.mxu0 0.0
    %946 = vmatprep.subr.mxu0 0.0
    %947 = vmatpush1.msra.mxu0 0.0
    %948 = vmatprep.subr.mxu0 0.0
    %949 = vmatpush1.msra.mxu0 0.0
    %950 = vmatprep.subr.mxu0 0.0
    %951 = vmatpush1.msra.mxu0 0.0
    %952 = vmatprep.subr.mxu0 0.0
    %953 = vmatpush1.msra.mxu0 0.0
    %954 = vmatprep.subr.mxu0 0.0
    %955 = vmatpush1.msra.mxu0 0.0
    %956 = vmatprep.subr.mxu0 0.0
    %957 = vmatpush1.msra.mxu0 0.0
    %958 = vmatprep.subr.mxu0 0.0
    %959 = vmatpush1.msra.mxu0 0.0
    %960 = vmatprep.subr.mxu0 0.0
    %961 = vmatpush1.msra.mxu0 0.0
    %962 = vmatprep.subr.mxu0 0.0
    %963 = vmatpush1.msra.mxu0 0.0
    %964 = vmatprep.subr.mxu0 0.0
    %965 = vmatpush1.msra.mxu0 0.0
    %966 = vmatprep.subr.mxu0 0.0
    %967 = vmatpush1.msra.mxu0 0.0
    %968 = vmatprep.subr.mxu0 0.0
    %969 = vmatpush1.msra.mxu0 0.0
    %970 = vmatprep.subr.mxu0 0.0
    %971 = vmatpush1.msra.mxu0 0.0
    %972 = vmatprep.subr.mxu0 0.0
    %973 = vmatpush1.msra.mxu0 0.0
    %974 = vmatprep.subr.mxu0 0.0
    %975 = vmatpush1.msra.mxu0 0.0
    %976 = vmatprep.subr.mxu0 0.0
    %977 = vmatpush1.msra.mxu0 0.0
    %978 = vmatprep.mubr.f32.mxu0 0.0
    %979 = vmatmul.mubr.f32.gmra.mrb[0].mxu0 %v912
    %v980 = vpop.f32.mrb[0].mxu0
    %v981 = vadd.f32 0.0, %v980
    %v982 = vpop.f32.mrb[0].mxu0
    %983 = vdwg.mxu0
    %v984 = vadd.f32 %v911, %v981
    %v985 = vxor.u32 %v984, 2147483648
    %v986 = vmul.f32 %v985, 1.442695
    %v987 = vpow.pop %v986
    %v988 = vadd.f32 %v987, 1.0
    %v989 = vrcp.pop %v988
    %v990 = vmul.f32 1.0, %v989
    %v991 = vtanh.pop %v984
    %v992 = vmul.f32 %v990, %v787
    %994 = vrot.lane.b32.xlu0 %v991, 64
    %v995 = vpop.permute.xlu0 %994
    %v997 = vmul.f32 %v990, %v995
    %999 = vrot.lane.b32.xlu0 %v997, 32
    %v1000 = vpop.permute.xlu0 %999
    %v1002 = vadd.f32 %v992, %v1000
    %v1003 = vtanh.pop %v1002
    %1005 = vrot.lane.b32.xlu0 %v1003, 64
    %v1006 = vpop.permute.xlu0 %1005
    %v1008 = vmul.f32 %v990, %v1006
    %1010 = vrot.lane.b32.xlu0 %v1008, 32
    %v1011 = vpop.permute.xlu0 %1010
    %1014 = vrot.lane.b32.xlu0 %v899, 64
    %v1015 = vpop.permute.xlu0 %1014
    %v1017 = vsel %vm262, %v1011, %v1015
    %v1019 = vsel %vm372, %v1017, 0
    %1021 = vmatprep.subr.mxu0 0.0
    %1022 = vmatpush1.msra.mxu0 %v54
    %1023 = vmatprep.subr.mxu0 0.0
    %1024 = vmatpush1.msra.mxu0 %v55
    %1025 = vmatprep.subr.mxu0 0.0
    %1026 = vmatpush1.msra.mxu0 %v56
    %1027 = vmatprep.subr.mxu0 0.0
    %1028 = vmatpush1.msra.mxu0 %v57
    %1029 = vmatprep.subr.mxu0 0.0
    %1030 = vmatpush1.msra.mxu0 %v58
    %1031 = vmatprep.subr.mxu0 0.0
    %1032 = vmatpush1.msra.mxu0 %v59
    %1033 = vmatprep.subr.mxu0 0.0
    %1034 = vmatpush1.msra.mxu0 %v60
    %1035 = vmatprep.subr.mxu0 0.0
    %1036 = vmatpush1.msra.mxu0 %v61
    %1037 = vmatprep.subr.mxu0 0.0
    %1038 = vmatpush1.msra.mxu0 0.0
    %1039 = vmatprep.subr.mxu0 0.0
    %1040 = vmatpush1.msra.mxu0 0.0
    %1041 = vmatprep.subr.mxu0 0.0
    %1042 = vmatpush1.msra.mxu0 0.0
    %1043 = vmatprep.subr.mxu0 0.0
    %1044 = vmatpush1.msra.mxu0 0.0
    %1045 = vmatprep.subr.mxu0 0.0
    %1046 = vmatpush1.msra.mxu0 0.0
    %1047 = vmatprep.subr.mxu0 0.0
    %1048 = vmatpush1.msra.mxu0 0.0
    %1049 = vmatprep.subr.mxu0 0.0
    %1050 = vmatpush1.msra.mxu0 0.0
    %1051 = vmatprep.subr.mxu0 0.0
    %1052 = vmatpush1.msra.mxu0 0.0
    %1053 = vmatprep.subr.mxu0 0.0
    %1054 = vmatpush1.msra.mxu0 0.0
    %1055 = vmatprep.subr.mxu0 0.0
    %1056 = vmatpush1.msra.mxu0 0.0
    %1057 = vmatprep.subr.mxu0 0.0
    %1058 = vmatpush1.msra.mxu0 0.0
    %1059 = vmatprep.subr.mxu0 0.0
    %1060 = vmatpush1.msra.mxu0 0.0
    %1061 = vmatprep.subr.mxu0 0.0
    %1062 = vmatpush1.msra.mxu0 0.0
    %1063 = vmatprep.subr.mxu0 0.0
    %1064 = vmatpush1.msra.mxu0 0.0
    %1065 = vmatprep.subr.mxu0 0.0
    %1066 = vmatpush1.msra.mxu0 0.0
    %1067 = vmatprep.subr.mxu0 0.0
    %1068 = vmatpush1.msra.mxu0 0.0
    %1069 = vmatprep.subr.mxu0 0.0
    %1070 = vmatpush1.msra.mxu0 0.0
    %1071 = vmatprep.subr.mxu0 0.0
    %1072 = vmatpush1.msra.mxu0 0.0
    %1073 = vmatprep.subr.mxu0 0.0
    %1074 = vmatpush1.msra.mxu0 0.0
    %1075 = vmatprep.subr.mxu0 0.0
    %1076 = vmatpush1.msra.mxu0 0.0
    %1077 = vmatprep.subr.mxu0 0.0
    %1078 = vmatpush1.msra.mxu0 0.0
    %1079 = vmatprep.subr.mxu0 0.0
    %1080 = vmatpush1.msra.mxu0 0.0
    %1081 = vmatprep.subr.mxu0 0.0
    %1082 = vmatpush1.msra.mxu0 0.0
    %1083 = vmatprep.subr.mxu0 0.0
    %1084 = vmatpush1.msra.mxu0 0.0
    %1085 = vmatprep.mubr.f32.mxu0 0.0
    %1086 = vmatmul.mubr.f32.gmra.mrb[0].mxu0 %v1019
    %v1087 = vpop.f32.mrb[0].mxu0
    %v1088 = vadd.f32 %v370, %v1087
    %v1089 = vpop.f32.mrb[0].mxu0
    %1090 = vdwg.mxu0
    %v1091 = vxor.u32 %v1088, 2147483648
    %v1092 = vmul.f32 %v1091, 1.442695
    %v1093 = vpow.pop %v1092
    %v1094 = vadd.f32 %v1093, 1.0
    %v1095 = vrcp.pop %v1094
    %v1096 = vmul.f32 1.0, %v1095
    %v1097 = vtanh.pop %v1088
    %v1098 = vmul.f32 %v1096, %v893
    %1100 = vrot.lane.b32.xlu0 %v1097, 64
    %v1101 = vpop.permute.xlu0 %1100
    %v1103 = vmul.f32 %v1096, %v1101
    %1105 = vrot.lane.b32.xlu0 %v1103, 32
    %v1106 = vpop.permute.xlu0 %1105
    %v1108 = vadd.f32 %v1098, %v1106
    %v1109 = vtanh.pop %v1108
    %1111 = vrot.lane.b32.xlu0 %v1109, 64
    %v1112 = vpop.permute.xlu0 %1111
    %v1114 = vmul.f32 %v1096, %v1112
    %v1115 = vmax.f32 %v1114, 0.0
    %1117 = vrot.lane.b32.xlu0 %v1115, 32
    %v1118 = vpop.permute.xlu0 %1117
    %1120 = vst.msk [vmem:[#allocation2 + $0x18] sm:$0xff] %vm262, %v1118
    %1121 = vset.pattern.permute.xlu0 4
    %1122 = vperm.xlu0 %1121, %v248
    %v1123 = vpop.permute.xlu0 %1122
    %v1125 = vmul.f32 %v1123, %v258
    %v1126 = vadd.f32 %v210, %v1125
    %v1127 = vsel %vm262, %v1011, 0
    %1129 = vmatprep.subr.mxu0 0.0
    %1130 = vmatpush1.msra.mxu0 %v45
    %1131 = vmatprep.subr.mxu0 0.0
    %1132 = vmatpush1.msra.mxu0 %v46
    %1133 = vmatprep.subr.mxu0 0.0
    %1134 = vmatpush1.msra.mxu0 %v47
    %1135 = vmatprep.subr.mxu0 0.0
    %1136 = vmatpush1.msra.mxu0 %v48
    %1137 = vmatprep.subr.mxu0 0.0
    %1138 = vmatpush1.msra.mxu0 0.0
    %1139 = vmatprep.subr.mxu0 0.0
    %1140 = vmatpush1.msra.mxu0 0.0
    %1141 = vmatprep.subr.mxu0 0.0
    %1142 = vmatpush1.msra.mxu0 0.0
    %1143 = vmatprep.subr.mxu0 0.0
    %1144 = vmatpush1.msra.mxu0 0.0
    %1145 = vmatprep.subr.mxu0 0.0
    %1146 = vmatpush1.msra.mxu0 0.0
    %1147 = vmatprep.subr.mxu0 0.0
    %1148 = vmatpush1.msra.mxu0 0.0
    %1149 = vmatprep.subr.mxu0 0.0
    %1150 = vmatpush1.msra.mxu0 0.0
    %1151 = vmatprep.subr.mxu0 0.0
    %1152 = vmatpush1.msra.mxu0 0.0
    %1153 = vmatprep.subr.mxu0 0.0
    %1154 = vmatpush1.msra.mxu0 0.0
    %1155 = vmatprep.subr.mxu0 0.0
    %1156 = vmatpush1.msra.mxu0 0.0
    %1157 = vmatprep.subr.mxu0 0.0
    %1158 = vmatpush1.msra.mxu0 0.0
    %1159 = vmatprep.subr.mxu0 0.0
    %1160 = vmatpush1.msra.mxu0 0.0
    %1161 = vmatprep.subr.mxu0 0.0
    %1162 = vmatpush1.msra.mxu0 0.0
    %1163 = vmatprep.subr.mxu0 0.0
    %1164 = vmatpush1.msra.mxu0 0.0
    %1165 = vmatprep.subr.mxu0 0.0
    %1166 = vmatpush1.msra.mxu0 0.0
    %1167 = vmatprep.subr.mxu0 0.0
    %1168 = vmatpush1.msra.mxu0 0.0
    %1169 = vmatprep.subr.mxu0 0.0
    %1170 = vmatpush1.msra.mxu0 0.0
    %1171 = vmatprep.subr.mxu0 0.0
    %1172 = vmatpush1.msra.mxu0 0.0
    %1173 = vmatprep.subr.mxu0 0.0
    %1174 = vmatpush1.msra.mxu0 0.0
    %1175 = vmatprep.subr.mxu0 0.0
    %1176 = vmatpush1.msra.mxu0 0.0
    %1177 = vmatprep.subr.mxu0 0.0
    %1178 = vmatpush1.msra.mxu0 0.0
    %1179 = vmatprep.subr.mxu0 0.0
    %1180 = vmatpush1.msra.mxu0 0.0
    %1181 = vmatprep.subr.mxu0 0.0
    %1182 = vmatpush1.msra.mxu0 0.0
    %1183 = vmatprep.subr.mxu0 0.0
    %1184 = vmatpush1.msra.mxu0 0.0
    %1185 = vmatprep.subr.mxu0 0.0
    %1186 = vmatpush1.msra.mxu0 0.0
    %1187 = vmatprep.subr.mxu0 0.0
    %1188 = vmatpush1.msra.mxu0 0.0
    %1189 = vmatprep.subr.mxu0 0.0
    %1190 = vmatpush1.msra.mxu0 0.0
    %1191 = vmatprep.subr.mxu0 0.0
    %1192 = vmatpush1.msra.mxu0 0.0
    %1193 = vmatprep.mubr.f32.mxu0 0.0
    %1194 = vmatmul.mubr.f32.gmra.mrb[0].mxu0 %v1127
    %v1195 = vpop.f32.mrb[0].mxu0
    %v1196 = vadd.f32 0.0, %v1195
    %v1197 = vpop.f32.mrb[0].mxu0
    %1198 = vdwg.mxu0
    %v1199 = vadd.f32 %v1126, %v1196
    %v1200 = vxor.u32 %v1199, 2147483648
    %v1201 = vmul.f32 %v1200, 1.442695
    %v1202 = vpow.pop %v1201
    %v1203 = vadd.f32 %v1202, 1.0
    %v1204 = vrcp.pop %v1203
    %v1205 = vmul.f32 1.0, %v1204
    %v1206 = vtanh.pop %v1199
    %v1207 = vmul.f32 %v1205, %v1002
    %1209 = vrot.lane.b32.xlu0 %v1206, 64
    %v1210 = vpop.permute.xlu0 %1209
    %v1212 = vmul.f32 %v1205, %v1210
    %1214 = vrot.lane.b32.xlu0 %v1212, 32
    %v1215 = vpop.permute.xlu0 %1214
    %v1217 = vadd.f32 %v1207, %v1215
    %v1218 = vtanh.pop %v1217
    %1220 = vrot.lane.b32.xlu0 %v1218, 64
    %v1221 = vpop.permute.xlu0 %1220
    %v1223 = vmul.f32 %v1205, %v1221
    %1225 = vrot.lane.b32.xlu0 %v1223, 32
    %v1226 = vpop.permute.xlu0 %1225
    %1229 = vrot.lane.b32.xlu0 %v1114, 64
    %v1230 = vpop.permute.xlu0 %1229
    %v1232 = vsel %vm262, %v1226, %v1230
    %v1234 = vsel %vm372, %v1232, 0
    %1236 = vmatprep.subr.mxu0 0.0
    %1237 = vmatpush1.msra.mxu0 %v54
    %1238 = vmatprep.subr.mxu0 0.0
    %1239 = vmatpush1.msra.mxu0 %v55
    %1240 = vmatprep.subr.mxu0 0.0
    %1241 = vmatpush1.msra.mxu0 %v56
    %1242 = vmatprep.subr.mxu0 0.0
    %1243 = vmatpush1.msra.mxu0 %v57
    %1244 = vmatprep.subr.mxu0 0.0
    %1245 = vmatpush1.msra.mxu0 %v58
    %1246 = vmatprep.subr.mxu0 0.0
    %1247 = vmatpush1.msra.mxu0 %v59
    %1248 = vmatprep.subr.mxu0 0.0
    %1249 = vmatpush1.msra.mxu0 %v60
    %1250 = vmatprep.subr.mxu0 0.0
    %1251 = vmatpush1.msra.mxu0 %v61
    %1252 = vmatprep.subr.mxu0 0.0
    %1253 = vmatpush1.msra.mxu0 0.0
    %1254 = vmatprep.subr.mxu0 0.0
    %1255 = vmatpush1.msra.mxu0 0.0
    %1256 = vmatprep.subr.mxu0 0.0
    %1257 = vmatpush1.msra.mxu0 0.0
    %1258 = vmatprep.subr.mxu0 0.0
    %1259 = vmatpush1.msra.mxu0 0.0
    %1260 = vmatprep.subr.mxu0 0.0
    %1261 = vmatpush1.msra.mxu0 0.0
    %1262 = vmatprep.subr.mxu0 0.0
    %1263 = vmatpush1.msra.mxu0 0.0
    %1264 = vmatprep.subr.mxu0 0.0
    %1265 = vmatpush1.msra.mxu0 0.0
    %1266 = vmatprep.subr.mxu0 0.0
    %1267 = vmatpush1.msra.mxu0 0.0
    %1268 = vmatprep.subr.mxu0 0.0
    %1269 = vmatpush1.msra.mxu0 0.0
    %1270 = vmatprep.subr.mxu0 0.0
    %1271 = vmatpush1.msra.mxu0 0.0
    %1272 = vmatprep.subr.mxu0 0.0
    %1273 = vmatpush1.msra.mxu0 0.0
    %1274 = vmatprep.subr.mxu0 0.0
    %1275 = vmatpush1.msra.mxu0 0.0
    %1276 = vmatprep.subr.mxu0 0.0
    %1277 = vmatpush1.msra.mxu0 0.0
    %1278 = vmatprep.subr.mxu0 0.0
    %1279 = vmatpush1.msra.mxu0 0.0
    %1280 = vmatprep.subr.mxu0 0.0
    %1281 = vmatpush1.msra.mxu0 0.0
    %1282 = vmatprep.subr.mxu0 0.0
    %1283 = vmatpush1.msra.mxu0 0.0
    %1284 = vmatprep.subr.mxu0 0.0
    %1285 = vmatpush1.msra.mxu0 0.0
    %1286 = vmatprep.subr.mxu0 0.0
    %1287 = vmatpush1.msra.mxu0 0.0
    %1288 = vmatprep.subr.mxu0 0.0
    %1289 = vmatpush1.msra.mxu0 0.0
    %1290 = vmatprep.subr.mxu0 0.0
    %1291 = vmatpush1.msra.mxu0 0.0
    %1292 = vmatprep.subr.mxu0 0.0
    %1293 = vmatpush1.msra.mxu0 0.0
    %1294 = vmatprep.subr.mxu0 0.0
    %1295 = vmatpush1.msra.mxu0 0.0
    %1296 = vmatprep.subr.mxu0 0.0
    %1297 = vmatpush1.msra.mxu0 0.0
    %1298 = vmatprep.subr.mxu0 0.0
    %1299 = vmatpush1.msra.mxu0 0.0
    %1300 = vmatprep.mubr.f32.mxu0 0.0
    %1301 = vmatmul.mubr.f32.gmra.mrb[0].mxu0 %v1234
    %v1302 = vpop.f32.mrb[0].mxu0
    %v1303 = vadd.f32 %v370, %v1302
    %v1304 = vpop.f32.mrb[0].mxu0
    %1305 = vdwg.mxu0
    %v1306 = vxor.u32 %v1303, 2147483648
    %v1307 = vmul.f32 %v1306, 1.442695
    %v1308 = vpow.pop %v1307
    %v1309 = vadd.f32 %v1308, 1.0
    %v1310 = vrcp.pop %v1309
    %v1311 = vmul.f32 1.0, %v1310
    %v1312 = vtanh.pop %v1303
    %v1313 = vmul.f32 %v1311, %v1108
    %1315 = vrot.lane.b32.xlu0 %v1312, 64
    %v1316 = vpop.permute.xlu0 %1315
    %v1318 = vmul.f32 %v1311, %v1316
    %1320 = vrot.lane.b32.xlu0 %v1318, 32
    %v1321 = vpop.permute.xlu0 %1320
    %v1323 = vadd.f32 %v1313, %v1321
    %v1324 = vtanh.pop %v1323
    %1326 = vrot.lane.b32.xlu0 %v1324, 64
    %v1327 = vpop.permute.xlu0 %1326
    %v1329 = vmul.f32 %v1311, %v1327
    %v1330 = vmax.f32 %v1329, 0.0
    %1332 = vrot.lane.b32.xlu0 %v1330, 32
    %v1333 = vpop.permute.xlu0 %1332
    %1335 = vst.msk [vmem:[#allocation2 + $0x20] sm:$0xff] %vm262, %v1333
    %1336 = vset.pattern.permute.xlu0 5
    %1337 = vperm.xlu0 %1336, %v248
    %v1338 = vpop.permute.xlu0 %1337
    %v1340 = vmul.f32 %v1338, %v258
    %v1341 = vadd.f32 %v215, %v1340
    %v1342 = vsel %vm262, %v1226, 0
    %1344 = vmatprep.subr.mxu0 0.0
    %1345 = vmatpush1.msra.mxu0 %v45
    %1346 = vmatprep.subr.mxu0 0.0
    %1347 = vmatpush1.msra.mxu0 %v46
    %1348 = vmatprep.subr.mxu0 0.0
    %1349 = vmatpush1.msra.mxu0 %v47
    %1350 = vmatprep.subr.mxu0 0.0
    %1351 = vmatpush1.msra.mxu0 %v48
    %1352 = vmatprep.subr.mxu0 0.0
    %1353 = vmatpush1.msra.mxu0 0.0
    %1354 = vmatprep.subr.mxu0 0.0
    %1355 = vmatpush1.msra.mxu0 0.0
    %1356 = vmatprep.subr.mxu0 0.0
    %1357 = vmatpush1.msra.mxu0 0.0
    %1358 = vmatprep.subr.mxu0 0.0
    %1359 = vmatpush1.msra.mxu0 0.0
    %1360 = vmatprep.subr.mxu0 0.0
    %1361 = vmatpush1.msra.mxu0 0.0
    %1362 = vmatprep.subr.mxu0 0.0
    %1363 = vmatpush1.msra.mxu0 0.0
    %1364 = vmatprep.subr.mxu0 0.0
    %1365 = vmatpush1.msra.mxu0 0.0
    %1366 = vmatprep.subr.mxu0 0.0
    %1367 = vmatpush1.msra.mxu0 0.0
    %1368 = vmatprep.subr.mxu0 0.0
    %1369 = vmatpush1.msra.mxu0 0.0
    %1370 = vmatprep.subr.mxu0 0.0
    %1371 = vmatpush1.msra.mxu0 0.0
    %1372 = vmatprep.subr.mxu0 0.0
    %1373 = vmatpush1.msra.mxu0 0.0
    %1374 = vmatprep.subr.mxu0 0.0
    %1375 = vmatpush1.msra.mxu0 0.0
    %1376 = vmatprep.subr.mxu0 0.0
    %1377 = vmatpush1.msra.mxu0 0.0
    %1378 = vmatprep.subr.mxu0 0.0
    %1379 = vmatpush1.msra.mxu0 0.0
    %1380 = vmatprep.subr.mxu0 0.0
    %1381 = vmatpush1.msra.mxu0 0.0
    %1382 = vmatprep.subr.mxu0 0.0
    %1383 = vmatpush1.msra.mxu0 0.0
    %1384 = vmatprep.subr.mxu0 0.0
    %1385 = vmatpush1.msra.mxu0 0.0
    %1386 = vmatprep.subr.mxu0 0.0
    %1387 = vmatpush1.msra.mxu0 0.0
    %1388 = vmatprep.subr.mxu0 0.0
    %1389 = vmatpush1.msra.mxu0 0.0
    %1390 = vmatprep.subr.mxu0 0.0
    %1391 = vmatpush1.msra.mxu0 0.0
    %1392 = vmatprep.subr.mxu0 0.0
    %1393 = vmatpush1.msra.mxu0 0.0
    %1394 = vmatprep.subr.mxu0 0.0
    %1395 = vmatpush1.msra.mxu0 0.0
    %1396 = vmatprep.subr.mxu0 0.0
    %1397 = vmatpush1.msra.mxu0 0.0
    %1398 = vmatprep.subr.mxu0 0.0
    %1399 = vmatpush1.msra.mxu0 0.0
    %1400 = vmatprep.subr.mxu0 0.0
    %1401 = vmatpush1.msra.mxu0 0.0
    %1402 = vmatprep.subr.mxu0 0.0
    %1403 = vmatpush1.msra.mxu0 0.0
    %1404 = vmatprep.subr.mxu0 0.0
    %1405 = vmatpush1.msra.mxu0 0.0
    %1406 = vmatprep.subr.mxu0 0.0
    %1407 = vmatpush1.msra.mxu0 0.0
    %1408 = vmatprep.mubr.f32.mxu0 0.0
    %1409 = vmatmul.mubr.f32.gmra.mrb[0].mxu0 %v1342
    %v1410 = vpop.f32.mrb[0].mxu0
    %v1411 = vadd.f32 0.0, %v1410
    %v1412 = vpop.f32.mrb[0].mxu0
    %1413 = vdwg.mxu0
    %v1414 = vadd.f32 %v1341, %v1411
    %v1415 = vxor.u32 %v1414, 2147483648
    %v1416 = vmul.f32 %v1415, 1.442695
    %v1417 = vpow.pop %v1416
    %v1418 = vadd.f32 %v1417, 1.0
    %v1419 = vrcp.pop %v1418
    %v1420 = vmul.f32 1.0, %v1419
    %v1421 = vtanh.pop %v1414
    %v1422 = vmul.f32 %v1420, %v1217
    %1424 = vrot.lane.b32.xlu0 %v1421, 64
    %v1425 = vpop.permute.xlu0 %1424
    %v1427 = vmul.f32 %v1420, %v1425
    %1429 = vrot.lane.b32.xlu0 %v1427, 32
    %v1430 = vpop.permute.xlu0 %1429
    %v1432 = vadd.f32 %v1422, %v1430
    %v1433 = vtanh.pop %v1432
    %1435 = vrot.lane.b32.xlu0 %v1433, 64
    %v1436 = vpop.permute.xlu0 %1435
    %v1438 = vmul.f32 %v1420, %v1436
    %1440 = vrot.lane.b32.xlu0 %v1438, 32
    %v1441 = vpop.permute.xlu0 %1440
    %1444 = vrot.lane.b32.xlu0 %v1329, 64
    %v1445 = vpop.permute.xlu0 %1444
    %v1447 = vsel %vm262, %v1441, %v1445
    %v1449 = vsel %vm372, %v1447, 0
    %1451 = vmatprep.subr.mxu0 0.0
    %1452 = vmatpush1.msra.mxu0 %v54
    %1453 = vmatprep.subr.mxu0 0.0
    %1454 = vmatpush1.msra.mxu0 %v55
    %1455 = vmatprep.subr.mxu0 0.0
    %1456 = vmatpush1.msra.mxu0 %v56
    %1457 = vmatprep.subr.mxu0 0.0
    %1458 = vmatpush1.msra.mxu0 %v57
    %1459 = vmatprep.subr.mxu0 0.0
    %1460 = vmatpush1.msra.mxu0 %v58
    %1461 = vmatprep.subr.mxu0 0.0
    %1462 = vmatpush1.msra.mxu0 %v59
    %1463 = vmatprep.subr.mxu0 0.0
    %1464 = vmatpush1.msra.mxu0 %v60
    %1465 = vmatprep.subr.mxu0 0.0
    %1466 = vmatpush1.msra.mxu0 %v61
    %1467 = vmatprep.subr.mxu0 0.0
    %1468 = vmatpush1.msra.mxu0 0.0
    %1469 = vmatprep.subr.mxu0 0.0
    %1470 = vmatpush1.msra.mxu0 0.0
    %1471 = vmatprep.subr.mxu0 0.0
    %1472 = vmatpush1.msra.mxu0 0.0
    %1473 = vmatprep.subr.mxu0 0.0
    %1474 = vmatpush1.msra.mxu0 0.0
    %1475 = vmatprep.subr.mxu0 0.0
    %1476 = vmatpush1.msra.mxu0 0.0
    %1477 = vmatprep.subr.mxu0 0.0
    %1478 = vmatpush1.msra.mxu0 0.0
    %1479 = vmatprep.subr.mxu0 0.0
    %1480 = vmatpush1.msra.mxu0 0.0
    %1481 = vmatprep.subr.mxu0 0.0
    %1482 = vmatpush1.msra.mxu0 0.0
    %1483 = vmatprep.subr.mxu0 0.0
    %1484 = vmatpush1.msra.mxu0 0.0
    %1485 = vmatprep.subr.mxu0 0.0
    %1486 = vmatpush1.msra.mxu0 0.0
    %1487 = vmatprep.subr.mxu0 0.0
    %1488 = vmatpush1.msra.mxu0 0.0
    %1489 = vmatprep.subr.mxu0 0.0
    %1490 = vmatpush1.msra.mxu0 0.0
    %1491 = vmatprep.subr.mxu0 0.0
    %1492 = vmatpush1.msra.mxu0 0.0
    %1493 = vmatprep.subr.mxu0 0.0
    %1494 = vmatpush1.msra.mxu0 0.0
    %1495 = vmatprep.subr.mxu0 0.0
    %1496 = vmatpush1.msra.mxu0 0.0
    %1497 = vmatprep.subr.mxu0 0.0
    %1498 = vmatpush1.msra.mxu0 0.0
    %1499 = vmatprep.subr.mxu0 0.0
    %1500 = vmatpush1.msra.mxu0 0.0
    %1501 = vmatprep.subr.mxu0 0.0
    %1502 = vmatpush1.msra.mxu0 0.0
    %1503 = vmatprep.subr.mxu0 0.0
    %1504 = vmatpush1.msra.mxu0 0.0
    %1505 = vmatprep.subr.mxu0 0.0
    %1506 = vmatpush1.msra.mxu0 0.0
    %1507 = vmatprep.subr.mxu0 0.0
    %1508 = vmatpush1.msra.mxu0 0.0
    %1509 = vmatprep.subr.mxu0 0.0
    %1510 = vmatpush1.msra.mxu0 0.0
    %1511 = vmatprep.subr.mxu0 0.0
    %1512 = vmatpush1.msra.mxu0 0.0
    %1513 = vmatprep.subr.mxu0 0.0
    %1514 = vmatpush1.msra.mxu0 0.0
    %1515 = vmatprep.mubr.f32.mxu0 0.0
    %1516 = vmatmul.mubr.f32.gmra.mrb[0].mxu0 %v1449
    %v1517 = vpop.f32.mrb[0].mxu0
    %v1518 = vadd.f32 %v370, %v1517
    %v1519 = vpop.f32.mrb[0].mxu0
    %1520 = vdwg.mxu0
    %v1521 = vxor.u32 %v1518, 2147483648
    %v1522 = vmul.f32 %v1521, 1.442695
    %v1523 = vpow.pop %v1522
    %v1524 = vadd.f32 %v1523, 1.0
    %v1525 = vrcp.pop %v1524
    %v1526 = vmul.f32 1.0, %v1525
    %v1527 = vtanh.pop %v1518
    %v1528 = vmul.f32 %v1526, %v1323
    %1530 = vrot.lane.b32.xlu0 %v1527, 64
    %v1531 = vpop.permute.xlu0 %1530
    %v1533 = vmul.f32 %v1526, %v1531
    %1535 = vrot.lane.b32.xlu0 %v1533, 32
    %v1536 = vpop.permute.xlu0 %1535
    %v1538 = vadd.f32 %v1528, %v1536
    %v1539 = vtanh.pop %v1538
    %1541 = vrot.lane.b32.xlu0 %v1539, 64
    %v1542 = vpop.permute.xlu0 %1541
    %v1544 = vmul.f32 %v1526, %v1542
    %v1545 = vmax.f32 %v1544, 0.0
    %1547 = vrot.lane.b32.xlu0 %v1545, 32
    %v1548 = vpop.permute.xlu0 %1547
    %1550 = vst.msk [vmem:[#allocation2 + $0x28] sm:$0xff] %vm262, %v1548
    %1551 = vset.pattern.permute.xlu0 6
    %1552 = vperm.xlu0 %1551, %v248
    %v1553 = vpop.permute.xlu0 %1552
    %v1555 = vmul.f32 %v1553, %v258
    %v1556 = vadd.f32 %v220, %v1555
    %v1557 = vsel %vm262, %v1441, 0
    %1559 = vmatprep.subr.mxu0 0.0
    %1560 = vmatpush1.msra.mxu0 %v45
    %1561 = vmatprep.subr.mxu0 0.0
    %1562 = vmatpush1.msra.mxu0 %v46
    %1563 = vmatprep.subr.mxu0 0.0
    %1564 = vmatpush1.msra.mxu0 %v47
    %1565 = vmatprep.subr.mxu0 0.0
    %1566 = vmatpush1.msra.mxu0 %v48
    %1567 = vmatprep.subr.mxu0 0.0
    %1568 = vmatpush1.msra.mxu0 0.0
    %1569 = vmatprep.subr.mxu0 0.0
    %1570 = vmatpush1.msra.mxu0 0.0
    %1571 = vmatprep.subr.mxu0 0.0
    %1572 = vmatpush1.msra.mxu0 0.0
    %1573 = vmatprep.subr.mxu0 0.0
    %1574 = vmatpush1.msra.mxu0 0.0
    %1575 = vmatprep.subr.mxu0 0.0
    %1576 = vmatpush1.msra.mxu0 0.0
    %1577 = vmatprep.subr.mxu0 0.0
    %1578 = vmatpush1.msra.mxu0 0.0
    %1579 = vmatprep.subr.mxu0 0.0
    %1580 = vmatpush1.msra.mxu0 0.0
    %1581 = vmatprep.subr.mxu0 0.0
    %1582 = vmatpush1.msra.mxu0 0.0
    %1583 = vmatprep.subr.mxu0 0.0
    %1584 = vmatpush1.msra.mxu0 0.0
    %1585 = vmatprep.subr.mxu0 0.0
    %1586 = vmatpush1.msra.mxu0 0.0
    %1587 = vmatprep.subr.mxu0 0.0
    %1588 = vmatpush1.msra.mxu0 0.0
    %1589 = vmatprep.subr.mxu0 0.0
    %1590 = vmatpush1.msra.mxu0 0.0
    %1591 = vmatprep.subr.mxu0 0.0
    %1592 = vmatpush1.msra.mxu0 0.0
    %1593 = vmatprep.subr.mxu0 0.0
    %1594 = vmatpush1.msra.mxu0 0.0
    %1595 = vmatprep.subr.mxu0 0.0
    %1596 = vmatpush1.msra.mxu0 0.0
    %1597 = vmatprep.subr.mxu0 0.0
    %1598 = vmatpush1.msra.mxu0 0.0
    %1599 = vmatprep.subr.mxu0 0.0
    %1600 = vmatpush1.msra.mxu0 0.0
    %1601 = vmatprep.subr.mxu0 0.0
    %1602 = vmatpush1.msra.mxu0 0.0
    %1603 = vmatprep.subr.mxu0 0.0
    %1604 = vmatpush1.msra.mxu0 0.0
    %1605 = vmatprep.subr.mxu0 0.0
    %1606 = vmatpush1.msra.mxu0 0.0
    %1607 = vmatprep.subr.mxu0 0.0
    %1608 = vmatpush1.msra.mxu0 0.0
    %1609 = vmatprep.subr.mxu0 0.0
    %1610 = vmatpush1.msra.mxu0 0.0
    %1611 = vmatprep.subr.mxu0 0.0
    %1612 = vmatpush1.msra.mxu0 0.0
    %1613 = vmatprep.subr.mxu0 0.0
    %1614 = vmatpush1.msra.mxu0 0.0
    %1615 = vmatprep.subr.mxu0 0.0
    %1616 = vmatpush1.msra.mxu0 0.0
    %1617 = vmatprep.subr.mxu0 0.0
    %1618 = vmatpush1.msra.mxu0 0.0
    %1619 = vmatprep.subr.mxu0 0.0
    %1620 = vmatpush1.msra.mxu0 0.0
    %1621 = vmatprep.subr.mxu0 0.0
    %1622 = vmatpush1.msra.mxu0 0.0
    %1623 = vmatprep.mubr.f32.mxu0 0.0
    %1624 = vmatmul.mubr.f32.gmra.mrb[0].mxu0 %v1557
    %v1625 = vpop.f32.mrb[0].mxu0
    %v1626 = vadd.f32 0.0, %v1625
    %v1627 = vpop.f32.mrb[0].mxu0
    %1628 = vdwg.mxu0
    %v1629 = vadd.f32 %v1556, %v1626
    %v1630 = vxor.u32 %v1629, 2147483648
    %v1631 = vmul.f32 %v1630, 1.442695
    %v1632 = vpow.pop %v1631
    %v1633 = vadd.f32 %v1632, 1.0
    %v1634 = vrcp.pop %v1633
    %v1635 = vmul.f32 1.0, %v1634
    %v1636 = vtanh.pop %v1629
    %v1637 = vmul.f32 %v1635, %v1432
    %1639 = vrot.lane.b32.xlu0 %v1636, 64
    %v1640 = vpop.permute.xlu0 %1639
    %v1642 = vmul.f32 %v1635, %v1640
    %1644 = vrot.lane.b32.xlu0 %v1642, 32
    %v1645 = vpop.permute.xlu0 %1644
    %v1647 = vadd.f32 %v1637, %v1645
    %v1648 = vtanh.pop %v1647
    %1650 = vrot.lane.b32.xlu0 %v1648, 64
    %v1651 = vpop.permute.xlu0 %1650
    %v1653 = vmul.f32 %v1635, %v1651
    %1655 = vrot.lane.b32.xlu0 %v1653, 32
    %v1656 = vpop.permute.xlu0 %1655
    %1659 = vrot.lane.b32.xlu0 %v1544, 64
    %v1660 = vpop.permute.xlu0 %1659
    %v1662 = vsel %vm262, %v1656, %v1660
    %v1664 = vsel %vm372, %v1662, 0
    %1666 = vmatprep.subr.mxu0 0.0
    %1667 = vmatpush1.msra.mxu0 %v54
    %1668 = vmatprep.subr.mxu0 0.0
    %1669 = vmatpush1.msra.mxu0 %v55
    %1670 = vmatprep.subr.mxu0 0.0
    %1671 = vmatpush1.msra.mxu0 %v56
    %1672 = vmatprep.subr.mxu0 0.0
    %1673 = vmatpush1.msra.mxu0 %v57
    %1674 = vmatprep.subr.mxu0 0.0
    %1675 = vmatpush1.msra.mxu0 %v58
    %1676 = vmatprep.subr.mxu0 0.0
    %1677 = vmatpush1.msra.mxu0 %v59
    %1678 = vmatprep.subr.mxu0 0.0
    %1679 = vmatpush1.msra.mxu0 %v60
    %1680 = vmatprep.subr.mxu0 0.0
    %1681 = vmatpush1.msra.mxu0 %v61
    %1682 = vmatprep.subr.mxu0 0.0
    %1683 = vmatpush1.msra.mxu0 0.0
    %1684 = vmatprep.subr.mxu0 0.0
    %1685 = vmatpush1.msra.mxu0 0.0
    %1686 = vmatprep.subr.mxu0 0.0
    %1687 = vmatpush1.msra.mxu0 0.0
    %1688 = vmatprep.subr.mxu0 0.0
    %1689 = vmatpush1.msra.mxu0 0.0
    %1690 = vmatprep.subr.mxu0 0.0
    %1691 = vmatpush1.msra.mxu0 0.0
    %1692 = vmatprep.subr.mxu0 0.0
    %1693 = vmatpush1.msra.mxu0 0.0
    %1694 = vmatprep.subr.mxu0 0.0
    %1695 = vmatpush1.msra.mxu0 0.0
    %1696 = vmatprep.subr.mxu0 0.0
    %1697 = vmatpush1.msra.mxu0 0.0
    %1698 = vmatprep.subr.mxu0 0.0
    %1699 = vmatpush1.msra.mxu0 0.0
    %1700 = vmatprep.subr.mxu0 0.0
    %1701 = vmatpush1.msra.mxu0 0.0
    %1702 = vmatprep.subr.mxu0 0.0
    %1703 = vmatpush1.msra.mxu0 0.0
    %1704 = vmatprep.subr.mxu0 0.0
    %1705 = vmatpush1.msra.mxu0 0.0
    %1706 = vmatprep.subr.mxu0 0.0
    %1707 = vmatpush1.msra.mxu0 0.0
    %1708 = vmatprep.subr.mxu0 0.0
    %1709 = vmatpush1.msra.mxu0 0.0
    %1710 = vmatprep.subr.mxu0 0.0
    %1711 = vmatpush1.msra.mxu0 0.0
    %1712 = vmatprep.subr.mxu0 0.0
    %1713 = vmatpush1.msra.mxu0 0.0
    %1714 = vmatprep.subr.mxu0 0.0
    %1715 = vmatpush1.msra.mxu0 0.0
    %1716 = vmatprep.subr.mxu0 0.0
    %1717 = vmatpush1.msra.mxu0 0.0
    %1718 = vmatprep.subr.mxu0 0.0
    %1719 = vmatpush1.msra.mxu0 0.0
    %1720 = vmatprep.subr.mxu0 0.0
    %1721 = vmatpush1.msra.mxu0 0.0
    %1722 = vmatprep.subr.mxu0 0.0
    %1723 = vmatpush1.msra.mxu0 0.0
    %1724 = vmatprep.subr.mxu0 0.0
    %1725 = vmatpush1.msra.mxu0 0.0
    %1726 = vmatprep.subr.mxu0 0.0
    %1727 = vmatpush1.msra.mxu0 0.0
    %1728 = vmatprep.subr.mxu0 0.0
    %1729 = vmatpush1.msra.mxu0 0.0
    %1730 = vmatprep.mubr.f32.mxu0 0.0
    %1731 = vmatmul.mubr.f32.gmra.mrb[0].mxu0 %v1664
    %v1732 = vpop.f32.mrb[0].mxu0
    %v1733 = vadd.f32 %v370, %v1732
    %v1734 = vpop.f32.mrb[0].mxu0
    %1735 = vdwg.mxu0
    %v1736 = vxor.u32 %v1733, 2147483648
    %v1737 = vmul.f32 %v1736, 1.442695
    %v1738 = vpow.pop %v1737
    %v1739 = vadd.f32 %v1738, 1.0
    %v1740 = vrcp.pop %v1739
    %v1741 = vmul.f32 1.0, %v1740
    %v1742 = vtanh.pop %v1733
    %v1743 = vmul.f32 %v1741, %v1538
    %1745 = vrot.lane.b32.xlu0 %v1742, 64
    %v1746 = vpop.permute.xlu0 %1745
    %v1748 = vmul.f32 %v1741, %v1746
    %1750 = vrot.lane.b32.xlu0 %v1748, 32
    %v1751 = vpop.permute.xlu0 %1750
    %v1753 = vadd.f32 %v1743, %v1751
    %v1754 = vtanh.pop %v1753
    %1756 = vrot.lane.b32.xlu0 %v1754, 64
    %v1757 = vpop.permute.xlu0 %1756
    %v1759 = vmul.f32 %v1741, %v1757
    %v1760 = vmax.f32 %v1759, 0.0
    %1762 = vrot.lane.b32.xlu0 %v1760, 32
    %v1763 = vpop.permute.xlu0 %1762
    %1765 = vst.msk [vmem:[#allocation2 + $0x30] sm:$0xff] %vm262, %v1763
    %1766 = vset.pattern.permute.xlu0 7
    %1767 = vperm.xlu0 %1766, %v248
    %v1768 = vpop.permute.xlu0 %1767
    %v1770 = vmul.f32 %v1768, %v258
    %v1771 = vadd.f32 %v225, %v1770
    %v1772 = vsel %vm262, %v1656, 0
    %1774 = vmatprep.subr.mxu0 0.0
    %1775 = vmatpush1.msra.mxu0 %v45
    %1776 = vmatprep.subr.mxu0 0.0
    %1777 = vmatpush1.msra.mxu0 %v46
    %1778 = vmatprep.subr.mxu0 0.0
    %1779 = vmatpush1.msra.mxu0 %v47
    %1780 = vmatprep.subr.mxu0 0.0
    %1781 = vmatpush1.msra.mxu0 %v48
    %1782 = vmatprep.subr.mxu0 0.0
    %1783 = vmatpush1.msra.mxu0 0.0
    %1784 = vmatprep.subr.mxu0 0.0
    %1785 = vmatpush1.msra.mxu0 0.0
    %1786 = vmatprep.subr.mxu0 0.0
    %1787 = vmatpush1.msra.mxu0 0.0
    %1788 = vmatprep.subr.mxu0 0.0
    %1789 = vmatpush1.msra.mxu0 0.0
    %1790 = vmatprep.subr.mxu0 0.0
    %1791 = vmatpush1.msra.mxu0 0.0
    %1792 = vmatprep.subr.mxu0 0.0
    %1793 = vmatpush1.msra.mxu0 0.0
    %1794 = vmatprep.subr.mxu0 0.0
    %1795 = vmatpush1.msra.mxu0 0.0
    %1796 = vmatprep.subr.mxu0 0.0
    %1797 = vmatpush1.msra.mxu0 0.0
    %1798 = vmatprep.subr.mxu0 0.0
    %1799 = vmatpush1.msra.mxu0 0.0
    %1800 = vmatprep.subr.mxu0 0.0
    %1801 = vmatpush1.msra.mxu0 0.0
    %1802 = vmatprep.subr.mxu0 0.0
    %1803 = vmatpush1.msra.mxu0 0.0
    %1804 = vmatprep.subr.mxu0 0.0
    %1805 = vmatpush1.msra.mxu0 0.0
    %1806 = vmatprep.subr.mxu0 0.0
    %1807 = vmatpush1.msra.mxu0 0.0
    %1808 = vmatprep.subr.mxu0 0.0
    %1809 = vmatpush1.msra.mxu0 0.0
    %1810 = vmatprep.subr.mxu0 0.0
    %1811 = vmatpush1.msra.mxu0 0.0
    %1812 = vmatprep.subr.mxu0 0.0
    %1813 = vmatpush1.msra.mxu0 0.0
    %1814 = vmatprep.subr.mxu0 0.0
    %1815 = vmatpush1.msra.mxu0 0.0
    %1816 = vmatprep.subr.mxu0 0.0
    %1817 = vmatpush1.msra.mxu0 0.0
    %1818 = vmatprep.subr.mxu0 0.0
    %1819 = vmatpush1.msra.mxu0 0.0
    %1820 = vmatprep.subr.mxu0 0.0
    %1821 = vmatpush1.msra.mxu0 0.0
    %1822 = vmatprep.subr.mxu0 0.0
    %1823 = vmatpush1.msra.mxu0 0.0
    %1824 = vmatprep.subr.mxu0 0.0
    %1825 = vmatpush1.msra.mxu0 0.0
    %1826 = vmatprep.subr.mxu0 0.0
    %1827 = vmatpush1.msra.mxu0 0.0
    %1828 = vmatprep.subr.mxu0 0.0
    %1829 = vmatpush1.msra.mxu0 0.0
    %1830 = vmatprep.subr.mxu0 0.0
    %1831 = vmatpush1.msra.mxu0 0.0
    %1832 = vmatprep.subr.mxu0 0.0
    %1833 = vmatpush1.msra.mxu0 0.0
    %1834 = vmatprep.subr.mxu0 0.0
    %1835 = vmatpush1.msra.mxu0 0.0
    %1836 = vmatprep.subr.mxu0 0.0
    %1837 = vmatpush1.msra.mxu0 0.0
    %1838 = vmatprep.mubr.f32.mxu0 0.0
    %1839 = vmatmul.mubr.f32.gmra.mrb[0].mxu0 %v1772
    %v1840 = vpop.f32.mrb[0].mxu0
    %v1841 = vadd.f32 0.0, %v1840
    %v1842 = vpop.f32.mrb[0].mxu0
    %1843 = vdwg.mxu0
    %v1844 = vadd.f32 %v1771, %v1841
    %v1845 = vxor.u32 %v1844, 2147483648
    %v1846 = vmul.f32 %v1845, 1.442695
    %v1847 = vpow.pop %v1846
    %v1848 = vadd.f32 %v1847, 1.0
    %v1849 = vrcp.pop %v1848
    %v1850 = vmul.f32 1.0, %v1849
    %v1851 = vtanh.pop %v1844
    %v1852 = vmul.f32 %v1850, %v1647
    %1854 = vrot.lane.b32.xlu0 %v1851, 64
    %v1855 = vpop.permute.xlu0 %1854
    %v1857 = vmul.f32 %v1850, %v1855
    %1859 = vrot.lane.b32.xlu0 %v1857, 32
    %v1860 = vpop.permute.xlu0 %1859
    %v1862 = vadd.f32 %v1852, %v1860
    %v1863 = vtanh.pop %v1862
    %1865 = vrot.lane.b32.xlu0 %v1863, 64
    %v1866 = vpop.permute.xlu0 %1865
    %v1868 = vmul.f32 %v1850, %v1866
    %1870 = vrot.lane.b32.xlu0 %v1868, 32
    %v1871 = vpop.permute.xlu0 %1870
    %1874 = vrot.lane.b32.xlu0 %v1759, 64
    %v1875 = vpop.permute.xlu0 %1874
    %v1877 = vsel %vm262, %v1871, %v1875
    %v1879 = vsel %vm372, %v1877, 0
    %1881 = vmatprep.subr.mxu0 0.0
    %1882 = vmatpush1.msra.mxu0 %v54
    %1883 = vmatprep.subr.mxu0 0.0
    %1884 = vmatpush1.msra.mxu0 %v55
    %1885 = vmatprep.subr.mxu0 0.0
    %1886 = vmatpush1.msra.mxu0 %v56
    %1887 = vmatprep.subr.mxu0 0.0
    %1888 = vmatpush1.msra.mxu0 %v57
    %1889 = vmatprep.subr.mxu0 0.0
    %1890 = vmatpush1.msra.mxu0 %v58
    %1891 = vmatprep.subr.mxu0 0.0
    %1892 = vmatpush1.msra.mxu0 %v59
    %1893 = vmatprep.subr.mxu0 0.0
    %1894 = vmatpush1.msra.mxu0 %v60
    %1895 = vmatprep.subr.mxu0 0.0
    %1896 = vmatpush1.msra.mxu0 %v61
    %1897 = vmatprep.subr.mxu0 0.0
    %1898 = vmatpush1.msra.mxu0 0.0
    %1899 = vmatprep.subr.mxu0 0.0
    %1900 = vmatpush1.msra.mxu0 0.0
    %1901 = vmatprep.subr.mxu0 0.0
    %1902 = vmatpush1.msra.mxu0 0.0
    %1903 = vmatprep.subr.mxu0 0.0
    %1904 = vmatpush1.msra.mxu0 0.0
    %1905 = vmatprep.subr.mxu0 0.0
    %1906 = vmatpush1.msra.mxu0 0.0
    %1907 = vmatprep.subr.mxu0 0.0
    %1908 = vmatpush1.msra.mxu0 0.0
    %1909 = vmatprep.subr.mxu0 0.0
    %1910 = vmatpush1.msra.mxu0 0.0
    %1911 = vmatprep.subr.mxu0 0.0
    %1912 = vmatpush1.msra.mxu0 0.0
    %1913 = vmatprep.subr.mxu0 0.0
    %1914 = vmatpush1.msra.mxu0 0.0
    %1915 = vmatprep.subr.mxu0 0.0
    %1916 = vmatpush1.msra.mxu0 0.0
    %1917 = vmatprep.subr.mxu0 0.0
    %1918 = vmatpush1.msra.mxu0 0.0
    %1919 = vmatprep.subr.mxu0 0.0
    %1920 = vmatpush1.msra.mxu0 0.0
    %1921 = vmatprep.subr.mxu0 0.0
    %1922 = vmatpush1.msra.mxu0 0.0
    %1923 = vmatprep.subr.mxu0 0.0
    %1924 = vmatpush1.msra.mxu0 0.0
    %1925 = vmatprep.subr.mxu0 0.0
    %1926 = vmatpush1.msra.mxu0 0.0
    %1927 = vmatprep.subr.mxu0 0.0
    %1928 = vmatpush1.msra.mxu0 0.0
    %1929 = vmatprep.subr.mxu0 0.0
    %1930 = vmatpush1.msra.mxu0 0.0
    %1931 = vmatprep.subr.mxu0 0.0
    %1932 = vmatpush1.msra.mxu0 0.0
    %1933 = vmatprep.subr.mxu0 0.0
    %1934 = vmatpush1.msra.mxu0 0.0
    %1935 = vmatprep.subr.mxu0 0.0
    %1936 = vmatpush1.msra.mxu0 0.0
    %1937 = vmatprep.subr.mxu0 0.0
    %1938 = vmatpush1.msra.mxu0 0.0
    %1939 = vmatprep.subr.mxu0 0.0
    %1940 = vmatpush1.msra.mxu0 0.0
    %1941 = vmatprep.subr.mxu0 0.0
    %1942 = vmatpush1.msra.mxu0 0.0
    %1943 = vmatprep.subr.mxu0 0.0
    %1944 = vmatpush1.msra.mxu0 0.0
    %1945 = vmatprep.mubr.f32.mxu0 0.0
    %1946 = vmatmul.mubr.f32.gmra.mrb[0].mxu0 %v1879
    %v1947 = vpop.f32.mrb[0].mxu0
    %v1948 = vadd.f32 %v370, %v1947
    %v1949 = vpop.f32.mrb[0].mxu0
    %1950 = vdwg.mxu0
    %v1951 = vxor.u32 %v1948, 2147483648
    %v1952 = vmul.f32 %v1951, 1.442695
    %v1953 = vpow.pop %v1952
    %v1954 = vadd.f32 %v1953, 1.0
    %v1955 = vrcp.pop %v1954
    %v1956 = vmul.f32 1.0, %v1955
    %v1957 = vtanh.pop %v1948
    %v1958 = vmul.f32 %v1956, %v1753
    %1960 = vrot.lane.b32.xlu0 %v1957, 64
    %v1961 = vpop.permute.xlu0 %1960
    %v1963 = vmul.f32 %v1956, %v1961
    %1965 = vrot.lane.b32.xlu0 %v1963, 32
    %v1966 = vpop.permute.xlu0 %1965
    %v1968 = vadd.f32 %v1958, %v1966
    %v1969 = vtanh.pop %v1968
    %1971 = vrot.lane.b32.xlu0 %v1969, 64
    %v1972 = vpop.permute.xlu0 %1971
    %v1974 = vmul.f32 %v1956, %v1972
    %v1975 = vmax.f32 %v1974, 0.0
    %v1977 = vlaneseq
    %v1978 = vshrl.u32 %v1977, 7
    %v1979 = vsub.s32 0, %v1978
    %v1980 = vrot.slane %v53, %v1979
    %1983 = vrot.lane.b32.xlu0 %v1975, 32
    %v1984 = vpop.permute.xlu0 %1983
    %v1985 = vsel %vm262, %v1984, 0
    %1987 = vmatprep.subr.mxu0 0.0
    %1988 = vmatpush1.msra.mxu0 %v49
    %1989 = vmatprep.subr.mxu0 0.0
    %1990 = vmatpush1.msra.mxu0 %v50
    %1991 = vmatprep.subr.mxu0 0.0
    %1992 = vmatpush1.msra.mxu0 %v51
    %1993 = vmatprep.subr.mxu0 0.0
    %1994 = vmatpush1.msra.mxu0 %v52
    %1995 = vmatprep.subr.mxu0 0.0
    %1996 = vmatpush1.msra.mxu0 0.0
    %1997 = vmatprep.subr.mxu0 0.0
    %1998 = vmatpush1.msra.mxu0 0.0
    %1999 = vmatprep.subr.mxu0 0.0
    %2000 = vmatpush1.msra.mxu0 0.0
    %2001 = vmatprep.subr.mxu0 0.0
    %2002 = vmatpush1.msra.mxu0 0.0
    %2003 = vmatprep.subr.mxu0 0.0
    %2004 = vmatpush1.msra.mxu0 0.0
    %2005 = vmatprep.subr.mxu0 0.0
    %2006 = vmatpush1.msra.mxu0 0.0
    %2007 = vmatprep.subr.mxu0 0.0
    %2008 = vmatpush1.msra.mxu0 0.0
    %2009 = vmatprep.subr.mxu0 0.0
    %2010 = vmatpush1.msra.mxu0 0.0
    %2011 = vmatprep.subr.mxu0 0.0
    %2012 = vmatpush1.msra.mxu0 0.0
    %2013 = vmatprep.subr.mxu0 0.0
    %2014 = vmatpush1.msra.mxu0 0.0
    %2015 = vmatprep.subr.mxu0 0.0
    %2016 = vmatpush1.msra.mxu0 0.0
    %2017 = vmatprep.subr.mxu0 0.0
    %2018 = vmatpush1.msra.mxu0 0.0
    %2019 = vmatprep.subr.mxu0 0.0
    %2020 = vmatpush1.msra.mxu0 0.0
    %2021 = vmatprep.subr.mxu0 0.0
    %2022 = vmatpush1.msra.mxu0 0.0
    %2023 = vmatprep.subr.mxu0 0.0
    %2024 = vmatpush1.msra.mxu0 0.0
    %2025 = vmatprep.subr.mxu0 0.0
    %2026 = vmatpush1.msra.mxu0 0.0
    %2027 = vmatprep.subr.mxu0 0.0
    %2028 = vmatpush1.msra.mxu0 0.0
    %2029 = vmatprep.subr.mxu0 0.0
    %2030 = vmatpush1.msra.mxu0 0.0
    %2031 = vmatprep.subr.mxu0 0.0
    %2032 = vmatpush1.msra.mxu0 0.0
    %2033 = vmatprep.subr.mxu0 0.0
    %2034 = vmatpush1.msra.mxu0 0.0
    %2035 = vmatprep.subr.mxu0 0.0
    %2036 = vmatpush1.msra.mxu0 0.0
    %2037 = vmatprep.subr.mxu0 0.0
    %2038 = vmatpush1.msra.mxu0 0.0
    %2039 = vmatprep.subr.mxu0 0.0
    %2040 = vmatpush1.msra.mxu0 0.0
    %2041 = vmatprep.subr.mxu0 0.0
    %2042 = vmatpush1.msra.mxu0 0.0
    %2043 = vmatprep.subr.mxu0 0.0
    %2044 = vmatpush1.msra.mxu0 0.0
    %2045 = vmatprep.subr.mxu0 0.0
    %2046 = vmatpush1.msra.mxu0 0.0
    %2047 = vmatprep.subr.mxu0 0.0
    %2048 = vmatpush1.msra.mxu0 0.0
    %2049 = vmatprep.subr.mxu0 0.0
    %2050 = vmatpush1.msra.mxu0 0.0
    %2051 = vmatprep.mubr.f32.mxu0 0.0
    %2052 = vmatmul.mubr.f32.gmra.mrb[0].mxu0 %v1985
    %v2053 = vpop.f32.mrb[0].mxu0
    %v2054 = vadd.f32 %v1980, %v2053
    %v2055 = vpop.f32.mrb[0].mxu0
    %2056 = vdwg.mxu0
    %v2057 = vmax.f32 %v2054, 0.0
    %v2058 = vand.u32 2147483647, %v2054
    %v2059 = vsub.f32 0.0, %v2058
    %v2060 = vmul.f32 %v2059, 1.442695
    %v2061 = vpow.pop %v2060
    %v2062 = vadd.f32 %v2061, 1.0
    %v2063 = vlog2.pop %v2062
    %v2064 = vmul.f32 %v2063, 0.6931472
    %v2065 = vadd.f32 %v2057, %v2064
    %v2066 = vadd.f32 %v2065, 1e-06
    %2068 = vrot.lane.b32.xlu0 %v2054, 7
    %v2069 = vpop.permute.xlu0 %2068
    %vm2071 = vcmask 64568
    %2072 = vst.msk [vmem:[#allocation3] sm:$0xff] %vm2071, %v2069
    %2074 = vrot.lane.b32.xlu0 %v2066, 6
    %v2075 = vpop.permute.xlu0 %2074
    %2077 = vst.msk [vmem:[#allocation5] sm:$0xff] %vm2071, %v2075
    %v2078 = vld [vmem:[%s2] sm:$0xff]
    %2080 = vrot.lane.b32.xlu0 %v2078, 122
    %v2081 = vpop.permute.xlu0 %2080
    %v2083 = vmul.f32 %v2066, %v2081
    %2085 = vrot.lane.b32.xlu0 %v2083, 127
    %v2086 = vpop.permute.xlu0 %2085
    %v2088 = vadd.f32 %v2054, %v2086
    %vm2089 = vcmask 7168
    %2090 = vst.msk [vmem:[%s11] sm:$0xff] %vm2089, %v2088
    %2092 = vset.pattern.permute.xlu0 0
    %2093 = vperm.xlu0 %2092, %v2088
    %v2094 = vpop.permute.xlu0 %2093
    %v2096 = vmul.f32 %v2094, %v258
    %v2097 = vadd.f32 %v230, %v2096
    %v2098 = vsel %vm262, %v1871, 0
    %2100 = vmatprep.subr.mxu0 0.0
    %2101 = vmatpush1.msra.mxu0 %v45
    %2102 = vmatprep.subr.mxu0 0.0
    %2103 = vmatpush1.msra.mxu0 %v46
    %2104 = vmatprep.subr.mxu0 0.0
    %2105 = vmatpush1.msra.mxu0 %v47
    %2106 = vmatprep.subr.mxu0 0.0
    %2107 = vmatpush1.msra.mxu0 %v48
    %2108 = vmatprep.subr.mxu0 0.0
    %2109 = vmatpush1.msra.mxu0 0.0
    %2110 = vmatprep.subr.mxu0 0.0
    %2111 = vmatpush1.msra.mxu0 0.0
    %2112 = vmatprep.subr.mxu0 0.0
    %2113 = vmatpush1.msra.mxu0 0.0
    %2114 = vmatprep.subr.mxu0 0.0
    %2115 = vmatpush1.msra.mxu0 0.0
    %2116 = vmatprep.subr.mxu0 0.0
    %2117 = vmatpush1.msra.mxu0 0.0
    %2118 = vmatprep.subr.mxu0 0.0
    %2119 = vmatpush1.msra.mxu0 0.0
    %2120 = vmatprep.subr.mxu0 0.0
    %2121 = vmatpush1.msra.mxu0 0.0
    %2122 = vmatprep.subr.mxu0 0.0
    %2123 = vmatpush1.msra.mxu0 0.0
    %2124 = vmatprep.subr.mxu0 0.0
    %2125 = vmatpush1.msra.mxu0 0.0
    %2126 = vmatprep.subr.mxu0 0.0
    %2127 = vmatpush1.msra.mxu0 0.0
    %2128 = vmatprep.subr.mxu0 0.0
    %2129 = vmatpush1.msra.mxu0 0.0
    %2130 = vmatprep.subr.mxu0 0.0
    %2131 = vmatpush1.msra.mxu0 0.0
    %2132 = vmatprep.subr.mxu0 0.0
    %2133 = vmatpush1.msra.mxu0 0.0
    %2134 = vmatprep.subr.mxu0 0.0
    %2135 = vmatpush1.msra.mxu0 0.0
    %2136 = vmatprep.subr.mxu0 0.0
    %2137 = vmatpush1.msra.mxu0 0.0
    %2138 = vmatprep.subr.mxu0 0.0
    %2139 = vmatpush1.msra.mxu0 0.0
    %2140 = vmatprep.subr.mxu0 0.0
    %2141 = vmatpush1.msra.mxu0 0.0
    %2142 = vmatprep.subr.mxu0 0.0
    %2143 = vmatpush1.msra.mxu0 0.0
    %2144 = vmatprep.subr.mxu0 0.0
    %2145 = vmatpush1.msra.mxu0 0.0
    %2146 = vmatprep.subr.mxu0 0.0
    %2147 = vmatpush1.msra.mxu0 0.0
    %2148 = vmatprep.subr.mxu0 0.0
    %2149 = vmatpush1.msra.mxu0 0.0
    %2150 = vmatprep.subr.mxu0 0.0
    %2151 = vmatpush1.msra.mxu0 0.0
    %2152 = vmatprep.subr.mxu0 0.0
    %2153 = vmatpush1.msra.mxu0 0.0
    %2154 = vmatprep.subr.mxu0 0.0
    %2155 = vmatpush1.msra.mxu0 0.0
    %2156 = vmatprep.subr.mxu0 0.0
    %2157 = vmatpush1.msra.mxu0 0.0
    %2158 = vmatprep.subr.mxu0 0.0
    %2159 = vmatpush1.msra.mxu0 0.0
    %2160 = vmatprep.subr.mxu0 0.0
    %2161 = vmatpush1.msra.mxu0 0.0
    %2162 = vmatprep.subr.mxu0 0.0
    %2163 = vmatpush1.msra.mxu0 0.0
    %2164 = vmatprep.mubr.f32.mxu0 0.0
    %2165 = vmatmul.mubr.f32.gmra.mrb[0].mxu0 %v2098
    %v2166 = vpop.f32.mrb[0].mxu0
    %v2167 = vadd.f32 0.0, %v2166
    %v2168 = vpop.f32.mrb[0].mxu0
    %2169 = vdwg.mxu0
    %v2170 = vadd.f32 %v2097, %v2167
    %v2171 = vxor.u32 %v2170, 2147483648
    %v2172 = vmul.f32 %v2171, 1.442695
    %v2173 = vpow.pop %v2172
    %v2174 = vadd.f32 %v2173, 1.0
    %v2175 = vrcp.pop %v2174
    %v2176 = vmul.f32 1.0, %v2175
    %v2177 = vtanh.pop %v2170
    %v2178 = vmul.f32 %v2176, %v1862
    %2180 = vrot.lane.b32.xlu0 %v2177, 64
    %v2181 = vpop.permute.xlu0 %2180
    %v2183 = vmul.f32 %v2176, %v2181
    %2185 = vrot.lane.b32.xlu0 %v2183, 32
    %v2186 = vpop.permute.xlu0 %2185
    %v2188 = vadd.f32 %v2178, %v2186
    %v2189 = vtanh.pop %v2188
    %2191 = vrot.lane.b32.xlu0 %v2189, 64
    %v2192 = vpop.permute.xlu0 %2191
    %v2194 = vmul.f32 %v2176, %v2192
    %2196 = vrot.lane.b32.xlu0 %v2194, 32
    %v2197 = vpop.permute.xlu0 %2196
    %2200 = vrot.lane.b32.xlu0 %v1974, 64
    %v2201 = vpop.permute.xlu0 %2200
    %v2203 = vsel %vm262, %v2197, %v2201
    %v2205 = vsel %vm372, %v2203, 0
    %2207 = vmatprep.subr.mxu0 0.0
    %2208 = vmatpush1.msra.mxu0 %v54
    %2209 = vmatprep.subr.mxu0 0.0
    %2210 = vmatpush1.msra.mxu0 %v55
    %2211 = vmatprep.subr.mxu0 0.0
    %2212 = vmatpush1.msra.mxu0 %v56
    %2213 = vmatprep.subr.mxu0 0.0
    %2214 = vmatpush1.msra.mxu0 %v57
    %2215 = vmatprep.subr.mxu0 0.0
    %2216 = vmatpush1.msra.mxu0 %v58
    %2217 = vmatprep.subr.mxu0 0.0
    %2218 = vmatpush1.msra.mxu0 %v59
    %2219 = vmatprep.subr.mxu0 0.0
    %2220 = vmatpush1.msra.mxu0 %v60
    %2221 = vmatprep.subr.mxu0 0.0
    %2222 = vmatpush1.msra.mxu0 %v61
    %2223 = vmatprep.subr.mxu0 0.0
    %2224 = vmatpush1.msra.mxu0 0.0
    %2225 = vmatprep.subr.mxu0 0.0
    %2226 = vmatpush1.msra.mxu0 0.0
    %2227 = vmatprep.subr.mxu0 0.0
    %2228 = vmatpush1.msra.mxu0 0.0
    %2229 = vmatprep.subr.mxu0 0.0
    %2230 = vmatpush1.msra.mxu0 0.0
    %2231 = vmatprep.subr.mxu0 0.0
    %2232 = vmatpush1.msra.mxu0 0.0
    %2233 = vmatprep.subr.mxu0 0.0
    %2234 = vmatpush1.msra.mxu0 0.0
    %2235 = vmatprep.subr.mxu0 0.0
    %2236 = vmatpush1.msra.mxu0 0.0
    %2237 = vmatprep.subr.mxu0 0.0
    %2238 = vmatpush1.msra.mxu0 0.0
    %2239 = vmatprep.subr.mxu0 0.0
    %2240 = vmatpush1.msra.mxu0 0.0
    %2241 = vmatprep.subr.mxu0 0.0
    %2242 = vmatpush1.msra.mxu0 0.0
    %2243 = vmatprep.subr.mxu0 0.0
    %2244 = vmatpush1.msra.mxu0 0.0
    %2245 = vmatprep.subr.mxu0 0.0
    %2246 = vmatpush1.msra.mxu0 0.0
    %2247 = vmatprep.subr.mxu0 0.0
    %2248 = vmatpush1.msra.mxu0 0.0
    %2249 = vmatprep.subr.mxu0 0.0
    %2250 = vmatpush1.msra.mxu0 0.0
    %2251 = vmatprep.subr.mxu0 0.0
    %2252 = vmatpush1.msra.mxu0 0.0
    %2253 = vmatprep.subr.mxu0 0.0
    %2254 = vmatpush1.msra.mxu0 0.0
    %2255 = vmatprep.subr.mxu0 0.0
    %2256 = vmatpush1.msra.mxu0 0.0
    %2257 = vmatprep.subr.mxu0 0.0
    %2258 = vmatpush1.msra.mxu0 0.0
    %2259 = vmatprep.subr.mxu0 0.0
    %2260 = vmatpush1.msra.mxu0 0.0
    %2261 = vmatprep.subr.mxu0 0.0
    %2262 = vmatpush1.msra.mxu0 0.0
    %2263 = vmatprep.subr.mxu0 0.0
    %2264 = vmatpush1.msra.mxu0 0.0
    %2265 = vmatprep.subr.mxu0 0.0
    %2266 = vmatpush1.msra.mxu0 0.0
    %2267 = vmatprep.subr.mxu0 0.0
    %2268 = vmatpush1.msra.mxu0 0.0
    %2269 = vmatprep.subr.mxu0 0.0
    %2270 = vmatpush1.msra.mxu0 0.0
    %2271 = vmatprep.mubr.f32.mxu0 0.0
    %2272 = vmatmul.mubr.f32.gmra.mrb[0].mxu0 %v2205
    %v2273 = vpop.f32.mrb[0].mxu0
    %v2274 = vadd.f32 %v370, %v2273
    %v2275 = vpop.f32.mrb[0].mxu0
    %2276 = vdwg.mxu0
    %v2277 = vxor.u32 %v2274, 2147483648
    %v2278 = vmul.f32 %v2277, 1.442695
    %v2279 = vpow.pop %v2278
    %v2280 = vadd.f32 %v2279, 1.0
    %v2281 = vrcp.pop %v2280
    %v2282 = vmul.f32 1.0, %v2281
    %v2283 = vtanh.pop %v2274
    %v2284 = vmul.f32 %v2282, %v1968
    %2286 = vrot.lane.b32.xlu0 %v2283, 64
    %v2287 = vpop.permute.xlu0 %2286
    %v2289 = vmul.f32 %v2282, %v2287
    %2291 = vrot.lane.b32.xlu0 %v2289, 32
    %v2292 = vpop.permute.xlu0 %2291
    %v2294 = vadd.f32 %v2284, %v2292
    %v2295 = vtanh.pop %v2294
    %2297 = vrot.lane.b32.xlu0 %v2295, 64
    %v2298 = vpop.permute.xlu0 %2297
    %v2300 = vmul.f32 %v2282, %v2298
    %v2301 = vmax.f32 %v2300, 0.0
    %2303 = vrot.lane.b32.xlu0 %v2301, 32
    %v2304 = vpop.permute.xlu0 %2303
    %v2305 = vsel %vm262, %v2304, 0
    %2307 = vmatprep.subr.mxu0 0.0
    %2308 = vmatpush1.msra.mxu0 %v49
    %2309 = vmatprep.subr.mxu0 0.0
    %2310 = vmatpush1.msra.mxu0 %v50
    %2311 = vmatprep.subr.mxu0 0.0
    %2312 = vmatpush1.msra.mxu0 %v51
    %2313 = vmatprep.subr.mxu0 0.0
    %2314 = vmatpush1.msra.mxu0 %v52
    %2315 = vmatprep.subr.mxu0 0.0
    %2316 = vmatpush1.msra.mxu0 0.0
    %2317 = vmatprep.subr.mxu0 0.0
    %2318 = vmatpush1.msra.mxu0 0.0
    %2319 = vmatprep.subr.mxu0 0.0
    %2320 = vmatpush1.msra.mxu0 0.0
    %2321 = vmatprep.subr.mxu0 0.0
    %2322 = vmatpush1.msra.mxu0 0.0
    %2323 = vmatprep.subr.mxu0 0.0
    %2324 = vmatpush1.msra.mxu0 0.0
    %2325 = vmatprep.subr.mxu0 0.0
    %2326 = vmatpush1.msra.mxu0 0.0
    %2327 = vmatprep.subr.mxu0 0.0
    %2328 = vmatpush1.msra.mxu0 0.0
    %2329 = vmatprep.subr.mxu0 0.0
    %2330 = vmatpush1.msra.mxu0 0.0
    %2331 = vmatprep.subr.mxu0 0.0
    %2332 = vmatpush1.msra.mxu0 0.0
    %2333 = vmatprep.subr.mxu0 0.0
    %2334 = vmatpush1.msra.mxu0 0.0
    %2335 = vmatprep.subr.mxu0 0.0
    %2336 = vmatpush1.msra.mxu0 0.0
    %2337 = vmatprep.subr.mxu0 0.0
    %2338 = vmatpush1.msra.mxu0 0.0
    %2339 = vmatprep.subr.mxu0 0.0
    %2340 = vmatpush1.msra.mxu0 0.0
    %2341 = vmatprep.subr.mxu0 0.0
    %2342 = vmatpush1.msra.mxu0 0.0
    %2343 = vmatprep.subr.mxu0 0.0
    %2344 = vmatpush1.msra.mxu0 0.0
    %2345 = vmatprep.subr.mxu0 0.0
    %2346 = vmatpush1.msra.mxu0 0.0
    %2347 = vmatprep.subr.mxu0 0.0
    %2348 = vmatpush1.msra.mxu0 0.0
    %2349 = vmatprep.subr.mxu0 0.0
    %2350 = vmatpush1.msra.mxu0 0.0
    %2351 = vmatprep.subr.mxu0 0.0
    %2352 = vmatpush1.msra.mxu0 0.0
    %2353 = vmatprep.subr.mxu0 0.0
    %2354 = vmatpush1.msra.mxu0 0.0
    %2355 = vmatprep.subr.mxu0 0.0
    %2356 = vmatpush1.msra.mxu0 0.0
    %2357 = vmatprep.subr.mxu0 0.0
    %2358 = vmatpush1.msra.mxu0 0.0
    %2359 = vmatprep.subr.mxu0 0.0
    %2360 = vmatpush1.msra.mxu0 0.0
    %2361 = vmatprep.subr.mxu0 0.0
    %2362 = vmatpush1.msra.mxu0 0.0
    %2363 = vmatprep.subr.mxu0 0.0
    %2364 = vmatpush1.msra.mxu0 0.0
    %2365 = vmatprep.subr.mxu0 0.0
    %2366 = vmatpush1.msra.mxu0 0.0
    %2367 = vmatprep.subr.mxu0 0.0
    %2368 = vmatpush1.msra.mxu0 0.0
    %2369 = vmatprep.subr.mxu0 0.0
    %2370 = vmatpush1.msra.mxu0 0.0
    %2371 = vmatprep.mubr.f32.mxu0 0.0
    %2372 = vmatmul.mubr.f32.gmra.mrb[0].mxu0 %v2305
    %v2373 = vpop.f32.mrb[0].mxu0
    %v2374 = vadd.f32 %v1980, %v2373
    %v2375 = vpop.f32.mrb[0].mxu0
    %2376 = vdwg.mxu0
    %v2377 = vmax.f32 %v2374, 0.0
    %v2378 = vand.u32 2147483647, %v2374
    %v2379 = vsub.f32 0.0, %v2378
    %v2380 = vmul.f32 %v2379, 1.442695
    %v2381 = vpow.pop %v2380
    %v2382 = vadd.f32 %v2381, 1.0
    %v2383 = vlog2.pop %v2382
    %v2384 = vmul.f32 %v2383, 0.6931472
    %v2385 = vadd.f32 %v2377, %v2384
    %v2386 = vadd.f32 %v2385, 1e-06
    %2388 = vrot.lane.b32.xlu0 %v2374, 8
    %v2389 = vpop.permute.xlu0 %2388
    %vm2391 = vcmask 72768
    %2392 = vst.msk [vmem:[#allocation3] sm:$0xff] %vm2391, %v2389
    %2394 = vrot.lane.b32.xlu0 %v2386, 7
    %v2395 = vpop.permute.xlu0 %2394
    %2397 = vst.msk [vmem:[#allocation5] sm:$0xff] %vm2391, %v2395
    %v2398 = vld [vmem:[%s2] sm:$0xff]
    %2400 = vrot.lane.b32.xlu0 %v2398, 121
    %v2401 = vpop.permute.xlu0 %2400
    %v2403 = vmul.f32 %v2386, %v2401
    %2405 = vrot.lane.b32.xlu0 %v2403, 127
    %v2406 = vpop.permute.xlu0 %2405
    %v2408 = vadd.f32 %v2374, %v2406
    %2410 = vrot.lane.b32.xlu0 %v2408, 1
    %v2411 = vpop.permute.xlu0 %2410
    %vm2413 = vcmask 15368
    %2414 = vst.msk [vmem:[%s11] sm:$0xff] %vm2413, %v2411
    %2415 = vset.pattern.permute.xlu0 0
    %2416 = vperm.xlu0 %2415, %v2408
    %v2417 = vpop.permute.xlu0 %2416
    %v2419 = vmul.f32 %v2417, %v258
    %v2420 = vadd.f32 %v235, %v2419
    %v2421 = vsel %vm262, %v2197, 0
    %2423 = vmatprep.subr.mxu0 0.0
    %2424 = vmatpush1.msra.mxu0 %v45
    %2425 = vmatprep.subr.mxu0 0.0
    %2426 = vmatpush1.msra.mxu0 %v46
    %2427 = vmatprep.subr.mxu0 0.0
    %2428 = vmatpush1.msra.mxu0 %v47
    %2429 = vmatprep.subr.mxu0 0.0
    %2430 = vmatpush1.msra.mxu0 %v48
    %2431 = vmatprep.subr.mxu0 0.0
    %2432 = vmatpush1.msra.mxu0 0.0
    %2433 = vmatprep.subr.mxu0 0.0
    %2434 = vmatpush1.msra.mxu0 0.0
    %2435 = vmatprep.subr.mxu0 0.0
    %2436 = vmatpush1.msra.mxu0 0.0
    %2437 = vmatprep.subr.mxu0 0.0
    %2438 = vmatpush1.msra.mxu0 0.0
    %2439 = vmatprep.subr.mxu0 0.0
    %2440 = vmatpush1.msra.mxu0 0.0
    %2441 = vmatprep.subr.mxu0 0.0
    %2442 = vmatpush1.msra.mxu0 0.0
    %2443 = vmatprep.subr.mxu0 0.0
    %2444 = vmatpush1.msra.mxu0 0.0
    %2445 = vmatprep.subr.mxu0 0.0
    %2446 = vmatpush1.msra.mxu0 0.0
    %2447 = vmatprep.subr.mxu0 0.0
    %2448 = vmatpush1.msra.mxu0 0.0
    %2449 = vmatprep.subr.mxu0 0.0
    %2450 = vmatpush1.msra.mxu0 0.0
    %2451 = vmatprep.subr.mxu0 0.0
    %2452 = vmatpush1.msra.mxu0 0.0
    %2453 = vmatprep.subr.mxu0 0.0
    %2454 = vmatpush1.msra.mxu0 0.0
    %2455 = vmatprep.subr.mxu0 0.0
    %2456 = vmatpush1.msra.mxu0 0.0
    %2457 = vmatprep.subr.mxu0 0.0
    %2458 = vmatpush1.msra.mxu0 0.0
    %2459 = vmatprep.subr.mxu0 0.0
    %2460 = vmatpush1.msra.mxu0 0.0
    %2461 = vmatprep.subr.mxu0 0.0
    %2462 = vmatpush1.msra.mxu0 0.0
    %2463 = vmatprep.subr.mxu0 0.0
    %2464 = vmatpush1.msra.mxu0 0.0
    %2465 = vmatprep.subr.mxu0 0.0
    %2466 = vmatpush1.msra.mxu0 0.0
    %2467 = vmatprep.subr.mxu0 0.0
    %2468 = vmatpush1.msra.mxu0 0.0
    %2469 = vmatprep.subr.mxu0 0.0
    %2470 = vmatpush1.msra.mxu0 0.0
    %2471 = vmatprep.subr.mxu0 0.0
    %2472 = vmatpush1.msra.mxu0 0.0
    %2473 = vmatprep.subr.mxu0 0.0
    %2474 = vmatpush1.msra.mxu0 0.0
    %2475 = vmatprep.subr.mxu0 0.0
    %2476 = vmatpush1.msra.mxu0 0.0
    %2477 = vmatprep.subr.mxu0 0.0
    %2478 = vmatpush1.msra.mxu0 0.0
    %2479 = vmatprep.subr.mxu0 0.0
    %2480 = vmatpush1.msra.mxu0 0.0
    %2481 = vmatprep.subr.mxu0 0.0
    %2482 = vmatpush1.msra.mxu0 0.0
    %2483 = vmatprep.subr.mxu0 0.0
    %2484 = vmatpush1.msra.mxu0 0.0
    %2485 = vmatprep.subr.mxu0 0.0
    %2486 = vmatpush1.msra.mxu0 0.0
    %2487 = vmatprep.mubr.f32.mxu0 0.0
    %2488 = vmatmul.mubr.f32.gmra.mrb[0].mxu0 %v2421
    %v2489 = vpop.f32.mrb[0].mxu0
    %v2490 = vadd.f32 0.0, %v2489
    %v2491 = vpop.f32.mrb[0].mxu0
    %2492 = vdwg.mxu0
    %v2493 = vadd.f32 %v2420, %v2490
    %v2494 = vxor.u32 %v2493, 2147483648
    %v2495 = vmul.f32 %v2494, 1.442695
    %v2496 = vpow.pop %v2495
    %v2497 = vadd.f32 %v2496, 1.0
    %v2498 = vrcp.pop %v2497
    %v2499 = vmul.f32 1.0, %v2498
    %v2500 = vtanh.pop %v2493
    %v2501 = vmul.f32 %v2499, %v2188
    %2503 = vrot.lane.b32.xlu0 %v2500, 64
    %v2504 = vpop.permute.xlu0 %2503
    %v2506 = vmul.f32 %v2499, %v2504
    %2508 = vrot.lane.b32.xlu0 %v2506, 32
    %v2509 = vpop.permute.xlu0 %2508
    %v2511 = vadd.f32 %v2501, %v2509
    %v2512 = vtanh.pop %v2511
    %2514 = vrot.lane.b32.xlu0 %v2512, 64
    %v2515 = vpop.permute.xlu0 %2514
    %v2517 = vmul.f32 %v2499, %v2515
    %2519 = vrot.lane.b32.xlu0 %v2517, 32
    %v2520 = vpop.permute.xlu0 %2519
    %2523 = vrot.lane.b32.xlu0 %v2300, 64
    %v2524 = vpop.permute.xlu0 %2523
    %v2526 = vsel %vm262, %v2520, %v2524
    %v2528 = vsel %vm372, %v2526, 0
    %2530 = vmatprep.subr.mxu0 0.0
    %2531 = vmatpush1.msra.mxu0 %v54
    %2532 = vmatprep.subr.mxu0 0.0
    %2533 = vmatpush1.msra.mxu0 %v55
    %2534 = vmatprep.subr.mxu0 0.0
    %2535 = vmatpush1.msra.mxu0 %v56
    %2536 = vmatprep.subr.mxu0 0.0
    %2537 = vmatpush1.msra.mxu0 %v57
    %2538 = vmatprep.subr.mxu0 0.0
    %2539 = vmatpush1.msra.mxu0 %v58
    %2540 = vmatprep.subr.mxu0 0.0
    %2541 = vmatpush1.msra.mxu0 %v59
    %2542 = vmatprep.subr.mxu0 0.0
    %2543 = vmatpush1.msra.mxu0 %v60
    %2544 = vmatprep.subr.mxu0 0.0
    %2545 = vmatpush1.msra.mxu0 %v61
    %2546 = vmatprep.subr.mxu0 0.0
    %2547 = vmatpush1.msra.mxu0 0.0
    %2548 = vmatprep.subr.mxu0 0.0
    %2549 = vmatpush1.msra.mxu0 0.0
    %2550 = vmatprep.subr.mxu0 0.0
    %2551 = vmatpush1.msra.mxu0 0.0
    %2552 = vmatprep.subr.mxu0 0.0
    %2553 = vmatpush1.msra.mxu0 0.0
    %2554 = vmatprep.subr.mxu0 0.0
    %2555 = vmatpush1.msra.mxu0 0.0
    %2556 = vmatprep.subr.mxu0 0.0
    %2557 = vmatpush1.msra.mxu0 0.0
    %2558 = vmatprep.subr.mxu0 0.0
    %2559 = vmatpush1.msra.mxu0 0.0
    %2560 = vmatprep.subr.mxu0 0.0
    %2561 = vmatpush1.msra.mxu0 0.0
    %2562 = vmatprep.subr.mxu0 0.0
    %2563 = vmatpush1.msra.mxu0 0.0
    %2564 = vmatprep.subr.mxu0 0.0
    %2565 = vmatpush1.msra.mxu0 0.0
    %2566 = vmatprep.subr.mxu0 0.0
    %2567 = vmatpush1.msra.mxu0 0.0
    %2568 = vmatprep.subr.mxu0 0.0
    %2569 = vmatpush1.msra.mxu0 0.0
    %2570 = vmatprep.subr.mxu0 0.0
    %2571 = vmatpush1.msra.mxu0 0.0
    %2572 = vmatprep.subr.mxu0 0.0
    %2573 = vmatpush1.msra.mxu0 0.0
    %2574 = vmatprep.subr.mxu0 0.0
    %2575 = vmatpush1.msra.mxu0 0.0
    %2576 = vmatprep.subr.mxu0 0.0
    %2577 = vmatpush1.msra.mxu0 0.0
    %2578 = vmatprep.subr.mxu0 0.0
    %2579 = vmatpush1.msra.mxu0 0.0
    %2580 = vmatprep.subr.mxu0 0.0
    %2581 = vmatpush1.msra.mxu0 0.0
    %2582 = vmatprep.subr.mxu0 0.0
    %2583 = vmatpush1.msra.mxu0 0.0
    %2584 = vmatprep.subr.mxu0 0.0
    %2585 = vmatpush1.msra.mxu0 0.0
    %2586 = vmatprep.subr.mxu0 0.0
    %2587 = vmatpush1.msra.mxu0 0.0
    %2588 = vmatprep.subr.mxu0 0.0
    %2589 = vmatpush1.msra.mxu0 0.0
    %2590 = vmatprep.subr.mxu0 0.0
    %2591 = vmatpush1.msra.mxu0 0.0
    %2592 = vmatprep.subr.mxu0 0.0
    %2593 = vmatpush1.msra.mxu0 0.0
    %2594 = vmatprep.mubr.f32.mxu0 0.0
    %2595 = vmatmul.mubr.f32.gmra.mrb[0].mxu0 %v2528
    %v2596 = vpop.f32.mrb[0].mxu0
    %v2597 = vadd.f32 %v370, %v2596
    %v2598 = vpop.f32.mrb[0].mxu0
    %2599 = vdwg.mxu0
    %v2600 = vxor.u32 %v2597, 2147483648
    %v2601 = vmul.f32 %v2600, 1.442695
    %v2602 = vpow.pop %v2601
    %v2603 = vadd.f32 %v2602, 1.0
    %v2604 = vrcp.pop %v2603
    %v2605 = vmul.f32 1.0, %v2604
    %v2606 = vtanh.pop %v2597
    %v2607 = vmul.f32 %v2605, %v2294
    %2609 = vrot.lane.b32.xlu0 %v2606, 64
    %v2610 = vpop.permute.xlu0 %2609
    %v2612 = vmul.f32 %v2605, %v2610
    %2614 = vrot.lane.b32.xlu0 %v2612, 32
    %v2615 = vpop.permute.xlu0 %2614
    %v2617 = vadd.f32 %v2607, %v2615
    %v2618 = vtanh.pop %v2617
    %2620 = vrot.lane.b32.xlu0 %v2618, 64
    %v2621 = vpop.permute.xlu0 %2620
    %v2623 = vmul.f32 %v2605, %v2621
    %v2624 = vmax.f32 %v2623, 0.0
    %2626 = vrot.lane.b32.xlu0 %v2624, 32
    %v2627 = vpop.permute.xlu0 %2626
    %v2628 = vsel %vm262, %v2627, 0
    %2630 = vmatprep.subr.mxu0 0.0
    %2631 = vmatpush1.msra.mxu0 %v49
    %2632 = vmatprep.subr.mxu0 0.0
    %2633 = vmatpush1.msra.mxu0 %v50
    %2634 = vmatprep.subr.mxu0 0.0
    %2635 = vmatpush1.msra.mxu0 %v51
    %2636 = vmatprep.subr.mxu0 0.0
    %2637 = vmatpush1.msra.mxu0 %v52
    %2638 = vmatprep.subr.mxu0 0.0
    %2639 = vmatpush1.msra.mxu0 0.0
    %2640 = vmatprep.subr.mxu0 0.0
    %2641 = vmatpush1.msra.mxu0 0.0
    %2642 = vmatprep.subr.mxu0 0.0
    %2643 = vmatpush1.msra.mxu0 0.0
    %2644 = vmatprep.subr.mxu0 0.0
    %2645 = vmatpush1.msra.mxu0 0.0
    %2646 = vmatprep.subr.mxu0 0.0
    %2647 = vmatpush1.msra.mxu0 0.0
    %2648 = vmatprep.subr.mxu0 0.0
    %2649 = vmatpush1.msra.mxu0 0.0
    %2650 = vmatprep.subr.mxu0 0.0
    %2651 = vmatpush1.msra.mxu0 0.0
    %2652 = vmatprep.subr.mxu0 0.0
    %2653 = vmatpush1.msra.mxu0 0.0
    %2654 = vmatprep.subr.mxu0 0.0
    %2655 = vmatpush1.msra.mxu0 0.0
    %2656 = vmatprep.subr.mxu0 0.0
    %2657 = vmatpush1.msra.mxu0 0.0
    %2658 = vmatprep.subr.mxu0 0.0
    %2659 = vmatpush1.msra.mxu0 0.0
    %2660 = vmatprep.subr.mxu0 0.0
    %2661 = vmatpush1.msra.mxu0 0.0
    %2662 = vmatprep.subr.mxu0 0.0
    %2663 = vmatpush1.msra.mxu0 0.0
    %2664 = vmatprep.subr.mxu0 0.0
    %2665 = vmatpush1.msra.mxu0 0.0
    %2666 = vmatprep.subr.mxu0 0.0
    %2667 = vmatpush1.msra.mxu0 0.0
    %2668 = vmatprep.subr.mxu0 0.0
    %2669 = vmatpush1.msra.mxu0 0.0
    %2670 = vmatprep.subr.mxu0 0.0
    %2671 = vmatpush1.msra.mxu0 0.0
    %2672 = vmatprep.subr.mxu0 0.0
    %2673 = vmatpush1.msra.mxu0 0.0
    %2674 = vmatprep.subr.mxu0 0.0
    %2675 = vmatpush1.msra.mxu0 0.0
    %2676 = vmatprep.subr.mxu0 0.0
    %2677 = vmatpush1.msra.mxu0 0.0
    %2678 = vmatprep.subr.mxu0 0.0
    %2679 = vmatpush1.msra.mxu0 0.0
    %2680 = vmatprep.subr.mxu0 0.0
    %2681 = vmatpush1.msra.mxu0 0.0
    %2682 = vmatprep.subr.mxu0 0.0
    %2683 = vmatpush1.msra.mxu0 0.0
    %2684 = vmatprep.subr.mxu0 0.0
    %2685 = vmatpush1.msra.mxu0 0.0
    %2686 = vmatprep.subr.mxu0 0.0
    %2687 = vmatpush1.msra.mxu0 0.0
    %2688 = vmatprep.subr.mxu0 0.0
    %2689 = vmatpush1.msra.mxu0 0.0
    %2690 = vmatprep.subr.mxu0 0.0
    %2691 = vmatpush1.msra.mxu0 0.0
    %2692 = vmatprep.subr.mxu0 0.0
    %2693 = vmatpush1.msra.mxu0 0.0
    %2694 = vmatprep.mubr.f32.mxu0 0.0
    %2695 = vmatmul.mubr.f32.gmra.mrb[0].mxu0 %v2628
    %v2696 = vpop.f32.mrb[0].mxu0
    %v2697 = vadd.f32 %v1980, %v2696
    %v2698 = vpop.f32.mrb[0].mxu0
    %2699 = vdwg.mxu0
    %v2700 = vmax.f32 %v2697, 0.0
    %v2701 = vand.u32 2147483647, %v2697
    %v2702 = vsub.f32 0.0, %v2701
    %v2703 = vmul.f32 %v2702, 1.442695
    %v2704 = vpow.pop %v2703
    %v2705 = vadd.f32 %v2704, 1.0
    %v2706 = vlog2.pop %v2705
    %v2707 = vmul.f32 %v2706, 0.6931472
    %v2708 = vadd.f32 %v2700, %v2707
    %v2709 = vadd.f32 %v2708, 1e-06
    %2711 = vrot.lane.b32.xlu0 %v2697, 9
    %v2712 = vpop.permute.xlu0 %2711
    %vm2714 = vcmask 80968
    %2715 = vst.msk [vmem:[#allocation3] sm:$0xff] %vm2714, %v2712
    %2717 = vrot.lane.b32.xlu0 %v2709, 8
    %v2718 = vpop.permute.xlu0 %2717
    %2720 = vst.msk [vmem:[#allocation5] sm:$0xff] %vm2714, %v2718
    %v2721 = vld [vmem:[%s2] sm:$0xff]
    %2723 = vrot.lane.b32.xlu0 %v2721, 120
    %v2724 = vpop.permute.xlu0 %2723
    %v2726 = vmul.f32 %v2709, %v2724
    %2728 = vrot.lane.b32.xlu0 %v2726, 127
    %v2729 = vpop.permute.xlu0 %2728
    %v2731 = vadd.f32 %v2697, %v2729
    %2733 = vrot.lane.b32.xlu0 %v2731, 2
    %v2734 = vpop.permute.xlu0 %2733
    %vm2736 = vcmask 23568
    %2737 = vst.msk [vmem:[%s11] sm:$0xff] %vm2736, %v2734
    %2738 = vset.pattern.permute.xlu0 0
    %2739 = vperm.xlu0 %2738, %v2731
    %v2740 = vpop.permute.xlu0 %2739
    %v2742 = vmul.f32 %v2740, %v258
    %v2743 = vadd.f32 %v240, %v2742
    %v2744 = vsel %vm262, %v2520, 0
    %2746 = vmatprep.subr.mxu0 0.0
    %2747 = vmatpush1.msra.mxu0 %v45
    %2748 = vmatprep.subr.mxu0 0.0
    %2749 = vmatpush1.msra.mxu0 %v46
    %2750 = vmatprep.subr.mxu0 0.0
    %2751 = vmatpush1.msra.mxu0 %v47
    %2752 = vmatprep.subr.mxu0 0.0
    %2753 = vmatpush1.msra.mxu0 %v48
    %2754 = vmatprep.subr.mxu0 0.0
    %2755 = vmatpush1.msra.mxu0 0.0
    %2756 = vmatprep.subr.mxu0 0.0
    %2757 = vmatpush1.msra.mxu0 0.0
    %2758 = vmatprep.subr.mxu0 0.0
    %2759 = vmatpush1.msra.mxu0 0.0
    %2760 = vmatprep.subr.mxu0 0.0
    %2761 = vmatpush1.msra.mxu0 0.0
    %2762 = vmatprep.subr.mxu0 0.0
    %2763 = vmatpush1.msra.mxu0 0.0
    %2764 = vmatprep.subr.mxu0 0.0
    %2765 = vmatpush1.msra.mxu0 0.0
    %2766 = vmatprep.subr.mxu0 0.0
    %2767 = vmatpush1.msra.mxu0 0.0
    %2768 = vmatprep.subr.mxu0 0.0
    %2769 = vmatpush1.msra.mxu0 0.0
    %2770 = vmatprep.subr.mxu0 0.0
    %2771 = vmatpush1.msra.mxu0 0.0
    %2772 = vmatprep.subr.mxu0 0.0
    %2773 = vmatpush1.msra.mxu0 0.0
    %2774 = vmatprep.subr.mxu0 0.0
    %2775 = vmatpush1.msra.mxu0 0.0
    %2776 = vmatprep.subr.mxu0 0.0
    %2777 = vmatpush1.msra.mxu0 0.0
    %2778 = vmatprep.subr.mxu0 0.0
    %2779 = vmatpush1.msra.mxu0 0.0
    %2780 = vmatprep.subr.mxu0 0.0
    %2781 = vmatpush1.msra.mxu0 0.0
    %2782 = vmatprep.subr.mxu0 0.0
    %2783 = vmatpush1.msra.mxu0 0.0
    %2784 = vmatprep.subr.mxu0 0.0
    %2785 = vmatpush1.msra.mxu0 0.0
    %2786 = vmatprep.subr.mxu0 0.0
    %2787 = vmatpush1.msra.mxu0 0.0
    %2788 = vmatprep.subr.mxu0 0.0
    %2789 = vmatpush1.msra.mxu0 0.0
    %2790 = vmatprep.subr.mxu0 0.0
    %2791 = vmatpush1.msra.mxu0 0.0
    %2792 = vmatprep.subr.mxu0 0.0
    %2793 = vmatpush1.msra.mxu0 0.0
    %2794 = vmatprep.subr.mxu0 0.0
    %2795 = vmatpush1.msra.mxu0 0.0
    %2796 = vmatprep.subr.mxu0 0.0
    %2797 = vmatpush1.msra.mxu0 0.0
    %2798 = vmatprep.subr.mxu0 0.0
    %2799 = vmatpush1.msra.mxu0 0.0
    %2800 = vmatprep.subr.mxu0 0.0
    %2801 = vmatpush1.msra.mxu0 0.0
    %2802 = vmatprep.subr.mxu0 0.0
    %2803 = vmatpush1.msra.mxu0 0.0
    %2804 = vmatprep.subr.mxu0 0.0
    %2805 = vmatpush1.msra.mxu0 0.0
    %2806 = vmatprep.subr.mxu0 0.0
    %2807 = vmatpush1.msra.mxu0 0.0
    %2808 = vmatprep.subr.mxu0 0.0
    %2809 = vmatpush1.msra.mxu0 0.0
    %2810 = vmatprep.mubr.f32.mxu0 0.0
    %2811 = vmatmul.mubr.f32.gmra.mrb[0].mxu0 %v2744
    %v2812 = vpop.f32.mrb[0].mxu0
    %v2813 = vadd.f32 0.0, %v2812
    %v2814 = vpop.f32.mrb[0].mxu0
    %2815 = vdwg.mxu0
    %v2816 = vadd.f32 %v2743, %v2813
    %v2817 = vxor.u32 %v2816, 2147483648
    %v2818 = vmul.f32 %v2817, 1.442695
    %v2819 = vpow.pop %v2818
    %v2820 = vadd.f32 %v2819, 1.0
    %v2821 = vrcp.pop %v2820
    %v2822 = vmul.f32 1.0, %v2821
    %v2823 = vtanh.pop %v2816
    %v2824 = vmul.f32 %v2822, %v2511
    %2826 = vrot.lane.b32.xlu0 %v2823, 64
    %v2827 = vpop.permute.xlu0 %2826
    %v2829 = vmul.f32 %v2822, %v2827
    %2831 = vrot.lane.b32.xlu0 %v2829, 32
    %v2832 = vpop.permute.xlu0 %2831
    %v2834 = vadd.f32 %v2824, %v2832
    %v2835 = vtanh.pop %v2834
    %2837 = vrot.lane.b32.xlu0 %v2835, 64
    %v2838 = vpop.permute.xlu0 %2837
    %v2840 = vmul.f32 %v2822, %v2838
    %2842 = vrot.lane.b32.xlu0 %v2840, 32
    %v2843 = vpop.permute.xlu0 %2842
    %2846 = vrot.lane.b32.xlu0 %v2623, 64
    %v2847 = vpop.permute.xlu0 %2846
    %v2849 = vsel %vm262, %v2843, %v2847
    %v2851 = vsel %vm372, %v2849, 0
    %2853 = vmatprep.subr.mxu0 0.0
    %2854 = vmatpush1.msra.mxu0 %v54
    %2855 = vmatprep.subr.mxu0 0.0
    %2856 = vmatpush1.msra.mxu0 %v55
    %2857 = vmatprep.subr.mxu0 0.0
    %2858 = vmatpush1.msra.mxu0 %v56
    %2859 = vmatprep.subr.mxu0 0.0
    %2860 = vmatpush1.msra.mxu0 %v57
    %2861 = vmatprep.subr.mxu0 0.0
    %2862 = vmatpush1.msra.mxu0 %v58
    %2863 = vmatprep.subr.mxu0 0.0
    %2864 = vmatpush1.msra.mxu0 %v59
    %2865 = vmatprep.subr.mxu0 0.0
    %2866 = vmatpush1.msra.mxu0 %v60
    %2867 = vmatprep.subr.mxu0 0.0
    %2868 = vmatpush1.msra.mxu0 %v61
    %2869 = vmatprep.subr.mxu0 0.0
    %2870 = vmatpush1.msra.mxu0 0.0
    %2871 = vmatprep.subr.mxu0 0.0
    %2872 = vmatpush1.msra.mxu0 0.0
    %2873 = vmatprep.subr.mxu0 0.0
    %2874 = vmatpush1.msra.mxu0 0.0
    %2875 = vmatprep.subr.mxu0 0.0
    %2876 = vmatpush1.msra.mxu0 0.0
    %2877 = vmatprep.subr.mxu0 0.0
    %2878 = vmatpush1.msra.mxu0 0.0
    %2879 = vmatprep.subr.mxu0 0.0
    %2880 = vmatpush1.msra.mxu0 0.0
    %2881 = vmatprep.subr.mxu0 0.0
    %2882 = vmatpush1.msra.mxu0 0.0
    %2883 = vmatprep.subr.mxu0 0.0
    %2884 = vmatpush1.msra.mxu0 0.0
    %2885 = vmatprep.subr.mxu0 0.0
    %2886 = vmatpush1.msra.mxu0 0.0
    %2887 = vmatprep.subr.mxu0 0.0
    %2888 = vmatpush1.msra.mxu0 0.0
    %2889 = vmatprep.subr.mxu0 0.0
    %2890 = vmatpush1.msra.mxu0 0.0
    %2891 = vmatprep.subr.mxu0 0.0
    %2892 = vmatpush1.msra.mxu0 0.0
    %2893 = vmatprep.subr.mxu0 0.0
    %2894 = vmatpush1.msra.mxu0 0.0
    %2895 = vmatprep.subr.mxu0 0.0
    %2896 = vmatpush1.msra.mxu0 0.0
    %2897 = vmatprep.subr.mxu0 0.0
    %2898 = vmatpush1.msra.mxu0 0.0
    %2899 = vmatprep.subr.mxu0 0.0
    %2900 = vmatpush1.msra.mxu0 0.0
    %2901 = vmatprep.subr.mxu0 0.0
    %2902 = vmatpush1.msra.mxu0 0.0
    %2903 = vmatprep.subr.mxu0 0.0
    %2904 = vmatpush1.msra.mxu0 0.0
    %2905 = vmatprep.subr.mxu0 0.0
    %2906 = vmatpush1.msra.mxu0 0.0
    %2907 = vmatprep.subr.mxu0 0.0
    %2908 = vmatpush1.msra.mxu0 0.0
    %2909 = vmatprep.subr.mxu0 0.0
    %2910 = vmatpush1.msra.mxu0 0.0
    %2911 = vmatprep.subr.mxu0 0.0
    %2912 = vmatpush1.msra.mxu0 0.0
    %2913 = vmatprep.subr.mxu0 0.0
    %2914 = vmatpush1.msra.mxu0 0.0
    %2915 = vmatprep.subr.mxu0 0.0
    %2916 = vmatpush1.msra.mxu0 0.0
    %2917 = vmatprep.mubr.f32.mxu0 0.0
    %2918 = vmatmul.mubr.f32.gmra.mrb[0].mxu0 %v2851
    %v2919 = vpop.f32.mrb[0].mxu0
    %v2920 = vadd.f32 %v370, %v2919
    %v2921 = vpop.f32.mrb[0].mxu0
    %2922 = vdwg.mxu0
    %v2923 = vxor.u32 %v2920, 2147483648
    %v2924 = vmul.f32 %v2923, 1.442695
    %v2925 = vpow.pop %v2924
    %v2926 = vadd.f32 %v2925, 1.0
    %v2927 = vrcp.pop %v2926
    %v2928 = vmul.f32 1.0, %v2927
    %v2929 = vtanh.pop %v2920
    %v2930 = vmul.f32 %v2928, %v2617
    %2932 = vrot.lane.b32.xlu0 %v2929, 64
    %v2933 = vpop.permute.xlu0 %2932
    %v2935 = vmul.f32 %v2928, %v2933
    %2937 = vrot.lane.b32.xlu0 %v2935, 32
    %v2938 = vpop.permute.xlu0 %2937
    %v2940 = vadd.f32 %v2930, %v2938
    %v2941 = vtanh.pop %v2940
    %2943 = vrot.lane.b32.xlu0 %v2941, 64
    %v2944 = vpop.permute.xlu0 %2943
    %v2946 = vmul.f32 %v2928, %v2944
    %v2947 = vmax.f32 %v2946, 0.0
    %2949 = vrot.lane.b32.xlu0 %v2947, 32
    %v2950 = vpop.permute.xlu0 %2949
    %v2951 = vsel %vm262, %v2950, 0
    %2953 = vmatprep.subr.mxu0 0.0
    %2954 = vmatpush1.msra.mxu0 %v49
    %2955 = vmatprep.subr.mxu0 0.0
    %2956 = vmatpush1.msra.mxu0 %v50
    %2957 = vmatprep.subr.mxu0 0.0
    %2958 = vmatpush1.msra.mxu0 %v51
    %2959 = vmatprep.subr.mxu0 0.0
    %2960 = vmatpush1.msra.mxu0 %v52
    %2961 = vmatprep.subr.mxu0 0.0
    %2962 = vmatpush1.msra.mxu0 0.0
    %2963 = vmatprep.subr.mxu0 0.0
    %2964 = vmatpush1.msra.mxu0 0.0
    %2965 = vmatprep.subr.mxu0 0.0
    %2966 = vmatpush1.msra.mxu0 0.0
    %2967 = vmatprep.subr.mxu0 0.0
    %2968 = vmatpush1.msra.mxu0 0.0
    %2969 = vmatprep.subr.mxu0 0.0
    %2970 = vmatpush1.msra.mxu0 0.0
    %2971 = vmatprep.subr.mxu0 0.0
    %2972 = vmatpush1.msra.mxu0 0.0
    %2973 = vmatprep.subr.mxu0 0.0
    %2974 = vmatpush1.msra.mxu0 0.0
    %2975 = vmatprep.subr.mxu0 0.0
    %2976 = vmatpush1.msra.mxu0 0.0
    %2977 = vmatprep.subr.mxu0 0.0
    %2978 = vmatpush1.msra.mxu0 0.0
    %2979 = vmatprep.subr.mxu0 0.0
    %2980 = vmatpush1.msra.mxu0 0.0
    %2981 = vmatprep.subr.mxu0 0.0
    %2982 = vmatpush1.msra.mxu0 0.0
    %2983 = vmatprep.subr.mxu0 0.0
    %2984 = vmatpush1.msra.mxu0 0.0
    %2985 = vmatprep.subr.mxu0 0.0
    %2986 = vmatpush1.msra.mxu0 0.0
    %2987 = vmatprep.subr.mxu0 0.0
    %2988 = vmatpush1.msra.mxu0 0.0
    %2989 = vmatprep.subr.mxu0 0.0
    %2990 = vmatpush1.msra.mxu0 0.0
    %2991 = vmatprep.subr.mxu0 0.0
    %2992 = vmatpush1.msra.mxu0 0.0
    %2993 = vmatprep.subr.mxu0 0.0
    %2994 = vmatpush1.msra.mxu0 0.0
    %2995 = vmatprep.subr.mxu0 0.0
    %2996 = vmatpush1.msra.mxu0 0.0
    %2997 = vmatprep.subr.mxu0 0.0
    %2998 = vmatpush1.msra.mxu0 0.0
    %2999 = vmatprep.subr.mxu0 0.0
    %3000 = vmatpush1.msra.mxu0 0.0
    %3001 = vmatprep.subr.mxu0 0.0
    %3002 = vmatpush1.msra.mxu0 0.0
    %3003 = vmatprep.subr.mxu0 0.0
    %3004 = vmatpush1.msra.mxu0 0.0
    %3005 = vmatprep.subr.mxu0 0.0
    %3006 = vmatpush1.msra.mxu0 0.0
    %3007 = vmatprep.subr.mxu0 0.0
    %3008 = vmatpush1.msra.mxu0 0.0
    %3009 = vmatprep.subr.mxu0 0.0
    %3010 = vmatpush1.msra.mxu0 0.0
    %3011 = vmatprep.subr.mxu0 0.0
    %3012 = vmatpush1.msra.mxu0 0.0
    %3013 = vmatprep.subr.mxu0 0.0
    %3014 = vmatpush1.msra.mxu0 0.0
    %3015 = vmatprep.subr.mxu0 0.0
    %3016 = vmatpush1.msra.mxu0 0.0
    %3017 = vmatprep.mubr.f32.mxu0 0.0
    %3018 = vmatmul.mubr.f32.gmra.mrb[0].mxu0 %v2951
    %v3019 = vpop.f32.mrb[0].mxu0
    %v3020 = vadd.f32 %v1980, %v3019
    %v3021 = vpop.f32.mrb[0].mxu0
    %3022 = vdwg.mxu0
    %v3023 = vmax.f32 %v3020, 0.0
    %v3024 = vand.u32 2147483647, %v3020
    %v3025 = vsub.f32 0.0, %v3024
    %v3026 = vmul.f32 %v3025, 1.442695
    %v3027 = vpow.pop %v3026
    %v3028 = vadd.f32 %v3027, 1.0
    %v3029 = vlog2.pop %v3028
    %v3030 = vmul.f32 %v3029, 0.6931472
    %v3031 = vadd.f32 %v3023, %v3030
    %v3032 = vadd.f32 %v3031, 1e-06
    %3034 = vrot.lane.b32.xlu0 %v3020, 10
    %v3035 = vpop.permute.xlu0 %3034
    %vm3037 = vcmask 89168
    %3038 = vst.msk [vmem:[#allocation3] sm:$0xff] %vm3037, %v3035
    %3040 = vrot.lane.b32.xlu0 %v3032, 9
    %v3041 = vpop.permute.xlu0 %3040
    %3043 = vst.msk [vmem:[#allocation5] sm:$0xff] %vm3037, %v3041
    %v3044 = vld [vmem:[%s2] sm:$0xff]
    %3046 = vrot.lane.b32.xlu0 %v3044, 119
    %v3047 = vpop.permute.xlu0 %3046
    %v3049 = vmul.f32 %v3032, %v3047
    %3051 = vrot.lane.b32.xlu0 %v3049, 127
    %v3052 = vpop.permute.xlu0 %3051
    %v3054 = vadd.f32 %v3020, %v3052
    %3056 = vrot.lane.b32.xlu0 %v3054, 3
    %v3057 = vpop.permute.xlu0 %3056
    %vm3059 = vcmask 31768
    %3060 = vst.msk [vmem:[%s11] sm:$0xff] %vm3059, %v3057
    %3061 = vset.pattern.permute.xlu0 0
    %3062 = vperm.xlu0 %3061, %v3054
    %v3063 = vpop.permute.xlu0 %3062
    %v3065 = vmul.f32 %v3063, %v258
    %v3066 = vadd.f32 %v245, %v3065
    %v3067 = vsel %vm262, %v2843, 0
    %3069 = vmatprep.subr.mxu0 0.0
    %3070 = vmatpush1.msra.mxu0 %v45
    %3071 = vmatprep.subr.mxu0 0.0
    %3072 = vmatpush1.msra.mxu0 %v46
    %3073 = vmatprep.subr.mxu0 0.0
    %3074 = vmatpush1.msra.mxu0 %v47
    %3075 = vmatprep.subr.mxu0 0.0
    %3076 = vmatpush1.msra.mxu0 %v48
    %3077 = vmatprep.subr.mxu0 0.0
    %3078 = vmatpush1.msra.mxu0 0.0
    %3079 = vmatprep.subr.mxu0 0.0
    %3080 = vmatpush1.msra.mxu0 0.0
    %3081 = vmatprep.subr.mxu0 0.0
    %3082 = vmatpush1.msra.mxu0 0.0
    %3083 = vmatprep.subr.mxu0 0.0
    %3084 = vmatpush1.msra.mxu0 0.0
    %3085 = vmatprep.subr.mxu0 0.0
    %3086 = vmatpush1.msra.mxu0 0.0
    %3087 = vmatprep.subr.mxu0 0.0
    %3088 = vmatpush1.msra.mxu0 0.0
    %3089 = vmatprep.subr.mxu0 0.0
    %3090 = vmatpush1.msra.mxu0 0.0
    %3091 = vmatprep.subr.mxu0 0.0
    %3092 = vmatpush1.msra.mxu0 0.0
    %3093 = vmatprep.subr.mxu0 0.0
    %3094 = vmatpush1.msra.mxu0 0.0
    %3095 = vmatprep.subr.mxu0 0.0
    %3096 = vmatpush1.msra.mxu0 0.0
    %3097 = vmatprep.subr.mxu0 0.0
    %3098 = vmatpush1.msra.mxu0 0.0
    %3099 = vmatprep.subr.mxu0 0.0
    %3100 = vmatpush1.msra.mxu0 0.0
    %3101 = vmatprep.subr.mxu0 0.0
    %3102 = vmatpush1.msra.mxu0 0.0
    %3103 = vmatprep.subr.mxu0 0.0
    %3104 = vmatpush1.msra.mxu0 0.0
    %3105 = vmatprep.subr.mxu0 0.0
    %3106 = vmatpush1.msra.mxu0 0.0
    %3107 = vmatprep.subr.mxu0 0.0
    %3108 = vmatpush1.msra.mxu0 0.0
    %3109 = vmatprep.subr.mxu0 0.0
    %3110 = vmatpush1.msra.mxu0 0.0
    %3111 = vmatprep.subr.mxu0 0.0
    %3112 = vmatpush1.msra.mxu0 0.0
    %3113 = vmatprep.subr.mxu0 0.0
    %3114 = vmatpush1.msra.mxu0 0.0
    %3115 = vmatprep.subr.mxu0 0.0
    %3116 = vmatpush1.msra.mxu0 0.0
    %3117 = vmatprep.subr.mxu0 0.0
    %3118 = vmatpush1.msra.mxu0 0.0
    %3119 = vmatprep.subr.mxu0 0.0
    %3120 = vmatpush1.msra.mxu0 0.0
    %3121 = vmatprep.subr.mxu0 0.0
    %3122 = vmatpush1.msra.mxu0 0.0
    %3123 = vmatprep.subr.mxu0 0.0
    %3124 = vmatpush1.msra.mxu0 0.0
    %3125 = vmatprep.subr.mxu0 0.0
    %3126 = vmatpush1.msra.mxu0 0.0
    %3127 = vmatprep.subr.mxu0 0.0
    %3128 = vmatpush1.msra.mxu0 0.0
    %3129 = vmatprep.subr.mxu0 0.0
    %3130 = vmatpush1.msra.mxu0 0.0
    %3131 = vmatprep.subr.mxu0 0.0
    %3132 = vmatpush1.msra.mxu0 0.0
    %3133 = vmatprep.mubr.f32.mxu0 0.0
    %3134 = vmatmul.mubr.f32.gmra.mrb[0].mxu0 %v3067
    %v3135 = vpop.f32.mrb[0].mxu0
    %v3136 = vadd.f32 0.0, %v3135
    %v3137 = vpop.f32.mrb[0].mxu0
    %3138 = vdwg.mxu0
    %v3139 = vadd.f32 %v3066, %v3136
    %v3140 = vxor.u32 %v3139, 2147483648
    %v3141 = vmul.f32 %v3140, 1.442695
    %v3142 = vpow.pop %v3141
    %v3143 = vadd.f32 %v3142, 1.0
    %v3144 = vrcp.pop %v3143
    %v3145 = vmul.f32 1.0, %v3144
    %v3146 = vtanh.pop %v3139
    %v3147 = vmul.f32 %v3145, %v2834
    %3149 = vrot.lane.b32.xlu0 %v3146, 64
    %v3150 = vpop.permute.xlu0 %3149
    %v3152 = vmul.f32 %v3145, %v3150
    %3154 = vrot.lane.b32.xlu0 %v3152, 32
    %v3155 = vpop.permute.xlu0 %3154
    %v3157 = vadd.f32 %v3147, %v3155
    %v3158 = vtanh.pop %v3157
    %3160 = vrot.lane.b32.xlu0 %v3158, 64
    %v3161 = vpop.permute.xlu0 %3160
    %v3163 = vmul.f32 %v3145, %v3161
    %3165 = vrot.lane.b32.xlu0 %v3163, 32
    %v3166 = vpop.permute.xlu0 %3165
    %3169 = vrot.lane.b32.xlu0 %v2946, 64
    %v3170 = vpop.permute.xlu0 %3169
    %v3172 = vsel %vm262, %v3166, %v3170
    %v3174 = vsel %vm372, %v3172, 0
    %3176 = vmatprep.subr.mxu0 0.0
    %3177 = vmatpush1.msra.mxu0 %v54
    %3178 = vmatprep.subr.mxu0 0.0
    %3179 = vmatpush1.msra.mxu0 %v55
    %3180 = vmatprep.subr.mxu0 0.0
    %3181 = vmatpush1.msra.mxu0 %v56
    %3182 = vmatprep.subr.mxu0 0.0
    %3183 = vmatpush1.msra.mxu0 %v57
    %3184 = vmatprep.subr.mxu0 0.0
    %3185 = vmatpush1.msra.mxu0 %v58
    %3186 = vmatprep.subr.mxu0 0.0
    %3187 = vmatpush1.msra.mxu0 %v59
    %3188 = vmatprep.subr.mxu0 0.0
    %3189 = vmatpush1.msra.mxu0 %v60
    %3190 = vmatprep.subr.mxu0 0.0
    %3191 = vmatpush1.msra.mxu0 %v61
    %3192 = vmatprep.subr.mxu0 0.0
    %3193 = vmatpush1.msra.mxu0 0.0
    %3194 = vmatprep.subr.mxu0 0.0
    %3195 = vmatpush1.msra.mxu0 0.0
    %3196 = vmatprep.subr.mxu0 0.0
    %3197 = vmatpush1.msra.mxu0 0.0
    %3198 = vmatprep.subr.mxu0 0.0
    %3199 = vmatpush1.msra.mxu0 0.0
    %3200 = vmatprep.subr.mxu0 0.0
    %3201 = vmatpush1.msra.mxu0 0.0
    %3202 = vmatprep.subr.mxu0 0.0
    %3203 = vmatpush1.msra.mxu0 0.0
    %3204 = vmatprep.subr.mxu0 0.0
    %3205 = vmatpush1.msra.mxu0 0.0
    %3206 = vmatprep.subr.mxu0 0.0
    %3207 = vmatpush1.msra.mxu0 0.0
    %3208 = vmatprep.subr.mxu0 0.0
    %3209 = vmatpush1.msra.mxu0 0.0
    %3210 = vmatprep.subr.mxu0 0.0
    %3211 = vmatpush1.msra.mxu0 0.0
    %3212 = vmatprep.subr.mxu0 0.0
    %3213 = vmatpush1.msra.mxu0 0.0
    %3214 = vmatprep.subr.mxu0 0.0
    %3215 = vmatpush1.msra.mxu0 0.0
    %3216 = vmatprep.subr.mxu0 0.0
    %3217 = vmatpush1.msra.mxu0 0.0
    %3218 = vmatprep.subr.mxu0 0.0
    %3219 = vmatpush1.msra.mxu0 0.0
    %3220 = vmatprep.subr.mxu0 0.0
    %3221 = vmatpush1.msra.mxu0 0.0
    %3222 = vmatprep.subr.mxu0 0.0
    %3223 = vmatpush1.msra.mxu0 0.0
    %3224 = vmatprep.subr.mxu0 0.0
    %3225 = vmatpush1.msra.mxu0 0.0
    %3226 = vmatprep.subr.mxu0 0.0
    %3227 = vmatpush1.msra.mxu0 0.0
    %3228 = vmatprep.subr.mxu0 0.0
    %3229 = vmatpush1.msra.mxu0 0.0
    %3230 = vmatprep.subr.mxu0 0.0
    %3231 = vmatpush1.msra.mxu0 0.0
    %3232 = vmatprep.subr.mxu0 0.0
    %3233 = vmatpush1.msra.mxu0 0.0
    %3234 = vmatprep.subr.mxu0 0.0
    %3235 = vmatpush1.msra.mxu0 0.0
    %3236 = vmatprep.subr.mxu0 0.0
    %3237 = vmatpush1.msra.mxu0 0.0
    %3238 = vmatprep.subr.mxu0 0.0
    %3239 = vmatpush1.msra.mxu0 0.0
    %3240 = vmatprep.mubr.f32.mxu0 0.0
    %3241 = vmatmul.mubr.f32.gmra.mrb[0].mxu0 %v3174
    %v3242 = vpop.f32.mrb[0].mxu0
    %v3243 = vadd.f32 %v370, %v3242
    %v3244 = vpop.f32.mrb[0].mxu0
    %3245 = vdwg.mxu0
    %v3246 = vxor.u32 %v3243, 2147483648
    %v3247 = vmul.f32 %v3246, 1.442695
    %v3248 = vpow.pop %v3247
    %v3249 = vadd.f32 %v3248, 1.0
    %v3250 = vrcp.pop %v3249
    %v3251 = vmul.f32 1.0, %v3250
    %v3252 = vtanh.pop %v3243
    %v3253 = vmul.f32 %v3251, %v2940
    %3255 = vrot.lane.b32.xlu0 %v3252, 64
    %v3256 = vpop.permute.xlu0 %3255
    %v3258 = vmul.f32 %v3251, %v3256
    %3260 = vrot.lane.b32.xlu0 %v3258, 32
    %v3261 = vpop.permute.xlu0 %3260
    %v3263 = vadd.f32 %v3253, %v3261
    %v3264 = vtanh.pop %v3263
    %3266 = vrot.lane.b32.xlu0 %v3264, 64
    %v3267 = vpop.permute.xlu0 %3266
    %v3269 = vmul.f32 %v3251, %v3267
    %v3270 = vmax.f32 %v3269, 0.0
    %3272 = vrot.lane.b32.xlu0 %v3270, 32
    %v3273 = vpop.permute.xlu0 %3272
    %v3274 = vsel %vm262, %v3273, 0
    %3276 = vmatprep.subr.mxu0 0.0
    %3277 = vmatpush1.msra.mxu0 %v49
    %3278 = vmatprep.subr.mxu0 0.0
    %3279 = vmatpush1.msra.mxu0 %v50
    %3280 = vmatprep.subr.mxu0 0.0
    %3281 = vmatpush1.msra.mxu0 %v51
    %3282 = vmatprep.subr.mxu0 0.0
    %3283 = vmatpush1.msra.mxu0 %v52
    %3284 = vmatprep.subr.mxu0 0.0
    %3285 = vmatpush1.msra.mxu0 0.0
    %3286 = vmatprep.subr.mxu0 0.0
    %3287 = vmatpush1.msra.mxu0 0.0
    %3288 = vmatprep.subr.mxu0 0.0
    %3289 = vmatpush1.msra.mxu0 0.0
    %3290 = vmatprep.subr.mxu0 0.0
    %3291 = vmatpush1.msra.mxu0 0.0
    %3292 = vmatprep.subr.mxu0 0.0
    %3293 = vmatpush1.msra.mxu0 0.0
    %3294 = vmatprep.subr.mxu0 0.0
    %3295 = vmatpush1.msra.mxu0 0.0
    %3296 = vmatprep.subr.mxu0 0.0
    %3297 = vmatpush1.msra.mxu0 0.0
    %3298 = vmatprep.subr.mxu0 0.0
    %3299 = vmatpush1.msra.mxu0 0.0
    %3300 = vmatprep.subr.mxu0 0.0
    %3301 = vmatpush1.msra.mxu0 0.0
    %3302 = vmatprep.subr.mxu0 0.0
    %3303 = vmatpush1.msra.mxu0 0.0
    %3304 = vmatprep.subr.mxu0 0.0
    %3305 = vmatpush1.msra.mxu0 0.0
    %3306 = vmatprep.subr.mxu0 0.0
    %3307 = vmatpush1.msra.mxu0 0.0
    %3308 = vmatprep.subr.mxu0 0.0
    %3309 = vmatpush1.msra.mxu0 0.0
    %3310 = vmatprep.subr.mxu0 0.0
    %3311 = vmatpush1.msra.mxu0 0.0
    %3312 = vmatprep.subr.mxu0 0.0
    %3313 = vmatpush1.msra.mxu0 0.0
    %3314 = vmatprep.subr.mxu0 0.0
    %3315 = vmatpush1.msra.mxu0 0.0
    %3316 = vmatprep.subr.mxu0 0.0
    %3317 = vmatpush1.msra.mxu0 0.0
    %3318 = vmatprep.subr.mxu0 0.0
    %3319 = vmatpush1.msra.mxu0 0.0
    %3320 = vmatprep.subr.mxu0 0.0
    %3321 = vmatpush1.msra.mxu0 0.0
    %3322 = vmatprep.subr.mxu0 0.0
    %3323 = vmatpush1.msra.mxu0 0.0
    %3324 = vmatprep.subr.mxu0 0.0
    %3325 = vmatpush1.msra.mxu0 0.0
    %3326 = vmatprep.subr.mxu0 0.0
    %3327 = vmatpush1.msra.mxu0 0.0
    %3328 = vmatprep.subr.mxu0 0.0
    %3329 = vmatpush1.msra.mxu0 0.0
    %3330 = vmatprep.subr.mxu0 0.0
    %3331 = vmatpush1.msra.mxu0 0.0
    %3332 = vmatprep.subr.mxu0 0.0
    %3333 = vmatpush1.msra.mxu0 0.0
    %3334 = vmatprep.subr.mxu0 0.0
    %3335 = vmatpush1.msra.mxu0 0.0
    %3336 = vmatprep.subr.mxu0 0.0
    %3337 = vmatpush1.msra.mxu0 0.0
    %3338 = vmatprep.subr.mxu0 0.0
    %3339 = vmatpush1.msra.mxu0 0.0
    %3340 = vmatprep.mubr.f32.mxu0 0.0
    %3341 = vmatmul.mubr.f32.gmra.mrb[0].mxu0 %v3274
    %v3342 = vpop.f32.mrb[0].mxu0
    %v3343 = vadd.f32 %v1980, %v3342
    %v3344 = vpop.f32.mrb[0].mxu0
    %3345 = vdwg.mxu0
    %v3346 = vmax.f32 %v3343, 0.0
    %v3347 = vand.u32 2147483647, %v3343
    %v3348 = vsub.f32 0.0, %v3347
    %v3349 = vmul.f32 %v3348, 1.442695
    %v3350 = vpow.pop %v3349
    %v3351 = vadd.f32 %v3350, 1.0
    %v3352 = vlog2.pop %v3351
    %v3353 = vmul.f32 %v3352, 0.6931472
    %v3354 = vadd.f32 %v3346, %v3353
    %v3355 = vadd.f32 %v3354, 1e-06
    %3357 = vrot.lane.b32.xlu0 %v3343, 11
    %v3358 = vpop.permute.xlu0 %3357
    %vm3360 = vcmask 97368
    %3361 = vst.msk [vmem:[#allocation3] sm:$0xff] %vm3360, %v3358
    %3363 = vrot.lane.b32.xlu0 %v3355, 10
    %v3364 = vpop.permute.xlu0 %3363
    %3366 = vst.msk [vmem:[#allocation5] sm:$0xff] %vm3360, %v3364
    %v3367 = vld [vmem:[#allocation2] sm:$0xff]
    %v3368 = vld [vmem:[#allocation2 + $0x8] sm:$0xff]
    %v3369 = vld [vmem:[#allocation2 + $0x10] sm:$0xff]
    %v3370 = vld [vmem:[#allocation2 + $0x18] sm:$0xff]
    %v3371 = vld [vmem:[#allocation2 + $0x20] sm:$0xff]
    %v3372 = vld [vmem:[#allocation2 + $0x28] sm:$0xff]
    %v3373 = vld [vmem:[#allocation2 + $0x30] sm:$0xff]
    %v3375 = vsel %vm262, %v3367, 0
    %v3378 = vsel %vm262, %v3368, 0
    %v3381 = vsel %vm262, %v3369, 0
    %v3384 = vsel %vm262, %v3370, 0
    %v3387 = vsel %vm262, %v3371, 0
    %v3390 = vsel %vm262, %v3372, 0
    %v3393 = vsel %vm262, %v3373, 0
    %3395 = vmatprep.subr.mxu0 0.0
    %3396 = vmatpush1.msra.mxu0 %v49
    %3397 = vmatprep.subr.mxu0 0.0
    %3398 = vmatpush1.msra.mxu0 %v50
    %3399 = vmatprep.subr.mxu0 0.0
    %3400 = vmatpush1.msra.mxu0 %v51
    %3401 = vmatprep.subr.mxu0 0.0
    %3402 = vmatpush1.msra.mxu0 %v52
    %3403 = vmatprep.subr.mxu0 0.0
    %3404 = vmatpush1.msra.mxu0 0.0
    %3405 = vmatprep.subr.mxu0 0.0
    %3406 = vmatpush1.msra.mxu0 0.0
    %3407 = vmatprep.subr.mxu0 0.0
    %3408 = vmatpush1.msra.mxu0 0.0
    %3409 = vmatprep.subr.mxu0 0.0
    %3410 = vmatpush1.msra.mxu0 0.0
    %3411 = vmatprep.subr.mxu0 0.0
    %3412 = vmatpush1.msra.mxu0 0.0
    %3413 = vmatprep.subr.mxu0 0.0
    %3414 = vmatpush1.msra.mxu0 0.0
    %3415 = vmatprep.subr.mxu0 0.0
    %3416 = vmatpush1.msra.mxu0 0.0
    %3417 = vmatprep.subr.mxu0 0.0
    %3418 = vmatpush1.msra.mxu0 0.0
    %3419 = vmatprep.subr.mxu0 0.0
    %3420 = vmatpush1.msra.mxu0 0.0
    %3421 = vmatprep.subr.mxu0 0.0
    %3422 = vmatpush1.msra.mxu0 0.0
    %3423 = vmatprep.subr.mxu0 0.0
    %3424 = vmatpush1.msra.mxu0 0.0
    %3425 = vmatprep.subr.mxu0 0.0
    %3426 = vmatpush1.msra.mxu0 0.0
    %3427 = vmatprep.subr.mxu0 0.0
    %3428 = vmatpush1.msra.mxu0 0.0
    %3429 = vmatprep.subr.mxu0 0.0
    %3430 = vmatpush1.msra.mxu0 0.0
    %3431 = vmatprep.subr.mxu0 0.0
    %3432 = vmatpush1.msra.mxu0 0.0
    %3433 = vmatprep.subr.mxu0 0.0
    %3434 = vmatpush1.msra.mxu0 0.0
    %3435 = vmatprep.subr.mxu0 0.0
    %3436 = vmatpush1.msra.mxu0 0.0
    %3437 = vmatprep.subr.mxu0 0.0
    %3438 = vmatpush1.msra.mxu0 0.0
    %3439 = vmatprep.subr.mxu0 0.0
    %3440 = vmatpush1.msra.mxu0 0.0
    %3441 = vmatprep.subr.mxu0 0.0
    %3442 = vmatpush1.msra.mxu0 0.0
    %3443 = vmatprep.subr.mxu0 0.0
    %3444 = vmatpush1.msra.mxu0 0.0
    %3445 = vmatprep.subr.mxu0 0.0
    %3446 = vmatpush1.msra.mxu0 0.0
    %3447 = vmatprep.subr.mxu0 0.0
    %3448 = vmatpush1.msra.mxu0 0.0
    %3449 = vmatprep.subr.mxu0 0.0
    %3450 = vmatpush1.msra.mxu0 0.0
    %3451 = vmatprep.subr.mxu0 0.0
    %3452 = vmatpush1.msra.mxu0 0.0
    %3453 = vmatprep.subr.mxu0 0.0
    %3454 = vmatpush1.msra.mxu0 0.0
    %3455 = vmatprep.subr.mxu0 0.0
    %3456 = vmatpush1.msra.mxu0 0.0
    %3457 = vmatprep.subr.mxu0 0.0
    %3458 = vmatpush1.msra.mxu0 0.0
    %3459 = vmatprep.mubr.f32.mxu0 0.0
    %3460 = vmatmul.mubr.f32.gmra.mrb[0].mxu0 %v3375
    %v3461 = vpop.f32.mrb[0].mxu0
    %v3462 = vadd.f32 %v1980, %v3461
    %v3463 = vpop.f32.mrb[0].mxu0
    %3464 = vmatprep.mubr.f32.mxu0 0.0
    %3465 = vmatmul.mubr.f32.gmra.mrb[0].mxu0 %v3378
    %v3466 = vpop.f32.mrb[0].mxu0
    %v3467 = vadd.f32 %v1980, %v3466
    %v3468 = vpop.f32.mrb[0].mxu0
    %3469 = vmatprep.mubr.f32.mxu0 0.0
    %3470 = vmatmul.mubr.f32.gmra.mrb[0].mxu0 %v3381
    %v3471 = vpop.f32.mrb[0].mxu0
    %v3472 = vadd.f32 %v1980, %v3471
    %v3473 = vpop.f32.mrb[0].mxu0
    %3474 = vmatprep.mubr.f32.mxu0 0.0
    %3475 = vmatmul.mubr.f32.gmra.mrb[0].mxu0 %v3384
    %v3476 = vpop.f32.mrb[0].mxu0
    %v3477 = vadd.f32 %v1980, %v3476
    %v3478 = vpop.f32.mrb[0].mxu0
    %3479 = vmatprep.mubr.f32.mxu0 0.0
    %3480 = vmatmul.mubr.f32.gmra.mrb[0].mxu0 %v3387
    %v3481 = vpop.f32.mrb[0].mxu0
    %v3482 = vadd.f32 %v1980, %v3481
    %v3483 = vpop.f32.mrb[0].mxu0
    %3484 = vmatprep.mubr.f32.mxu0 0.0
    %3485 = vmatmul.mubr.f32.gmra.mrb[0].mxu0 %v3390
    %v3486 = vpop.f32.mrb[0].mxu0
    %v3487 = vadd.f32 %v1980, %v3486
    %v3488 = vpop.f32.mrb[0].mxu0
    %3489 = vmatprep.mubr.f32.mxu0 0.0
    %3490 = vmatmul.mubr.f32.gmra.mrb[0].mxu0 %v3393
    %v3491 = vpop.f32.mrb[0].mxu0
    %v3492 = vadd.f32 %v1980, %v3491
    %v3493 = vpop.f32.mrb[0].mxu0
    %3494 = vdwg.mxu0
    %v3495 = vmax.f32 %v3462, 0.0
    %v3496 = vmax.f32 %v3467, 0.0
    %v3497 = vmax.f32 %v3472, 0.0
    %v3498 = vmax.f32 %v3477, 0.0
    %v3499 = vmax.f32 %v3482, 0.0
    %v3500 = vmax.f32 %v3487, 0.0
    %v3501 = vmax.f32 %v3492, 0.0
    %v3502 = vand.u32 2147483647, %v3462
    %v3503 = vand.u32 2147483647, %v3467
    %v3504 = vand.u32 2147483647, %v3472
    %v3505 = vand.u32 2147483647, %v3477
    %v3506 = vand.u32 2147483647, %v3482
    %v3507 = vand.u32 2147483647, %v3487
    %v3508 = vand.u32 2147483647, %v3492
    %v3509 = vsub.f32 0.0, %v3502
    %v3510 = vsub.f32 0.0, %v3503
    %v3511 = vsub.f32 0.0, %v3504
    %v3512 = vsub.f32 0.0, %v3505
    %v3513 = vsub.f32 0.0, %v3506
    %v3514 = vsub.f32 0.0, %v3507
    %v3515 = vsub.f32 0.0, %v3508
    %v3516 = vmul.f32 %v3509, 1.442695
    %v3517 = vpow.pop %v3516
    %v3518 = vmul.f32 %v3510, 1.442695
    %v3519 = vpow.pop %v3518
    %v3520 = vmul.f32 %v3511, 1.442695
    %v3521 = vpow.pop %v3520
    %v3522 = vmul.f32 %v3512, 1.442695
    %v3523 = vpow.pop %v3522
    %v3524 = vmul.f32 %v3513, 1.442695
    %v3525 = vpow.pop %v3524
    %v3526 = vmul.f32 %v3514, 1.442695
    %v3527 = vpow.pop %v3526
    %v3528 = vmul.f32 %v3515, 1.442695
    %v3529 = vpow.pop %v3528
    %v3530 = vadd.f32 %v3517, 1.0
    %v3531 = vadd.f32 %v3519, 1.0
    %v3532 = vadd.f32 %v3521, 1.0
    %v3533 = vadd.f32 %v3523, 1.0
    %v3534 = vadd.f32 %v3525, 1.0
    %v3535 = vadd.f32 %v3527, 1.0
    %v3536 = vadd.f32 %v3529, 1.0
    %v3537 = vlog2.pop %v3530
    %v3538 = vmul.f32 %v3537, 0.6931472
    %v3539 = vlog2.pop %v3531
    %v3540 = vmul.f32 %v3539, 0.6931472
    %v3541 = vlog2.pop %v3532
    %v3542 = vmul.f32 %v3541, 0.6931472
    %v3543 = vlog2.pop %v3533
    %v3544 = vmul.f32 %v3543, 0.6931472
    %v3545 = vlog2.pop %v3534
    %v3546 = vmul.f32 %v3545, 0.6931472
    %v3547 = vlog2.pop %v3535
    %v3548 = vmul.f32 %v3547, 0.6931472
    %v3549 = vlog2.pop %v3536
    %v3550 = vmul.f32 %v3549, 0.6931472
    %v3551 = vadd.f32 %v3495, %v3538
    %v3552 = vadd.f32 %v3496, %v3540
    %v3553 = vadd.f32 %v3497, %v3542
    %v3554 = vadd.f32 %v3498, %v3544
    %v3555 = vadd.f32 %v3499, %v3546
    %v3556 = vadd.f32 %v3500, %v3548
    %v3557 = vadd.f32 %v3501, %v3550
    %v3558 = vadd.f32 %v3551, 1e-06
    %v3559 = vadd.f32 %v3552, 1e-06
    %v3560 = vadd.f32 %v3553, 1e-06
    %v3561 = vadd.f32 %v3554, 1e-06
    %v3562 = vadd.f32 %v3555, 1e-06
    %v3563 = vadd.f32 %v3556, 1e-06
    %v3564 = vadd.f32 %v3557, 1e-06
    %3565 = vst.msk [vmem:[#allocation3] sm:$0xff] %vm2089, %v3462
    %3567 = vrot.lane.b32.xlu0 %v3558, 127
    %v3568 = vpop.permute.xlu0 %3567
    %3570 = vst.msk [vmem:[#allocation5] sm:$0xff] %vm2089, %v3568
    %3572 = vrot.lane.b32.xlu0 %v3467, 1
    %v3573 = vpop.permute.xlu0 %3572
    %3575 = vst.msk [vmem:[#allocation3] sm:$0xff] %vm2413, %v3573
    %3576 = vst.msk [vmem:[#allocation5] sm:$0xff] %vm2413, %v3559
    %3578 = vrot.lane.b32.xlu0 %v3472, 2
    %v3579 = vpop.permute.xlu0 %3578
    %3581 = vst.msk [vmem:[#allocation3] sm:$0xff] %vm2736, %v3579
    %3583 = vrot.lane.b32.xlu0 %v3560, 1
    %v3584 = vpop.permute.xlu0 %3583
    %3586 = vst.msk [vmem:[#allocation5] sm:$0xff] %vm2736, %v3584
    %3588 = vrot.lane.b32.xlu0 %v3477, 3
    %v3589 = vpop.permute.xlu0 %3588
    %3591 = vst.msk [vmem:[#allocation3] sm:$0xff] %vm3059, %v3589
    %3593 = vrot.lane.b32.xlu0 %v3561, 2
    %v3594 = vpop.permute.xlu0 %3593
    %3596 = vst.msk [vmem:[#allocation5] sm:$0xff] %vm3059, %v3594
    %3598 = vrot.lane.b32.xlu0 %v3482, 4
    %v3599 = vpop.permute.xlu0 %3598
    %vm3601 = vcmask 39968
    %3602 = vst.msk [vmem:[#allocation3] sm:$0xff] %vm3601, %v3599
    %3604 = vrot.lane.b32.xlu0 %v3562, 3
    %v3605 = vpop.permute.xlu0 %3604
    %3607 = vst.msk [vmem:[#allocation5] sm:$0xff] %vm3601, %v3605
    %3609 = vrot.lane.b32.xlu0 %v3487, 5
    %v3610 = vpop.permute.xlu0 %3609
    %vm3612 = vcmask 48168
    %3613 = vst.msk [vmem:[#allocation3] sm:$0xff] %vm3612, %v3610
    %3615 = vrot.lane.b32.xlu0 %v3563, 4
    %v3616 = vpop.permute.xlu0 %3615
    %3618 = vst.msk [vmem:[#allocation5] sm:$0xff] %vm3612, %v3616
    %3620 = vrot.lane.b32.xlu0 %v3492, 6
    %v3621 = vpop.permute.xlu0 %3620
    %vm3623 = vcmask 56368
    %3624 = vst.msk [vmem:[#allocation3] sm:$0xff] %vm3623, %v3621
    %3626 = vrot.lane.b32.xlu0 %v3564, 5
    %v3627 = vpop.permute.xlu0 %3626
    %3629 = vst.msk [vmem:[#allocation5] sm:$0xff] %vm3623, %v3627
    // Predicated region
    $region46: #{tpu_custom_call.1} parent=1 // pred_check
      _
    $region47: #{tpu_custom_call.1} parent=1 // pred_check_branch
      %3631 = sbr.rel (0) target = $region49
    $region48: #{tpu_custom_call.1} parent=1 // pred_region
      _
    $region49: #{tpu_custom_call.1} parent=1 // pred_fallthru
      _
    // Predicated region
    $region50: #{tpu_custom_call.1} parent=1 // pred_check
      _
    $region51: #{tpu_custom_call.1} parent=1 // pred_check_branch
      %3633 = sbr.rel (0) target = $region53
    $region52: #{tpu_custom_call.1} parent=1 // pred_region
      %s3635 = ssub.s32 128, 128
      %3636 = vsyncadd [#allocation4], %s3635
      %s3638 = sshll.u32 [#allocation3], 4
      %s3639 = int_to_ptr.vmem [resolvable:$true] %s3638
      %3641 = dma.vmem_to_hbm [thread:$0]  %s3639, 128, %s12, [#allocation4]
    $region53: #{tpu_custom_call.1} parent=1 // pred_fallthru
      _
    // Predicated region
    $region54: #{tpu_custom_call.1} parent=1 // pred_check
      _
    $region55: #{tpu_custom_call.1} parent=1 // pred_check_branch
      %3643 = sbr.rel (0) target = $region57
    $region56: #{tpu_custom_call.1} parent=1 // pred_region
      %s3645 = ssub.s32 128, 128
      %3646 = vsyncadd [#allocation6], %s3645
      %s3648 = sshll.u32 [#allocation5], 4
      %s3649 = int_to_ptr.vmem [resolvable:$true] %s3648
      %3651 = dma.vmem_to_hbm [thread:$0]  %s3649, 128, %s13, [#allocation6]
    $region57: #{tpu_custom_call.1} parent=1 // pred_fallthru
      _
    // Predicated region
    $region58: #{tpu_custom_call.1} parent=1 // pred_check
      _
    $region59: #{tpu_custom_call.1} parent=1 // pred_check_branch
      %3653 = sbr.rel (0) target = $region61
    $region60: #{tpu_custom_call.1} parent=1 // pred_region
      _
    $region61: #{tpu_custom_call.1} parent=1 // pred_fallthru
      _
    // Predicated region
    $region62: #{tpu_custom_call.1} parent=1 // pred_check
      _
    $region63: #{tpu_custom_call.1} parent=1 // pred_check_branch
      %3655 = sbr.rel (0) target = $region65
    $region64: #{tpu_custom_call.1} parent=1 // pred_region
      %3656 = dma.done [#allocation4], 128
    $region65: #{tpu_custom_call.1} parent=1 // pred_fallthru
      _
    // Predicated region
    $region66: #{tpu_custom_call.1} parent=1 // pred_check
      _
    $region67: #{tpu_custom_call.1} parent=1 // pred_check_branch
      %3658 = sbr.rel (0) target = $region69
    $region68: #{tpu_custom_call.1} parent=1 // pred_region
      %3659 = dma.done [#allocation6], 128
    $region69: #{tpu_custom_call.1} parent=1 // pred_fallthru
      _
    %3660 = vsyncpa [#allocation4], 1
    %3661 = vsyncpa [#allocation6], 1

</llo_original>
